<compile_context>
chip_gen: v6e
topology: v6e:2x2x1
jax: 0.10.0
libtpu: 0.0.40
codegen_flags: <defaults>
</compile_context>

<pallas_src>
import numpy as np

import jax
import jax.numpy as jnp
from jax.experimental import pallas as pl
from jax.experimental.pallas import tpu as pltpu

# LeNet geometry (fixed by the module: 1x32x32 input, 5x5 VALID convs, 2x2 pools)
C1, C2 = 6, 16            # conv output channels
H1, W1 = 28, 28           # conv1 output spatial
P1H = 14                  # pool1 output height
P1PAD = 16                # rows per image in the pooled1/conv2 stacked slab (>= P1H, mult of 8)
H2, W2 = 10, 10           # conv2 output spatial
P2H, P2W = 5, 5           # pool2 output spatial
NCLS_PAD = 128            # fc3 output padded to a full lane width


# ---------------------------------------------------------------------------
# The fused kernel (runs once per block of B images; grid=(N_pad // B,))
# ---------------------------------------------------------------------------

def _lenet_kernel(x_ref, t1_ref, b1_ref, se1_ref, t2_ref, b2_ref, sfc_ref,
                  w1s_ref, bf1_ref, wf2_ref, bf2_ref, wf3_ref, bf3_ref, o_ref):
    f32, bf16 = jnp.float32, jnp.bfloat16
    B = o_ref.shape[0]                 # images per block
    LEN1 = B * 32 - 4                  # rows of the stacked conv1 output (32 rows / image)
    LEN2 = B * P1PAD - 4               # rows of the stacked conv2 output (16 rows / image)

    xs = x_ref[...].astype(bf16)       # (B*32, 32) -- single hoisted cast

    # ---- conv1 (5x5, 1->6): 5 banded matmuls sharing the full stacked LHS (M = B*32).
    #      The +i row shift is applied to the f32 output slice (aligned-safe), so rows
    #      b*32+h, h<28 hold image b's conv1 row h; rows h>=28 are don't-care.
    z1 = jnp.dot(xs, t1_ref[0], preferred_element_type=f32)[:LEN1, :]
    for i in range(1, 5):
        y = jnp.dot(xs, t1_ref[i], preferred_element_type=f32)        # (B*32, 168)
        z1 = z1 + y[i:i + LEN1, :]
    a1 = jnp.maximum(z1 + b1_ref[...], 0.0)                           # (LEN1, 168), col=w*6+c

    # ---- pool1 (2x2 max): pairwise max along W (lane shift by C1) and H (row shift);
    #      even-row selection + repacking to 16 rows/image via ONE selector matmul.
    mw = jnp.maximum(a1[:, :(W1 - 1) * C1], a1[:, C1:])               # (LEN1, 162)
    mh = jnp.maximum(mw[:LEN1 - 1, :], mw[1:, :]).astype(bf16)        # (LEN1-1, 162)
    p1 = jnp.dot(se1_ref[...], mh,
                 preferred_element_type=f32).astype(bf16)             # (B*16, 162); cast exact

    # ---- conv2 (5x5, 6->16): same full-LHS banded structure (M = B*16); pool1's even-column
    #      subsampling is folded into t2 on the host.
    z2 = jnp.dot(p1, t2_ref[0], preferred_element_type=f32)[:LEN2, :]
    for i in range(1, 5):
        y2 = jnp.dot(p1, t2_ref[i], preferred_element_type=f32)       # (B*16, 160)
        z2 = z2 + y2[i:i + LEN2, :]
    a2 = jnp.maximum(z2 + b2_ref[...], 0.0)                           # (LEN2, 160), col=w*16+c

    # ---- pool2 (2x2 max) + fc1 input gather: one selector matmul stacks the 5 pooled rows of
    #      every image u-major into a (5*B, 144) slab whose per-u row slices are 8-aligned.
    mw2 = jnp.maximum(a2[:, :(W2 - 1) * C2], a2[:, C2:])              # (LEN2, 144)
    mh2 = jnp.maximum(mw2[:LEN2 - 1, :], mw2[1:, :]).astype(bf16)     # (LEN2-1, 144)
    sel = jnp.dot(sfc_ref[...], mh2,
                  preferred_element_type=f32).astype(bf16)            # (5*B, 144); cast exact

    # ---- fc1 (400 -> 120): 5 accumulating matmuls with M = B (pool2 column subsampling and
    #      the torch NCHW flatten order are folded into w1s on the host).
    z3 = bf1_ref[...]                                                 # (1, 120)
    for u in range(P2H):
        z3 = z3 + jnp.dot(sel[u * B:(u + 1) * B, :], w1s_ref[u],
                          preferred_element_type=f32)                 # (B, 120)
    a3 = jnp.maximum(z3, 0.0).astype(bf16)

    # ---- fc2 (120 -> 84) and fc3 (84 -> 128 padded) on the whole B-image block ----
    a4 = jnp.maximum(jnp.dot(a3, wf2_ref[...], preferred_element_type=f32)
                     + bf2_ref[...], 0.0).astype(bf16)                # (B, 84)
    logits = (jnp.dot(a4, wf3_ref[...], preferred_element_type=f32)
              + bf3_ref[...])                                         # (B, 128); pad lanes -1e30

    # ---- softmax (f32, lane-dense); reciprocal goes to the EUP slot ----
    m = jnp.max(logits, axis=-1, keepdims=True)
    e = jnp.exp(logits - m)
    s = jnp.sum(e, axis=-1, keepdims=True)
    o_ref[...] = e * pl.reciprocal(s, approx=True)


# ---------------------------------------------------------------------------
# One-time host-side parameter re-layout
# ---------------------------------------------------------------------------

def prepare_params(params, block_b=8, compute_dtype=jnp.bfloat16):
    """Builds banded conv weights, pool selector matrices, permuted fc weights."""
    B = int(block_b)
    assert B % 8 == 0, "block_b must be a multiple of 8"

    w1 = np.asarray(params["conv1_w"], np.float32)    # (6, 1, 5, 5)
    b1 = np.asarray(params["conv1_b"], np.float32)
    w2 = np.asarray(params["conv2_w"], np.float32)    # (16, 6, 5, 5)
    b2 = np.asarray(params["conv2_b"], np.float32)
    f1w = np.asarray(params["fc1_w"], np.float32)     # (120, 400), torch order c*25+h*5+w
    f1b = np.asarray(params["fc1_b"], np.float32)
    f2w = np.asarray(params["fc2_w"], np.float32)     # (84, 120)
    f2b = np.asarray(params["fc2_b"], np.float32)
    f3w = np.asarray(params["fc3_w"], np.float32)     # (10, 84)
    f3b = np.asarray(params["fc3_b"], np.float32)

    # conv1 banded weights: z1[h, wo*6+o] = sum_i X[h+i, :] @ T1[i]
    T1 = np.zeros((5, 32, W1 * C1), np.float32)
    for i in range(5):
        for o in range(C1):
            for wo in range(W1):
                for j in range(5):
                    T1[i, wo + j, wo * C1 + o] = w1[o, 0, i, j]
    b1_row = np.tile(b1, W1)[None, :]                 # (1, 168)

    # conv2 banded weights act on the pooled1 slab (162 = 27*6 cols); only even-w input
    # columns are used, folding pool1's column subsampling into the weights.
    T2 = np.zeros((5, (W1 - 1) * C1, W2 * C2), np.float32)
    for i in range(5):
        for co in range(C2):
            for c in range(C1):
                for v2 in range(W2):
                    for j in range(5):
                        w = 2 * (v2 + j)              # even input column, < 27
                        T2[i, w * C1 + c, v2 * C2 + co] = w2[co, c, i, j]
    b2_row = np.tile(b2, W2)[None, :]                 # (1, 160)

    # fc1 weights per pooled row u, permuted to the pooled2 slab layout (col = w*16 + c,
    # even w only); folds the pool2 column subsampling and torch's NCHW flatten order.
    W1s = np.zeros((P2H, (W2 - 1) * C2, 120), np.float32)
    for u in range(P2H):
        for c in range(C2):
            for v in range(P2W):
                W1s[u, (2 * v) * C2 + c, :] = f1w[:, c * 25 + u * 5 + v]

    # pool1 even-row selector + per-image repack: 32 rows/img (conv1 stage) -> 16 rows/img.
    # p1[b*16+u] = mh[b*32 + 2u], where mh[r] = max(mw[r], mw[r+1]).
    SE1 = np.zeros((B * P1PAD, B * 32 - 5), np.float32)
    for b in range(B):
        for u in range(P1H):
            SE1[b * P1PAD + u, b * 32 + 2 * u] = 1.0

    # pool2 even-row selector feeding fc1: row u*B+b picks mh2[b*16 + 2u] (pooled2 row u of
    # image b); output is u-major so the kernel's per-u row slices are 8-aligned.
    SFC = np.zeros((P2H * B, B * P1PAD - 5), np.float32)
    for u in range(P2H):
        for b in range(B):
            SFC[u * B + b, b * P1PAD + 2 * u] = 1.0

    # fc3 padded to 128 classes: zero weights / -1e30 bias on padding lanes -> exp()==0 there,
    # so the softmax over 128 lanes is exact for the first 10 and the store is lane-dense.
    f3w_pad = np.zeros((84, NCLS_PAD), np.float32)
    f3w_pad[:, :10] = f3w.T
    f3b_pad = np.full((1, NCLS_PAD), -1e30, np.float32)
    f3b_pad[0, :10] = f3b

    cd = compute_dtype
    return {
        "t1": jnp.asarray(T1, cd), "b1": jnp.asarray(b1_row, jnp.float32),
        "se1": jnp.asarray(SE1, cd),
        "t2": jnp.asarray(T2, cd), "b2": jnp.asarray(b2_row, jnp.float32),
        "sfc": jnp.asarray(SFC, cd),
        "w1s": jnp.asarray(W1s, cd), "bf1": jnp.asarray(f1b[None, :], jnp.float32),
        "wf2": jnp.asarray(f2w.T, cd), "bf2": jnp.asarray(f2b[None, :], jnp.float32),
        "wf3": jnp.asarray(f3w_pad, cd), "bf3": jnp.asarray(f3b_pad, jnp.float32),
    }


# ---------------------------------------------------------------------------
# Forward wrapper
# ---------------------------------------------------------------------------

def lenet_forward(prepared, x):
    """x: (N, 1, 32, 32) NCHW float32 -> class probabilities (N, 10)."""
    p = prepared
    B = p["se1"].shape[0] // P1PAD                    # images per grid step (static)
    N = x.shape[0]
    n_blocks = -(-N // B)
    N_pad = n_blocks * B

    x3 = x.reshape(N, 32, 32).astype(jnp.float32)     # Cin == 1
    if N_pad != N:
        x3 = jnp.concatenate(
            [x3, jnp.zeros((N_pad - N, 32, 32), jnp.float32)], axis=0)
    xs = x3.reshape(N_pad * 32, 32)                   # stacked (rows = image*32 + h)

    weights = (p["t1"], p["b1"], p["se1"], p["t2"], p["b2"], p["sfc"], p["w1s"],
               p["bf1"], p["wf2"], p["bf2"], p["wf3"], p["bf3"])

    def full(arr):
        nd = arr.ndim
        return pl.BlockSpec(arr.shape, lambda n, _nd=nd: (0,) * _nd)

    out = pl.pallas_call(
        _lenet_kernel,
        grid=(n_blocks,),
        in_specs=[pl.BlockSpec((B * 32, 32), lambda n: (n, 0))]
                 + [full(w) for w in weights],
        out_specs=pl.BlockSpec((B, NCLS_PAD), lambda n: (n, 0)),
        out_shape=jax.ShapeDtypeStruct((N_pad, NCLS_PAD), jnp.float32),
        compiler_params=pltpu.CompilerParams(
            dimension_semantics=("parallel",)),
    )(xs, *weights)
    return out[:N, :10]


# ---------------------------------------------------------------------------
# Pure-JAX reference (f32) + PyTorch-style init
# ---------------------------------------------------------------------------

def lenet_reference(params, x):
    dn1 = jax.lax.conv_dimension_numbers(x.shape, params["conv1_w"].shape,
                                         ("NCHW", "OIHW", "NCHW"))
    y = jax.lax.conv_general_dilated(x, params["conv1_w"], (1, 1), "VALID",
                                     dimension_numbers=dn1)
    y = jax.nn.relu(y + params["conv1_b"][None, :, None, None])
    y = jax.lax.reduce_window(y, -jnp.inf, jax.lax.max,
                              (1, 1, 2, 2), (1, 1, 2, 2), "VALID")
    dn2 = jax.lax.conv_dimension_numbers(y.shape, params["conv2_w"].shape,
                                         ("NCHW", "OIHW", "NCHW"))
    y = jax.lax.conv_general_dilated(y, params["conv2_w"], (1, 1), "VALID",
                                     dimension_numbers=dn2)
    y = jax.nn.relu(y + params["conv2_b"][None, :, None, None])
    y = jax.lax.reduce_window(y, -jnp.inf, jax.lax.max,
                              (1, 1, 2, 2), (1, 1, 2, 2), "VALID")
    y = y.reshape(y.shape[0], -1)                                  # torch NCHW flatten
    y = jax.nn.relu(y @ params["fc1_w"].T + params["fc1_b"])
    y = jax.nn.relu(y @ params["fc2_w"].T + params["fc2_b"])
    logits = y @ params["fc3_w"].T + params["fc3_b"]
    return jax.nn.softmax(logits, axis=1)


def init_lenet_params(key):
    ks = jax.random.split(key, 10)

    def u(k, shape, fan_in):
        bound = 1.0 / (fan_in ** 0.5)
        return jax.random.uniform(k, shape, jnp.float32, -bound, bound)

    return {
        "conv1_w": u(ks[0], (6, 1, 5, 5), 25),   "conv1_b": u(ks[1], (6,), 25),
        "conv2_w": u(ks[2], (16, 6, 5, 5), 150), "conv2_b": u(ks[3], (16,), 150),
        "fc1_w":   u(ks[4], (120, 400), 400),    "fc1_b":   u(ks[5], (120,), 400),
        "fc2_w":   u(ks[6], (84, 120), 120),     "fc2_b":   u(ks[7], (84,), 120),
        "fc3_w":   u(ks[8], (10, 84), 84),       "fc3_b":   u(ks[9], (10,), 84),
    }


# ---------------------------------------------------------------------------
# Main
# ---------------------------------------------------------------------------

if __name__ == "__main__":
    key = jax.random.PRNGKey(0)
    pkey, xkey = jax.random.split(key)

    params = init_lenet_params(pkey)
    prepared = prepare_params(params, block_b=8)    # one-time host-side layout transform
    # N=10 exercises both batch padding (10 -> 16) and a multi-step (2-block) grid.
    x = jax.random.normal(xkey, (10, 1, 32, 32), dtype=jnp.float32)

    fwd = jax.jit(lenet_forward)
    probs = jax.block_until_ready(fwd(prepared, x))

    assert probs.shape == (10, 10)
    assert bool(jnp.all(jnp.isfinite(probs)))
    # approx reciprocal in the softmax -> rows sum to 1 only up to ~1e-3 relative
    assert bool(jnp.allclose(jnp.sum(probs, axis=1), 1.0, atol=2e-2))

    # numerical check against the pure-JAX f32 reference (bf16 MXU operands -> loose tol)
    ref = lenet_reference(params, x)
    max_diff = float(jnp.max(jnp.abs(probs - ref)))
    assert max_diff < 5e-2, f"max |probs - ref| = {max_diff}"

    print("KERNEL_OK")
</pallas_src>

<mosaic_0001>
module attributes {stable_mosaic.version = 11 : i64} {
  func.func @_lenet_kernel(%arg0: i32, %arg1: memref<256x32xf32, #tpu.memory_space<vmem>>, %arg2: memref<5x32x168xbf16, #tpu.memory_space<vmem>>, %arg3: memref<1x168xf32, #tpu.memory_space<vmem>>, %arg4: memref<128x251xbf16, #tpu.memory_space<vmem>>, %arg5: memref<5x162x160xbf16, #tpu.memory_space<vmem>>, %arg6: memref<1x160xf32, #tpu.memory_space<vmem>>, %arg7: memref<40x123xbf16, #tpu.memory_space<vmem>>, %arg8: memref<5x144x120xbf16, #tpu.memory_space<vmem>>, %arg9: memref<1x120xf32, #tpu.memory_space<vmem>>, %arg10: memref<120x84xbf16, #tpu.memory_space<vmem>>, %arg11: memref<1x84xf32, #tpu.memory_space<vmem>>, %arg12: memref<84x128xbf16, #tpu.memory_space<vmem>>, %arg13: memref<1x128xf32, #tpu.memory_space<vmem>>, %arg14: memref<8x128xf32, #tpu.memory_space<vmem>>) attributes {dimension_semantics = [#tpu.dimension_semantics<parallel>], iteration_bounds = array<i64: 2>, scalar_prefetch = 0 : i64, scratch_operands = 0 : i64, tpu.core_type = #tpu.core_type<tc>, window_params = [{transform_indices = @transform_0, window_bounds = array<i64: 256, 32>}, {pipeline_mode = #tpu.pipeline_mode<synchronous>, transform_indices = @transform_1, window_bounds = array<i64: 5, 32, 168>}, {pipeline_mode = #tpu.pipeline_mode<synchronous>, transform_indices = @transform_2, window_bounds = array<i64: 1, 168>}, {pipeline_mode = #tpu.pipeline_mode<synchronous>, transform_indices = @transform_3, window_bounds = array<i64: 128, 251>}, {pipeline_mode = #tpu.pipeline_mode<synchronous>, transform_indices = @transform_4, window_bounds = array<i64: 5, 162, 160>}, {pipeline_mode = #tpu.pipeline_mode<synchronous>, transform_indices = @transform_5, window_bounds = array<i64: 1, 160>}, {pipeline_mode = #tpu.pipeline_mode<synchronous>, transform_indices = @transform_6, window_bounds = array<i64: 40, 123>}, {pipeline_mode = #tpu.pipeline_mode<synchronous>, transform_indices = @transform_7, window_bounds = array<i64: 5, 144, 120>}, {pipeline_mode = #tpu.pipeline_mode<synchronous>, transform_indices = @transform_8, window_bounds = array<i64: 1, 120>}, {pipeline_mode = #tpu.pipeline_mode<synchronous>, transform_indices = @transform_9, window_bounds = array<i64: 120, 84>}, {pipeline_mode = #tpu.pipeline_mode<synchronous>, transform_indices = @transform_10, window_bounds = array<i64: 1, 84>}, {pipeline_mode = #tpu.pipeline_mode<synchronous>, transform_indices = @transform_11, window_bounds = array<i64: 84, 128>}, {pipeline_mode = #tpu.pipeline_mode<synchronous>, transform_indices = @transform_12, window_bounds = array<i64: 1, 128>}, {transform_indices = @transform_13, window_bounds = array<i64: 8, 128>}]} {
    %c0 = arith.constant 0 : index
    %c0_0 = arith.constant 0 : index
    %0 = vector.load %arg1[%c0, %c0_0] : memref<256x32xf32, #tpu.memory_space<vmem>>, vector<256x32xf32>
    %1 = arith.truncf %0 : vector<256x32xf32> to vector<256x32xbf16>
    %c0_1 = arith.constant 0 : index
    %c0_2 = arith.constant 0 : index
    %c0_3 = arith.constant 0 : index
    %2 = vector.load %arg2[%c0_1, %c0_2, %c0_3] : memref<5x32x168xbf16, #tpu.memory_space<vmem>>, vector<1x32x168xbf16>
    %3 = vector.shape_cast %2 : vector<1x32x168xbf16> to vector<32x168xbf16>
    %cst = arith.constant dense<0.000000e+00> : vector<256x168xf32>
    %4 = tpu.matmul %1, %3, %cst {dimension_numbers = #tpu.dot_dimension_numbers<[1], [0], [0], [1], [0, 0, 1, 1], [], []>} : vector<256x32xbf16>, vector<32x168xbf16>, vector<256x168xf32> -> vector<256x168xf32>
    %5 = vector.extract_strided_slice %4 {offsets = [0, 0], sizes = [252, 168], strides = [1, 1]} : vector<256x168xf32> to vector<252x168xf32>
    %c1 = arith.constant 1 : index
    %c0_4 = arith.constant 0 : index
    %c0_5 = arith.constant 0 : index
    %6 = vector.load %arg2[%c1, %c0_4, %c0_5] : memref<5x32x168xbf16, #tpu.memory_space<vmem>>, vector<1x32x168xbf16>
    %7 = vector.shape_cast %6 : vector<1x32x168xbf16> to vector<32x168xbf16>
    %cst_6 = arith.constant dense<0.000000e+00> : vector<256x168xf32>
    %8 = tpu.matmul %1, %7, %cst_6 {dimension_numbers = #tpu.dot_dimension_numbers<[1], [0], [0], [1], [0, 0, 1, 1], [], []>} : vector<256x32xbf16>, vector<32x168xbf16>, vector<256x168xf32> -> vector<256x168xf32>
    %9 = vector.extract_strided_slice %8 {offsets = [1, 0], sizes = [252, 168], strides = [1, 1]} : vector<256x168xf32> to vector<252x168xf32>
    %10 = arith.addf %5, %9 : vector<252x168xf32>
    %c2 = arith.constant 2 : index
    %c0_7 = arith.constant 0 : index
    %c0_8 = arith.constant 0 : index
    %11 = vector.load %arg2[%c2, %c0_7, %c0_8] : memref<5x32x168xbf16, #tpu.memory_space<vmem>>, vector<1x32x168xbf16>
    %12 = vector.shape_cast %11 : vector<1x32x168xbf16> to vector<32x168xbf16>
    %cst_9 = arith.constant dense<0.000000e+00> : vector<256x168xf32>
    %13 = tpu.matmul %1, %12, %cst_9 {dimension_numbers = #tpu.dot_dimension_numbers<[1], [0], [0], [1], [0, 0, 1, 1], [], []>} : vector<256x32xbf16>, vector<32x168xbf16>, vector<256x168xf32> -> vector<256x168xf32>
    %14 = vector.extract_strided_slice %13 {offsets = [2, 0], sizes = [252, 168], strides = [1, 1]} : vector<256x168xf32> to vector<252x168xf32>
    %15 = arith.addf %10, %14 : vector<252x168xf32>
    %c3 = arith.constant 3 : index
    %c0_10 = arith.constant 0 : index
    %c0_11 = arith.constant 0 : index
    %16 = vector.load %arg2[%c3, %c0_10, %c0_11] : memref<5x32x168xbf16, #tpu.memory_space<vmem>>, vector<1x32x168xbf16>
    %17 = vector.shape_cast %16 : vector<1x32x168xbf16> to vector<32x168xbf16>
    %cst_12 = arith.constant dense<0.000000e+00> : vector<256x168xf32>
    %18 = tpu.matmul %1, %17, %cst_12 {dimension_numbers = #tpu.dot_dimension_numbers<[1], [0], [0], [1], [0, 0, 1, 1], [], []>} : vector<256x32xbf16>, vector<32x168xbf16>, vector<256x168xf32> -> vector<256x168xf32>
    %19 = vector.extract_strided_slice %18 {offsets = [3, 0], sizes = [252, 168], strides = [1, 1]} : vector<256x168xf32> to vector<252x168xf32>
    %20 = arith.addf %15, %19 : vector<252x168xf32>
    %c4 = arith.constant 4 : index
    %c0_13 = arith.constant 0 : index
    %c0_14 = arith.constant 0 : index
    %21 = vector.load %arg2[%c4, %c0_13, %c0_14] : memref<5x32x168xbf16, #tpu.memory_space<vmem>>, vector<1x32x168xbf16>
    %22 = vector.shape_cast %21 : vector<1x32x168xbf16> to vector<32x168xbf16>
    %cst_15 = arith.constant dense<0.000000e+00> : vector<256x168xf32>
    %23 = tpu.matmul %1, %22, %cst_15 {dimension_numbers = #tpu.dot_dimension_numbers<[1], [0], [0], [1], [0, 0, 1, 1], [], []>} : vector<256x32xbf16>, vector<32x168xbf16>, vector<256x168xf32> -> vector<256x168xf32>
    %24 = vector.extract_strided_slice %23 {offsets = [4, 0], sizes = [252, 168], strides = [1, 1]} : vector<256x168xf32> to vector<252x168xf32>
    %25 = arith.addf %20, %24 : vector<252x168xf32>
    %c0_16 = arith.constant 0 : index
    %c0_17 = arith.constant 0 : index
    %26 = vector.load %arg3[%c0_16, %c0_17] : memref<1x168xf32, #tpu.memory_space<vmem>>, vector<1x168xf32>
    %27 = vector.broadcast %26 : vector<1x168xf32> to vector<252x168xf32>
    %28 = arith.addf %25, %27 : vector<252x168xf32>
    %cst_18 = arith.constant 0.000000e+00 : f32
    %29 = vector.broadcast %cst_18 : f32 to vector<252x168xf32>
    %30 = arith.maximumf %28, %29 : vector<252x168xf32>
    %31 = vector.extract_strided_slice %30 {offsets = [0, 0], sizes = [252, 162], strides = [1, 1]} : vector<252x168xf32> to vector<252x162xf32>
    %32 = vector.extract_strided_slice %30 {offsets = [0, 6], sizes = [252, 162], strides = [1, 1]} : vector<252x168xf32> to vector<252x162xf32>
    %33 = arith.maximumf %31, %32 : vector<252x162xf32>
    %34 = vector.extract_strided_slice %33 {offsets = [0, 0], sizes = [251, 162], strides = [1, 1]} : vector<252x162xf32> to vector<251x162xf32>
    %35 = vector.extract_strided_slice %33 {offsets = [1, 0], sizes = [251, 162], strides = [1, 1]} : vector<252x162xf32> to vector<251x162xf32>
    %36 = arith.maximumf %34, %35 : vector<251x162xf32>
    %37 = arith.truncf %36 : vector<251x162xf32> to vector<251x162xbf16>
    %c0_19 = arith.constant 0 : index
    %c0_20 = arith.constant 0 : index
    %38 = vector.load %arg4[%c0_19, %c0_20] : memref<128x251xbf16, #tpu.memory_space<vmem>>, vector<128x251xbf16>
    %cst_21 = arith.constant dense<0.000000e+00> : vector<128x162xf32>
    %39 = tpu.matmul %38, %37, %cst_21 {dimension_numbers = #tpu.dot_dimension_numbers<[1], [0], [0], [1], [0, 0, 1, 1], [], []>} : vector<128x251xbf16>, vector<251x162xbf16>, vector<128x162xf32> -> vector<128x162xf32>
    %40 = arith.truncf %39 : vector<128x162xf32> to vector<128x162xbf16>
    %c0_22 = arith.constant 0 : index
    %c0_23 = arith.constant 0 : index
    %c0_24 = arith.constant 0 : index
    %41 = vector.load %arg5[%c0_22, %c0_23, %c0_24] : memref<5x162x160xbf16, #tpu.memory_space<vmem>>, vector<1x162x160xbf16>
    %42 = vector.shape_cast %41 : vector<1x162x160xbf16> to vector<162x160xbf16>
    %cst_25 = arith.constant dense<0.000000e+00> : vector<128x160xf32>
    %43 = tpu.matmul %40, %42, %cst_25 {dimension_numbers = #tpu.dot_dimension_numbers<[1], [0], [0], [1], [0, 0, 1, 1], [], []>} : vector<128x162xbf16>, vector<162x160xbf16>, vector<128x160xf32> -> vector<128x160xf32>
    %44 = vector.extract_strided_slice %43 {offsets = [0, 0], sizes = [124, 160], strides = [1, 1]} : vector<128x160xf32> to vector<124x160xf32>
    %c1_26 = arith.constant 1 : index
    %c0_27 = arith.constant 0 : index
    %c0_28 = arith.constant 0 : index
    %45 = vector.load %arg5[%c1_26, %c0_27, %c0_28] : memref<5x162x160xbf16, #tpu.memory_space<vmem>>, vector<1x162x160xbf16>
    %46 = vector.shape_cast %45 : vector<1x162x160xbf16> to vector<162x160xbf16>
    %cst_29 = arith.constant dense<0.000000e+00> : vector<128x160xf32>
    %47 = tpu.matmul %40, %46, %cst_29 {dimension_numbers = #tpu.dot_dimension_numbers<[1], [0], [0], [1], [0, 0, 1, 1], [], []>} : vector<128x162xbf16>, vector<162x160xbf16>, vector<128x160xf32> -> vector<128x160xf32>
    %48 = vector.extract_strided_slice %47 {offsets = [1, 0], sizes = [124, 160], strides = [1, 1]} : vector<128x160xf32> to vector<124x160xf32>
    %49 = arith.addf %44, %48 : vector<124x160xf32>
    %c2_30 = arith.constant 2 : index
    %c0_31 = arith.constant 0 : index
    %c0_32 = arith.constant 0 : index
    %50 = vector.load %arg5[%c2_30, %c0_31, %c0_32] : memref<5x162x160xbf16, #tpu.memory_space<vmem>>, vector<1x162x160xbf16>
    %51 = vector.shape_cast %50 : vector<1x162x160xbf16> to vector<162x160xbf16>
    %cst_33 = arith.constant dense<0.000000e+00> : vector<128x160xf32>
    %52 = tpu.matmul %40, %51, %cst_33 {dimension_numbers = #tpu.dot_dimension_numbers<[1], [0], [0], [1], [0, 0, 1, 1], [], []>} : vector<128x162xbf16>, vector<162x160xbf16>, vector<128x160xf32> -> vector<128x160xf32>
    %53 = vector.extract_strided_slice %52 {offsets = [2, 0], sizes = [124, 160], strides = [1, 1]} : vector<128x160xf32> to vector<124x160xf32>
    %54 = arith.addf %49, %53 : vector<124x160xf32>
    %c3_34 = arith.constant 3 : index
    %c0_35 = arith.constant 0 : index
    %c0_36 = arith.constant 0 : index
    %55 = vector.load %arg5[%c3_34, %c0_35, %c0_36] : memref<5x162x160xbf16, #tpu.memory_space<vmem>>, vector<1x162x160xbf16>
    %56 = vector.shape_cast %55 : vector<1x162x160xbf16> to vector<162x160xbf16>
    %cst_37 = arith.constant dense<0.000000e+00> : vector<128x160xf32>
    %57 = tpu.matmul %40, %56, %cst_37 {dimension_numbers = #tpu.dot_dimension_numbers<[1], [0], [0], [1], [0, 0, 1, 1], [], []>} : vector<128x162xbf16>, vector<162x160xbf16>, vector<128x160xf32> -> vector<128x160xf32>
    %58 = vector.extract_strided_slice %57 {offsets = [3, 0], sizes = [124, 160], strides = [1, 1]} : vector<128x160xf32> to vector<124x160xf32>
    %59 = arith.addf %54, %58 : vector<124x160xf32>
    %c4_38 = arith.constant 4 : index
    %c0_39 = arith.constant 0 : index
    %c0_40 = arith.constant 0 : index
    %60 = vector.load %arg5[%c4_38, %c0_39, %c0_40] : memref<5x162x160xbf16, #tpu.memory_space<vmem>>, vector<1x162x160xbf16>
    %61 = vector.shape_cast %60 : vector<1x162x160xbf16> to vector<162x160xbf16>
    %cst_41 = arith.constant dense<0.000000e+00> : vector<128x160xf32>
    %62 = tpu.matmul %40, %61, %cst_41 {dimension_numbers = #tpu.dot_dimension_numbers<[1], [0], [0], [1], [0, 0, 1, 1], [], []>} : vector<128x162xbf16>, vector<162x160xbf16>, vector<128x160xf32> -> vector<128x160xf32>
    %63 = vector.extract_strided_slice %62 {offsets = [4, 0], sizes = [124, 160], strides = [1, 1]} : vector<128x160xf32> to vector<124x160xf32>
    %64 = arith.addf %59, %63 : vector<124x160xf32>
    %c0_42 = arith.constant 0 : index
    %c0_43 = arith.constant 0 : index
    %65 = vector.load %arg6[%c0_42, %c0_43] : memref<1x160xf32, #tpu.memory_space<vmem>>, vector<1x160xf32>
    %66 = vector.broadcast %65 : vector<1x160xf32> to vector<124x160xf32>
    %67 = arith.addf %64, %66 : vector<124x160xf32>
    %cst_44 = arith.constant 0.000000e+00 : f32
    %68 = vector.broadcast %cst_44 : f32 to vector<124x160xf32>
    %69 = arith.maximumf %67, %68 : vector<124x160xf32>
    %70 = vector.extract_strided_slice %69 {offsets = [0, 0], sizes = [124, 144], strides = [1, 1]} : vector<124x160xf32> to vector<124x144xf32>
    %71 = vector.extract_strided_slice %69 {offsets = [0, 16], sizes = [124, 144], strides = [1, 1]} : vector<124x160xf32> to vector<124x144xf32>
    %72 = arith.maximumf %70, %71 : vector<124x144xf32>
    %73 = vector.extract_strided_slice %72 {offsets = [0, 0], sizes = [123, 144], strides = [1, 1]} : vector<124x144xf32> to vector<123x144xf32>
    %74 = vector.extract_strided_slice %72 {offsets = [1, 0], sizes = [123, 144], strides = [1, 1]} : vector<124x144xf32> to vector<123x144xf32>
    %75 = arith.maximumf %73, %74 : vector<123x144xf32>
    %76 = arith.truncf %75 : vector<123x144xf32> to vector<123x144xbf16>
    %c0_45 = arith.constant 0 : index
    %c0_46 = arith.constant 0 : index
    %77 = vector.load %arg7[%c0_45, %c0_46] : memref<40x123xbf16, #tpu.memory_space<vmem>>, vector<40x123xbf16>
    %cst_47 = arith.constant dense<0.000000e+00> : vector<40x144xf32>
    %78 = tpu.matmul %77, %76, %cst_47 {dimension_numbers = #tpu.dot_dimension_numbers<[1], [0], [0], [1], [0, 0, 1, 1], [], []>} : vector<40x123xbf16>, vector<123x144xbf16>, vector<40x144xf32> -> vector<40x144xf32>
    %79 = arith.truncf %78 : vector<40x144xf32> to vector<40x144xbf16>
    %c0_48 = arith.constant 0 : index
    %c0_49 = arith.constant 0 : index
    %80 = vector.load %arg9[%c0_48, %c0_49] : memref<1x120xf32, #tpu.memory_space<vmem>>, vector<1x120xf32>
    %81 = vector.extract_strided_slice %79 {offsets = [0, 0], sizes = [8, 144], strides = [1, 1]} : vector<40x144xbf16> to vector<8x144xbf16>
    %c0_50 = arith.constant 0 : index
    %c0_51 = arith.constant 0 : index
    %c0_52 = arith.constant 0 : index
    %82 = vector.load %arg8[%c0_50, %c0_51, %c0_52] : memref<5x144x120xbf16, #tpu.memory_space<vmem>>, vector<1x144x120xbf16>
    %83 = vector.shape_cast %82 : vector<1x144x120xbf16> to vector<144x120xbf16>
    %cst_53 = arith.constant dense<0.000000e+00> : vector<8x120xf32>
    %84 = tpu.matmul %81, %83, %cst_53 {dimension_numbers = #tpu.dot_dimension_numbers<[1], [0], [0], [1], [0, 0, 1, 1], [], []>} : vector<8x144xbf16>, vector<144x120xbf16>, vector<8x120xf32> -> vector<8x120xf32>
    %85 = vector.broadcast %80 : vector<1x120xf32> to vector<8x120xf32>
    %86 = arith.addf %85, %84 : vector<8x120xf32>
    %87 = vector.extract_strided_slice %79 {offsets = [8, 0], sizes = [8, 144], strides = [1, 1]} : vector<40x144xbf16> to vector<8x144xbf16>
    %c1_54 = arith.constant 1 : index
    %c0_55 = arith.constant 0 : index
    %c0_56 = arith.constant 0 : index
    %88 = vector.load %arg8[%c1_54, %c0_55, %c0_56] : memref<5x144x120xbf16, #tpu.memory_space<vmem>>, vector<1x144x120xbf16>
    %89 = vector.shape_cast %88 : vector<1x144x120xbf16> to vector<144x120xbf16>
    %cst_57 = arith.constant dense<0.000000e+00> : vector<8x120xf32>
    %90 = tpu.matmul %87, %89, %cst_57 {dimension_numbers = #tpu.dot_dimension_numbers<[1], [0], [0], [1], [0, 0, 1, 1], [], []>} : vector<8x144xbf16>, vector<144x120xbf16>, vector<8x120xf32> -> vector<8x120xf32>
    %91 = arith.addf %86, %90 : vector<8x120xf32>
    %92 = vector.extract_strided_slice %79 {offsets = [16, 0], sizes = [8, 144], strides = [1, 1]} : vector<40x144xbf16> to vector<8x144xbf16>
    %c2_58 = arith.constant 2 : index
    %c0_59 = arith.constant 0 : index
    %c0_60 = arith.constant 0 : index
    %93 = vector.load %arg8[%c2_58, %c0_59, %c0_60] : memref<5x144x120xbf16, #tpu.memory_space<vmem>>, vector<1x144x120xbf16>
    %94 = vector.shape_cast %93 : vector<1x144x120xbf16> to vector<144x120xbf16>
    %cst_61 = arith.constant dense<0.000000e+00> : vector<8x120xf32>
    %95 = tpu.matmul %92, %94, %cst_61 {dimension_numbers = #tpu.dot_dimension_numbers<[1], [0], [0], [1], [0, 0, 1, 1], [], []>} : vector<8x144xbf16>, vector<144x120xbf16>, vector<8x120xf32> -> vector<8x120xf32>
    %96 = arith.addf %91, %95 : vector<8x120xf32>
    %97 = vector.extract_strided_slice %79 {offsets = [24, 0], sizes = [8, 144], strides = [1, 1]} : vector<40x144xbf16> to vector<8x144xbf16>
    %c3_62 = arith.constant 3 : index
    %c0_63 = arith.constant 0 : index
    %c0_64 = arith.constant 0 : index
    %98 = vector.load %arg8[%c3_62, %c0_63, %c0_64] : memref<5x144x120xbf16, #tpu.memory_space<vmem>>, vector<1x144x120xbf16>
    %99 = vector.shape_cast %98 : vector<1x144x120xbf16> to vector<144x120xbf16>
    %cst_65 = arith.constant dense<0.000000e+00> : vector<8x120xf32>
    %100 = tpu.matmul %97, %99, %cst_65 {dimension_numbers = #tpu.dot_dimension_numbers<[1], [0], [0], [1], [0, 0, 1, 1], [], []>} : vector<8x144xbf16>, vector<144x120xbf16>, vector<8x120xf32> -> vector<8x120xf32>
    %101 = arith.addf %96, %100 : vector<8x120xf32>
    %102 = vector.extract_strided_slice %79 {offsets = [32, 0], sizes = [8, 144], strides = [1, 1]} : vector<40x144xbf16> to vector<8x144xbf16>
    %c4_66 = arith.constant 4 : index
    %c0_67 = arith.constant 0 : index
    %c0_68 = arith.constant 0 : index
    %103 = vector.load %arg8[%c4_66, %c0_67, %c0_68] : memref<5x144x120xbf16, #tpu.memory_space<vmem>>, vector<1x144x120xbf16>
    %104 = vector.shape_cast %103 : vector<1x144x120xbf16> to vector<144x120xbf16>
    %cst_69 = arith.constant dense<0.000000e+00> : vector<8x120xf32>
    %105 = tpu.matmul %102, %104, %cst_69 {dimension_numbers = #tpu.dot_dimension_numbers<[1], [0], [0], [1], [0, 0, 1, 1], [], []>} : vector<8x144xbf16>, vector<144x120xbf16>, vector<8x120xf32> -> vector<8x120xf32>
    %106 = arith.addf %101, %105 : vector<8x120xf32>
    %cst_70 = arith.constant 0.000000e+00 : f32
    %107 = vector.broadcast %cst_70 : f32 to vector<8x120xf32>
    %108 = arith.maximumf %106, %107 : vector<8x120xf32>
    %109 = arith.truncf %108 : vector<8x120xf32> to vector<8x120xbf16>
    %c0_71 = arith.constant 0 : index
    %c0_72 = arith.constant 0 : index
    %110 = vector.load %arg10[%c0_71, %c0_72] : memref<120x84xbf16, #tpu.memory_space<vmem>>, vector<120x84xbf16>
    %cst_73 = arith.constant dense<0.000000e+00> : vector<8x84xf32>
    %111 = tpu.matmul %109, %110, %cst_73 {dimension_numbers = #tpu.dot_dimension_numbers<[1], [0], [0], [1], [0, 0, 1, 1], [], []>} : vector<8x120xbf16>, vector<120x84xbf16>, vector<8x84xf32> -> vector<8x84xf32>
    %c0_74 = arith.constant 0 : index
    %c0_75 = arith.constant 0 : index
    %112 = vector.load %arg11[%c0_74, %c0_75] : memref<1x84xf32, #tpu.memory_space<vmem>>, vector<1x84xf32>
    %113 = vector.broadcast %112 : vector<1x84xf32> to vector<8x84xf32>
    %114 = arith.addf %111, %113 : vector<8x84xf32>
    %cst_76 = arith.constant 0.000000e+00 : f32
    %115 = vector.broadcast %cst_76 : f32 to vector<8x84xf32>
    %116 = arith.maximumf %114, %115 : vector<8x84xf32>
    %117 = arith.truncf %116 : vector<8x84xf32> to vector<8x84xbf16>
    %c0_77 = arith.constant 0 : index
    %c0_78 = arith.constant 0 : index
    %118 = vector.load %arg12[%c0_77, %c0_78] : memref<84x128xbf16, #tpu.memory_space<vmem>>, vector<84x128xbf16>
    %cst_79 = arith.constant dense<0.000000e+00> : vector<8x128xf32>
    %119 = tpu.matmul %117, %118, %cst_79 {dimension_numbers = #tpu.dot_dimension_numbers<[1], [0], [0], [1], [0, 0, 1, 1], [], []>} : vector<8x84xbf16>, vector<84x128xbf16>, vector<8x128xf32> -> vector<8x128xf32>
    %c0_80 = arith.constant 0 : index
    %c0_81 = arith.constant 0 : index
    %120 = vector.load %arg13[%c0_80, %c0_81] : memref<1x128xf32, #tpu.memory_space<vmem>>, vector<1x128xf32>
    %121 = vector.broadcast %120 : vector<1x128xf32> to vector<8x128xf32>
    %122 = arith.addf %119, %121 : vector<8x128xf32>
    %cst_82 = arith.constant dense<0xFF800000> : vector<8xf32>
    %123 = vector.multi_reduction <maximumf>, %122, %cst_82 [1] : vector<8x128xf32> to vector<8xf32>
    %124 = vector.shape_cast %123 : vector<8xf32> to vector<8x1xf32>
    %125 = vector.broadcast %124 : vector<8x1xf32> to vector<8x128xf32>
    %126 = arith.subf %122, %125 : vector<8x128xf32>
    %127 = math.exp %126 : vector<8x128xf32>
    %cst_83 = arith.constant dense<0.000000e+00> : vector<8xf32>
    %128 = vector.multi_reduction <add>, %127, %cst_83 [1] : vector<8x128xf32> to vector<8xf32>
    %129 = vector.shape_cast %128 : vector<8xf32> to vector<8x1xf32>
    %130 = tpu.reciprocal %129 {approx = true} : vector<8x1xf32> -> vector<8x1xf32>
    %131 = vector.broadcast %130 : vector<8x1xf32> to vector<8x128xf32>
    %132 = arith.mulf %127, %131 : vector<8x128xf32>
    %c0_84 = arith.constant 0 : index
    %c0_85 = arith.constant 0 : index
    %133 = vector.load %arg14[%c0_84, %c0_85] : memref<8x128xf32, #tpu.memory_space<vmem>>, vector<8x128xf32>
    tpu.vector_store %arg14[%c0_84, %c0_85], %132 {strides = array<i32>} : memref<8x128xf32, #tpu.memory_space<vmem>>, vector<8x128xf32>,
    return
  }
  func.func @transform_0(%arg0: i32) -> (i32, i32) {
    %c0_i32 = arith.constant 0 : i32
    %c0_i32_0 = arith.constant 0 : i32
    return %arg0, %c0_i32 : i32, i32
  }
  func.func @transform_1(%arg0: i32) -> (i32, i32, i32) {
    %c0_i32 = arith.constant 0 : i32
    %c0_i32_0 = arith.constant 0 : i32
    %c0_i32_1 = arith.constant 0 : i32
    %c0_i32_2 = arith.constant 0 : i32
    return %c0_i32, %c0_i32_0, %c0_i32_1 : i32, i32, i32
  }
  func.func @transform_2(%arg0: i32) -> (i32, i32) {
    %c0_i32 = arith.constant 0 : i32
    %c0_i32_0 = arith.constant 0 : i32
    %c0_i32_1 = arith.constant 0 : i32
    return %c0_i32, %c0_i32_0 : i32, i32
  }
  func.func @transform_3(%arg0: i32) -> (i32, i32) {
    %c0_i32 = arith.constant 0 : i32
    %c0_i32_0 = arith.constant 0 : i32
    %c0_i32_1 = arith.constant 0 : i32
    return %c0_i32, %c0_i32_0 : i32, i32
  }
  func.func @transform_4(%arg0: i32) -> (i32, i32, i32) {
    %c0_i32 = arith.constant 0 : i32
    %c0_i32_0 = arith.constant 0 : i32
    %c0_i32_1 = arith.constant 0 : i32
    %c0_i32_2 = arith.constant 0 : i32
    return %c0_i32, %c0_i32_0, %c0_i32_1 : i32, i32, i32
  }
  func.func @transform_5(%arg0: i32) -> (i32, i32) {
    %c0_i32 = arith.constant 0 : i32
    %c0_i32_0 = arith.constant 0 : i32
    %c0_i32_1 = arith.constant 0 : i32
    return %c0_i32, %c0_i32_0 : i32, i32
  }
  func.func @transform_6(%arg0: i32) -> (i32, i32) {
    %c0_i32 = arith.constant 0 : i32
    %c0_i32_0 = arith.constant 0 : i32
    %c0_i32_1 = arith.constant 0 : i32
    return %c0_i32, %c0_i32_0 : i32, i32
  }
  func.func @transform_7(%arg0: i32) -> (i32, i32, i32) {
    %c0_i32 = arith.constant 0 : i32
    %c0_i32_0 = arith.constant 0 : i32
    %c0_i32_1 = arith.constant 0 : i32
    %c0_i32_2 = arith.constant 0 : i32
    return %c0_i32, %c0_i32_0, %c0_i32_1 : i32, i32, i32
  }
  func.func @transform_8(%arg0: i32) -> (i32, i32) {
    %c0_i32 = arith.constant 0 : i32
    %c0_i32_0 = arith.constant 0 : i32
    %c0_i32_1 = arith.constant 0 : i32
    return %c0_i32, %c0_i32_0 : i32, i32
  }
  func.func @transform_9(%arg0: i32) -> (i32, i32) {
    %c0_i32 = arith.constant 0 : i32
    %c0_i32_0 = arith.constant 0 : i32
    %c0_i32_1 = arith.constant 0 : i32
    return %c0_i32, %c0_i32_0 : i32, i32
  }
  func.func @transform_10(%arg0: i32) -> (i32, i32) {
    %c0_i32 = arith.constant 0 : i32
    %c0_i32_0 = arith.constant 0 : i32
    %c0_i32_1 = arith.constant 0 : i32
    return %c0_i32, %c0_i32_0 : i32, i32
  }
  func.func @transform_11(%arg0: i32) -> (i32, i32) {
    %c0_i32 = arith.constant 0 : i32
    %c0_i32_0 = arith.constant 0 : i32
    %c0_i32_1 = arith.constant 0 : i32
    return %c0_i32, %c0_i32_0 : i32, i32
  }
  func.func @transform_12(%arg0: i32) -> (i32, i32) {
    %c0_i32 = arith.constant 0 : i32
    %c0_i32_0 = arith.constant 0 : i32
    %c0_i32_1 = arith.constant 0 : i32
    return %c0_i32, %c0_i32_0 : i32, i32
  }
  func.func @transform_13(%arg0: i32) -> (i32, i32) {
    %c0_i32 = arith.constant 0 : i32
    %c0_i32_0 = arith.constant 0 : i32
    return %arg0, %c0_i32 : i32, i32
  }
}

</mosaic_0001>

<llo_original>
// kernel: lenet_forward.1
$region0: #{lenet_forward.1}
  #allocation0 [shape = 'u32[]', space=smem, size = 0x4, offset = 0x4, fixed_abs, tag = 'smem constant byte address 0x4 - core index']
  #allocation1 [shape = 'u32[144,128]{1,0:T(1,128)}', space=vmem, size = 0x12000, scoped, tag = 'internal scratch']
  %s0 = inlined_call_operand.vmem [shape: f32[512,32], index: 0, kind: input, shape index: {}]
  %s1 = inlined_call_operand.vmem [shape: bf16[5,32,168], index: 1, kind: input, shape index: {}]
  %s2 = inlined_call_operand.vmem [shape: f32[1,168], index: 2, kind: input, shape index: {}]
  %s3 = inlined_call_operand.vmem [shape: bf16[128,251], index: 3, kind: input, shape index: {}]
  %s4 = inlined_call_operand.vmem [shape: bf16[5,162,160], index: 4, kind: input, shape index: {}]
  %s5 = inlined_call_operand.vmem [shape: f32[1,160], index: 5, kind: input, shape index: {}]
  %s6 = inlined_call_operand.vmem [shape: bf16[40,123], index: 6, kind: input, shape index: {}]
  %s7 = inlined_call_operand.vmem [shape: bf16[5,144,120], index: 7, kind: input, shape index: {}]
  %s8 = inlined_call_operand.vmem [shape: f32[1,120], index: 8, kind: input, shape index: {}]
  %s9 = inlined_call_operand.vmem [shape: bf16[120,84], index: 9, kind: input, shape index: {}]
  %s10 = inlined_call_operand.vmem [shape: f32[1,84], index: 10, kind: input, shape index: {}]
  %s11 = inlined_call_operand.vmem [shape: bf16[84,128], index: 11, kind: input, shape index: {}]
  %s12 = inlined_call_operand.vmem [shape: f32[1,128], index: 12, kind: input, shape index: {}]
  %s13 = inlined_call_operand.hbm [shape: f32[16,128], index: 13, kind: output, shape index: {}]
  %s14 = sld [smem:[#allocation0]]
  $region85: #{lenet_forward.1} parent=0
    _
  %s16 = ssub.s32 1, %s14
  %s17 = scalar_select 0, %s16, %s14
  $region1: #{lenet_forward.1} parent=0
    #allocation2 [shape = 'u8[8192]{0}', space=vmem, size = 0x2000, scoped, tag = 'output window, operand 0']
    #allocation3 [shape = 's32[2]{0}', space=sflag, size = 0x8, scoped, tag = 'scoped memory for lenet_forward.1']
    %18 = vsyncpa [#allocation3], 0
    %s19 = scalar_lea.sflag [#allocation3], 1
    %20 = vsyncpa %s19, 0
    loop: start=0, step=1, limit=4
    $region2: #{lenet_forward.1} parent=1 // loop_pre_header
      _
    $region3: #{lenet_forward.1} parent=1 // loop_header
      %s22 = sphi 0, %s26
      %p23 = scmp.ge.s32.totalorder %s22, 4
      %s32 = sphi 0, %s34
      %s35 = sphi 0, %s32
      %s36 = sphi 0, %s35
      %s52 = sphi 0, %s36
      %s56 = sphi 0, %s56
      %s58 = sphi 0, %s56
      %s59 = sphi 0, %s58
      %s73 = sphi 0, %s59
      %s77 = sphi 0, %s77
      %s79 = sphi 0, %s77
      %s80 = sphi 0, %s79
      %s94 = sphi 0, %s80
      %s98 = sphi 0, %s98
      %s100 = sphi 0, %s98
      %s101 = sphi 0, %s100
      %s115 = sphi 0, %s101
      %s119 = sphi 0, %s119
      %s121 = sphi 0, %s119
      %s122 = sphi 0, %s121
      %s136 = sphi 0, %s122
      %s140 = sphi 0, %s140
      %s142 = sphi 0, %s140
      %s143 = sphi 0, %s142
      %s157 = sphi 0, %s143
      %s161 = sphi 0, %s161
      %s163 = sphi 0, %s161
      %s164 = sphi 0, %s163
      %s178 = sphi 0, %s164
      %s182 = sphi 0, %s182
      %s184 = sphi 0, %s182
      %s185 = sphi 0, %s184
      %s199 = sphi 0, %s185
      %s203 = sphi 0, %s203
      %s205 = sphi 0, %s203
      %s206 = sphi 0, %s205
      %s220 = sphi 0, %s206
      %s224 = sphi 0, %s224
      %s226 = sphi 0, %s224
      %s227 = sphi 0, %s226
      %s241 = sphi 0, %s227
      %s245 = sphi 0, %s245
      %s247 = sphi 0, %s245
      %s248 = sphi 0, %s247
      %s262 = sphi 0, %s248
      %s266 = sphi 0, %s266
      %s268 = sphi 0, %s266
      %s269 = sphi 0, %s268
      %s283 = sphi 0, %s269
      %s287 = sphi 0, %s287
      %s289 = sphi 0, %s287
      %s290 = sphi 0, %s289
      %s304 = sphi 0, %s290
      %s310 = sphi 0, %s312
      %s313 = sphi 0, %s310
      %s314 = sphi 0, %s313
      %s330 = sphi 0, %s314
    $region4: #{lenet_forward.1} parent=1 // loop_header_branch
      %25 = sbr.rel (%p23) target = $region8
    $region5: #{lenet_forward.1} parent=1 // loop_body
      %s27 = ssub.s32 %s22, 1
      %s28 = ssub.s32 %s22, 2
      %s29 = sadd.s32 %s22, 1
      %s30 = ssub.s32 %s22, %s29
      %p31 = scmp.eq.s32.totalorder %s30, 0
      %s33 = sadd.s32 %s32, 1
      %s34 = scalar_select %p31, %s32, %s33
      %p37 = pneg %p31
      %p38 = scmp.eq.s32.totalorder %s22, 1
      %p39 = por %p37, %p38
      %p40 = scmp.ne.s32.totalorder %s32, %s35
      %p41 = scmp.eq.s32.totalorder %s22, 0
      %p42 = por %p40, %p41
      %p43 = scmp.ne.s32.totalorder %s32, %s35
      %p44 = scmp.eq.s32.totalorder %s27, 1
      %p45 = por %p43, %p44
      %p46 = scmp.ne.s32.totalorder %s35, %s36
      %p47 = scmp.eq.s32.totalorder %s27, 0
      %p48 = por %p46, %p47
      %p49 = scmp.ne.s32.totalorder %s35, %s36
      %p50 = scmp.eq.s32.totalorder %s28, 1
      %p51 = por %p49, %p50
      %p53 = scmp.ne.s32.totalorder %s36, %s52
      %p54 = scmp.eq.s32.totalorder %s28, 0
      %p55 = por %p53, %p54
      %s57 = sadd.s32 %s56, 1
      %p60 = scmp.eq.s32.totalorder %s22, 1
      %p61 = scmp.ne.s32.totalorder %s56, %s58
      %p62 = scmp.eq.s32.totalorder %s22, 0
      %p63 = por %p61, %p62
      %p64 = scmp.ne.s32.totalorder %s56, %s58
      %p65 = scmp.eq.s32.totalorder %s27, 1
      %p66 = por %p64, %p65
      %p67 = scmp.ne.s32.totalorder %s58, %s59
      %p68 = scmp.eq.s32.totalorder %s27, 0
      %p69 = por %p67, %p68
      %p70 = scmp.ne.s32.totalorder %s58, %s59
      %p71 = scmp.eq.s32.totalorder %s28, 1
      %p72 = por %p70, %p71
      %p74 = scmp.ne.s32.totalorder %s59, %s73
      %p75 = scmp.eq.s32.totalorder %s28, 0
      %p76 = por %p74, %p75
      %s78 = sadd.s32 %s77, 1
      %p81 = scmp.eq.s32.totalorder %s22, 1
      %p82 = scmp.ne.s32.totalorder %s77, %s79
      %p83 = scmp.eq.s32.totalorder %s22, 0
      %p84 = por %p82, %p83
      %p85 = scmp.ne.s32.totalorder %s77, %s79
      %p86 = scmp.eq.s32.totalorder %s27, 1
      %p87 = por %p85, %p86
      %p88 = scmp.ne.s32.totalorder %s79, %s80
      %p89 = scmp.eq.s32.totalorder %s27, 0
      %p90 = por %p88, %p89
      %p91 = scmp.ne.s32.totalorder %s79, %s80
      %p92 = scmp.eq.s32.totalorder %s28, 1
      %p93 = por %p91, %p92
      %p95 = scmp.ne.s32.totalorder %s80, %s94
      %p96 = scmp.eq.s32.totalorder %s28, 0
      %p97 = por %p95, %p96
      %s99 = sadd.s32 %s98, 1
      %p102 = scmp.eq.s32.totalorder %s22, 1
      %p103 = scmp.ne.s32.totalorder %s98, %s100
      %p104 = scmp.eq.s32.totalorder %s22, 0
      %p105 = por %p103, %p104
      %p106 = scmp.ne.s32.totalorder %s98, %s100
      %p107 = scmp.eq.s32.totalorder %s27, 1
      %p108 = por %p106, %p107
      %p109 = scmp.ne.s32.totalorder %s100, %s101
      %p110 = scmp.eq.s32.totalorder %s27, 0
      %p111 = por %p109, %p110
      %p112 = scmp.ne.s32.totalorder %s100, %s101
      %p113 = scmp.eq.s32.totalorder %s28, 1
      %p114 = por %p112, %p113
      %p116 = scmp.ne.s32.totalorder %s101, %s115
      %p117 = scmp.eq.s32.totalorder %s28, 0
      %p118 = por %p116, %p117
      %s120 = sadd.s32 %s119, 1
      %p123 = scmp.eq.s32.totalorder %s22, 1
      %p124 = scmp.ne.s32.totalorder %s119, %s121
      %p125 = scmp.eq.s32.totalorder %s22, 0
      %p126 = por %p124, %p125
      %p127 = scmp.ne.s32.totalorder %s119, %s121
      %p128 = scmp.eq.s32.totalorder %s27, 1
      %p129 = por %p127, %p128
      %p130 = scmp.ne.s32.totalorder %s121, %s122
      %p131 = scmp.eq.s32.totalorder %s27, 0
      %p132 = por %p130, %p131
      %p133 = scmp.ne.s32.totalorder %s121, %s122
      %p134 = scmp.eq.s32.totalorder %s28, 1
      %p135 = por %p133, %p134
      %p137 = scmp.ne.s32.totalorder %s122, %s136
      %p138 = scmp.eq.s32.totalorder %s28, 0
      %p139 = por %p137, %p138
      %s141 = sadd.s32 %s140, 1
      %p144 = scmp.eq.s32.totalorder %s22, 1
      %p145 = scmp.ne.s32.totalorder %s140, %s142
      %p146 = scmp.eq.s32.totalorder %s22, 0
      %p147 = por %p145, %p146
      %p148 = scmp.ne.s32.totalorder %s140, %s142
      %p149 = scmp.eq.s32.totalorder %s27, 1
      %p150 = por %p148, %p149
      %p151 = scmp.ne.s32.totalorder %s142, %s143
      %p152 = scmp.eq.s32.totalorder %s27, 0
      %p153 = por %p151, %p152
      %p154 = scmp.ne.s32.totalorder %s142, %s143
      %p155 = scmp.eq.s32.totalorder %s28, 1
      %p156 = por %p154, %p155
      %p158 = scmp.ne.s32.totalorder %s143, %s157
      %p159 = scmp.eq.s32.totalorder %s28, 0
      %p160 = por %p158, %p159
      %s162 = sadd.s32 %s161, 1
      %p165 = scmp.eq.s32.totalorder %s22, 1
      %p166 = scmp.ne.s32.totalorder %s161, %s163
      %p167 = scmp.eq.s32.totalorder %s22, 0
      %p168 = por %p166, %p167
      %p169 = scmp.ne.s32.totalorder %s161, %s163
      %p170 = scmp.eq.s32.totalorder %s27, 1
      %p171 = por %p169, %p170
      %p172 = scmp.ne.s32.totalorder %s163, %s164
      %p173 = scmp.eq.s32.totalorder %s27, 0
      %p174 = por %p172, %p173
      %p175 = scmp.ne.s32.totalorder %s163, %s164
      %p176 = scmp.eq.s32.totalorder %s28, 1
      %p177 = por %p175, %p176
      %p179 = scmp.ne.s32.totalorder %s164, %s178
      %p180 = scmp.eq.s32.totalorder %s28, 0
      %p181 = por %p179, %p180
      %s183 = sadd.s32 %s182, 1
      %p186 = scmp.eq.s32.totalorder %s22, 1
      %p187 = scmp.ne.s32.totalorder %s182, %s184
      %p188 = scmp.eq.s32.totalorder %s22, 0
      %p189 = por %p187, %p188
      %p190 = scmp.ne.s32.totalorder %s182, %s184
      %p191 = scmp.eq.s32.totalorder %s27, 1
      %p192 = por %p190, %p191
      %p193 = scmp.ne.s32.totalorder %s184, %s185
      %p194 = scmp.eq.s32.totalorder %s27, 0
      %p195 = por %p193, %p194
      %p196 = scmp.ne.s32.totalorder %s184, %s185
      %p197 = scmp.eq.s32.totalorder %s28, 1
      %p198 = por %p196, %p197
      %p200 = scmp.ne.s32.totalorder %s185, %s199
      %p201 = scmp.eq.s32.totalorder %s28, 0
      %p202 = por %p200, %p201
      %s204 = sadd.s32 %s203, 1
      %p207 = scmp.eq.s32.totalorder %s22, 1
      %p208 = scmp.ne.s32.totalorder %s203, %s205
      %p209 = scmp.eq.s32.totalorder %s22, 0
      %p210 = por %p208, %p209
      %p211 = scmp.ne.s32.totalorder %s203, %s205
      %p212 = scmp.eq.s32.totalorder %s27, 1
      %p213 = por %p211, %p212
      %p214 = scmp.ne.s32.totalorder %s205, %s206
      %p215 = scmp.eq.s32.totalorder %s27, 0
      %p216 = por %p214, %p215
      %p217 = scmp.ne.s32.totalorder %s205, %s206
      %p218 = scmp.eq.s32.totalorder %s28, 1
      %p219 = por %p217, %p218
      %p221 = scmp.ne.s32.totalorder %s206, %s220
      %p222 = scmp.eq.s32.totalorder %s28, 0
      %p223 = por %p221, %p222
      %s225 = sadd.s32 %s224, 1
      %p228 = scmp.eq.s32.totalorder %s22, 1
      %p229 = scmp.ne.s32.totalorder %s224, %s226
      %p230 = scmp.eq.s32.totalorder %s22, 0
      %p231 = por %p229, %p230
      %p232 = scmp.ne.s32.totalorder %s224, %s226
      %p233 = scmp.eq.s32.totalorder %s27, 1
      %p234 = por %p232, %p233
      %p235 = scmp.ne.s32.totalorder %s226, %s227
      %p236 = scmp.eq.s32.totalorder %s27, 0
      %p237 = por %p235, %p236
      %p238 = scmp.ne.s32.totalorder %s226, %s227
      %p239 = scmp.eq.s32.totalorder %s28, 1
      %p240 = por %p238, %p239
      %p242 = scmp.ne.s32.totalorder %s227, %s241
      %p243 = scmp.eq.s32.totalorder %s28, 0
      %p244 = por %p242, %p243
      %s246 = sadd.s32 %s245, 1
      %p249 = scmp.eq.s32.totalorder %s22, 1
      %p250 = scmp.ne.s32.totalorder %s245, %s247
      %p251 = scmp.eq.s32.totalorder %s22, 0
      %p252 = por %p250, %p251
      %p253 = scmp.ne.s32.totalorder %s245, %s247
      %p254 = scmp.eq.s32.totalorder %s27, 1
      %p255 = por %p253, %p254
      %p256 = scmp.ne.s32.totalorder %s247, %s248
      %p257 = scmp.eq.s32.totalorder %s27, 0
      %p258 = por %p256, %p257
      %p259 = scmp.ne.s32.totalorder %s247, %s248
      %p260 = scmp.eq.s32.totalorder %s28, 1
      %p261 = por %p259, %p260
      %p263 = scmp.ne.s32.totalorder %s248, %s262
      %p264 = scmp.eq.s32.totalorder %s28, 0
      %p265 = por %p263, %p264
      %s267 = sadd.s32 %s266, 1
      %p270 = scmp.eq.s32.totalorder %s22, 1
      %p271 = scmp.ne.s32.totalorder %s266, %s268
      %p272 = scmp.eq.s32.totalorder %s22, 0
      %p273 = por %p271, %p272
      %p274 = scmp.ne.s32.totalorder %s266, %s268
      %p275 = scmp.eq.s32.totalorder %s27, 1
      %p276 = por %p274, %p275
      %p277 = scmp.ne.s32.totalorder %s268, %s269
      %p278 = scmp.eq.s32.totalorder %s27, 0
      %p279 = por %p277, %p278
      %p280 = scmp.ne.s32.totalorder %s268, %s269
      %p281 = scmp.eq.s32.totalorder %s28, 1
      %p282 = por %p280, %p281
      %p284 = scmp.ne.s32.totalorder %s269, %s283
      %p285 = scmp.eq.s32.totalorder %s28, 0
      %p286 = por %p284, %p285
      %s288 = sadd.s32 %s287, 1
      %p291 = scmp.eq.s32.totalorder %s22, 1
      %p292 = scmp.ne.s32.totalorder %s287, %s289
      %p293 = scmp.eq.s32.totalorder %s22, 0
      %p294 = por %p292, %p293
      %p295 = scmp.ne.s32.totalorder %s287, %s289
      %p296 = scmp.eq.s32.totalorder %s27, 1
      %p297 = por %p295, %p296
      %p298 = scmp.ne.s32.totalorder %s289, %s290
      %p299 = scmp.eq.s32.totalorder %s27, 0
      %p300 = por %p298, %p299
      %p301 = scmp.ne.s32.totalorder %s289, %s290
      %p302 = scmp.eq.s32.totalorder %s28, 1
      %p303 = por %p301, %p302
      %p305 = scmp.ne.s32.totalorder %s290, %s304
      %p306 = scmp.eq.s32.totalorder %s28, 0
      %p307 = por %p305, %p306
      %s308 = ssub.s32 %s22, %s29
      %p309 = scmp.eq.s32.totalorder %s308, 0
      %s311 = sadd.s32 %s310, 1
      %s312 = scalar_select %p309, %s310, %s311
      %p315 = pneg %p309
      %p316 = scmp.eq.s32.totalorder %s22, 1
      %p317 = por %p315, %p316
      %p318 = scmp.ne.s32.totalorder %s310, %s313
      %p319 = scmp.eq.s32.totalorder %s22, 0
      %p320 = por %p318, %p319
      %p321 = scmp.ne.s32.totalorder %s310, %s313
      %p322 = scmp.eq.s32.totalorder %s27, 1
      %p323 = por %p321, %p322
      %p324 = scmp.ne.s32.totalorder %s313, %s314
      %p325 = scmp.eq.s32.totalorder %s27, 0
      %p326 = por %p324, %p325
      %p327 = scmp.ne.s32.totalorder %s313, %s314
      %p328 = scmp.eq.s32.totalorder %s28, 1
      %p329 = por %p327, %p328
      %p331 = scmp.ne.s32.totalorder %s314, %s330
      %p332 = scmp.eq.s32.totalorder %s28, 0
      %p333 = por %p331, %p332
      %p334 = scmp.le.s32.totalorder 1, %s22
      %p335 = scmp.lt.s32.totalorder %s22, 3
      %p336 = pnand %p334, %p335
      %p337 = pneg %p336
      // Predicated region
      $region9: #{lenet_forward.1} parent=5 // pred_check
        _
      $region10: #{lenet_forward.1} parent=5 // pred_check_branch
        %339 = sbr.rel (%p336) target = $region12
      $region11: #{lenet_forward.1} parent=5 // pred_region
        %s340 = ssub.s32 %s22, 1
        // Predicated region
        $region13: #{lenet_forward.1} parent=11 // pred_check
          %p341 = pneg %p69
        $region14: #{lenet_forward.1} parent=11 // pred_check_branch
          %343 = sbr.rel (%p341) target = $region16
        $region15: #{lenet_forward.1} parent=11 // pred_region
          _
        $region16: #{lenet_forward.1} parent=11 // pred_fallthru
          _
        // Predicated region
        $region17: #{lenet_forward.1} parent=11 // pred_check
          %p344 = pneg %p90
        $region18: #{lenet_forward.1} parent=11 // pred_check_branch
          %346 = sbr.rel (%p344) target = $region20
        $region19: #{lenet_forward.1} parent=11 // pred_region
          _
        $region20: #{lenet_forward.1} parent=11 // pred_fallthru
          _
        // Predicated region
        $region21: #{lenet_forward.1} parent=11 // pred_check
          %p347 = pneg %p111
        $region22: #{lenet_forward.1} parent=11 // pred_check_branch
          %349 = sbr.rel (%p347) target = $region24
        $region23: #{lenet_forward.1} parent=11 // pred_region
          _
        $region24: #{lenet_forward.1} parent=11 // pred_fallthru
          _
        // Predicated region
        $region25: #{lenet_forward.1} parent=11 // pred_check
          %p350 = pneg %p132
        $region26: #{lenet_forward.1} parent=11 // pred_check_branch
          %352 = sbr.rel (%p350) target = $region28
        $region27: #{lenet_forward.1} parent=11 // pred_region
          _
        $region28: #{lenet_forward.1} parent=11 // pred_fallthru
          _
        // Predicated region
        $region29: #{lenet_forward.1} parent=11 // pred_check
          %p353 = pneg %p153
        $region30: #{lenet_forward.1} parent=11 // pred_check_branch
          %355 = sbr.rel (%p353) target = $region32
        $region31: #{lenet_forward.1} parent=11 // pred_region
          _
        $region32: #{lenet_forward.1} parent=11 // pred_fallthru
          _
        // Predicated region
        $region33: #{lenet_forward.1} parent=11 // pred_check
          %p356 = pneg %p174
        $region34: #{lenet_forward.1} parent=11 // pred_check_branch
          %358 = sbr.rel (%p356) target = $region36
        $region35: #{lenet_forward.1} parent=11 // pred_region
          _
        $region36: #{lenet_forward.1} parent=11 // pred_fallthru
          _
        // Predicated region
        $region37: #{lenet_forward.1} parent=11 // pred_check
          %p359 = pneg %p195
        $region38: #{lenet_forward.1} parent=11 // pred_check_branch
          %361 = sbr.rel (%p359) target = $region40
        $region39: #{lenet_forward.1} parent=11 // pred_region
          _
        $region40: #{lenet_forward.1} parent=11 // pred_fallthru
          _
        // Predicated region
        $region41: #{lenet_forward.1} parent=11 // pred_check
          %p362 = pneg %p216
        $region42: #{lenet_forward.1} parent=11 // pred_check_branch
          %364 = sbr.rel (%p362) target = $region44
        $region43: #{lenet_forward.1} parent=11 // pred_region
          _
        $region44: #{lenet_forward.1} parent=11 // pred_fallthru
          _
        // Predicated region
        $region45: #{lenet_forward.1} parent=11 // pred_check
          %p365 = pneg %p237
        $region46: #{lenet_forward.1} parent=11 // pred_check_branch
          %367 = sbr.rel (%p365) target = $region48
        $region47: #{lenet_forward.1} parent=11 // pred_region
          _
        $region48: #{lenet_forward.1} parent=11 // pred_fallthru
          _
        // Predicated region
        $region49: #{lenet_forward.1} parent=11 // pred_check
          %p368 = pneg %p258
        $region50: #{lenet_forward.1} parent=11 // pred_check_branch
          %370 = sbr.rel (%p368) target = $region52
        $region51: #{lenet_forward.1} parent=11 // pred_region
          _
        $region52: #{lenet_forward.1} parent=11 // pred_fallthru
          _
        // Predicated region
        $region53: #{lenet_forward.1} parent=11 // pred_check
          %p371 = pneg %p279
        $region54: #{lenet_forward.1} parent=11 // pred_check_branch
          %373 = sbr.rel (%p371) target = $region56
        $region55: #{lenet_forward.1} parent=11 // pred_region
          _
        $region56: #{lenet_forward.1} parent=11 // pred_fallthru
          _
        // Predicated region
        $region57: #{lenet_forward.1} parent=11 // pred_check
          %p374 = pneg %p300
        $region58: #{lenet_forward.1} parent=11 // pred_check_branch
          %376 = sbr.rel (%p374) target = $region60
        $region59: #{lenet_forward.1} parent=11 // pred_region
          _
        $region60: #{lenet_forward.1} parent=11 // pred_fallthru
          _
      $region12: #{lenet_forward.1} parent=5 // pred_fallthru
        _
      %p377 = scmp.lt.s32.totalorder %s22, 2
      // Predicated region
      $region61: #{lenet_forward.1} parent=5 // pred_check
        %p378 = pneg %p377
      $region62: #{lenet_forward.1} parent=5 // pred_check_branch
        %380 = sbr.rel (%p378) target = $region64
      $region63: #{lenet_forward.1} parent=5 // pred_region
        // Predicated region
        $region65: #{lenet_forward.1} parent=63 // pred_check
          %p381 = pneg %p42
        $region66: #{lenet_forward.1} parent=63 // pred_check_branch
          %383 = sbr.rel (%p381) target = $region68
        $region67: #{lenet_forward.1} parent=63 // pred_region
          %s384 = smul.u32 32, %s22
          %p385 = scmp.lt.s32.totalorder %s384, 63
          %s386 = scalar_select %p385, %s384, 63
          %s387 = smul.addr %s386, 8
          %s388 = scalar_lea.vmem %s0, %s387
          %s389 = smul.u32 32, %s22
        $region68: #{lenet_forward.1} parent=63 // pred_fallthru
          _
      $region64: #{lenet_forward.1} parent=5 // pred_fallthru
        _
      %p390 = scmp.le.s32.totalorder 1, %s22
      %p391 = scmp.lt.s32.totalorder %s22, 3
      %p392 = pnand %p390, %p391
      %p393 = pneg %p392
      // Predicated region
      $region69: #{lenet_forward.1} parent=5 // pred_check
        _
      $region70: #{lenet_forward.1} parent=5 // pred_check_branch
        %395 = sbr.rel (%p392) target = $region72
      $region71: #{lenet_forward.1} parent=5 // pred_region
        %s396 = ssub.s32 %s22, 1
        %s397 = smul.u32 32, %s27
        %p398 = scmp.lt.s32.totalorder %s397, 63
        %s399 = scalar_select %p398, %s397, 63
        %s400 = smul.addr %s399, 8
        %s401 = scalar_lea.vmem %s0, %s400
        %p402 = pneg %p48
        %p403 = pneg %p45
        %p404 = pneg %p69
        %p405 = pneg %p66
        %p406 = pneg %p90
        %p407 = pneg %p87
        %p408 = pneg %p111
        %p409 = pneg %p108
        %p410 = pneg %p132
        %p411 = pneg %p129
        %p412 = pneg %p153
        %p413 = pneg %p150
        %p414 = pneg %p174
        %p415 = pneg %p171
        %p416 = pneg %p195
        %p417 = pneg %p192
        %p418 = pneg %p216
        %p419 = pneg %p213
        %p420 = pneg %p237
        %p421 = pneg %p234
        %p422 = pneg %p258
        %p423 = pneg %p255
        %p424 = pneg %p279
        %p425 = pneg %p276
        %p426 = pneg %p300
        %p427 = pneg %p297
        %p428 = pneg %p326
        %p429 = pneg %p323
        %s430 = sand.u32 %s313, 1
        %s431 = scalar_lea.sflag [#allocation3], %s430
        %s432 = sand.u32 %s313, 1
        %s433 = smul.addr %s432, 8
        %s434 = scalar_lea.vmem [#allocation2], %s433
        %s435 = smul.u32 32, %s27
        %p436 = scmp.lt.s32.totalorder %s435, 63
        %s437 = scalar_select %p436, %s435, 63
        %s438 = smul.addr %s437, 8
        %s439 = scalar_lea.vmem %s0, %s438
        %s440 = smul.u32 32, %s27
        %v442 = vld [vmem:[%s439] sm:$0xff]
        %v443 = vld [vmem:[%s439 + $0x8] sm:$0xff]
        %v444 = vld [vmem:[%s439 + $0x10] sm:$0xff]
        %v445 = vld [vmem:[%s439 + $0x18] sm:$0xff]
        %v446 = vld [vmem:[%s439 + $0x20] sm:$0xff]
        %v447 = vld [vmem:[%s439 + $0x28] sm:$0xff]
        %v448 = vld [vmem:[%s439 + $0x30] sm:$0xff]
        %v449 = vld [vmem:[%s439 + $0x38] sm:$0xff]
        %v450 = vld [vmem:[%s439 + $0x40] sm:$0xff]
        %v451 = vld [vmem:[%s439 + $0x48] sm:$0xff]
        %v452 = vld [vmem:[%s439 + $0x50] sm:$0xff]
        %v453 = vld [vmem:[%s439 + $0x58] sm:$0xff]
        %v454 = vld [vmem:[%s439 + $0x60] sm:$0xff]
        %v455 = vld [vmem:[%s439 + $0x68] sm:$0xff]
        %v456 = vld [vmem:[%s439 + $0x70] sm:$0xff]
        %v457 = vld [vmem:[%s439 + $0x78] sm:$0xff]
        %v458 = vld [vmem:[%s439 + $0x80] sm:$0xff]
        %v459 = vld [vmem:[%s439 + $0x88] sm:$0xff]
        %v460 = vld [vmem:[%s439 + $0x90] sm:$0xff]
        %v461 = vld [vmem:[%s439 + $0x98] sm:$0xff]
        %v462 = vld [vmem:[%s439 + $0xa0] sm:$0xff]
        %v463 = vld [vmem:[%s439 + $0xa8] sm:$0xff]
        %v464 = vld [vmem:[%s439 + $0xb0] sm:$0xff]
        %v465 = vld [vmem:[%s439 + $0xb8] sm:$0xff]
        %v466 = vld [vmem:[%s439 + $0xc0] sm:$0xff]
        %v467 = vld [vmem:[%s439 + $0xc8] sm:$0xff]
        %v468 = vld [vmem:[%s439 + $0xd0] sm:$0xff]
        %v469 = vld [vmem:[%s439 + $0xd8] sm:$0xff]
        %v470 = vld [vmem:[%s439 + $0xe0] sm:$0xff]
        %v471 = vld [vmem:[%s439 + $0xe8] sm:$0xff]
        %v472 = vld [vmem:[%s439 + $0xf0] sm:$0xff]
        %v473 = vld [vmem:[%s439 + $0xf8] sm:$0xff]
        %v474 = vpack.c.bf16 %v443, %v442
        %v475 = vpack.c.bf16 %v445, %v444
        %v476 = vpack.c.bf16 %v447, %v446
        %v477 = vpack.c.bf16 %v449, %v448
        %v478 = vpack.c.bf16 %v451, %v450
        %v479 = vpack.c.bf16 %v453, %v452
        %v480 = vpack.c.bf16 %v455, %v454
        %v481 = vpack.c.bf16 %v457, %v456
        %v482 = vpack.c.bf16 %v459, %v458
        %v483 = vpack.c.bf16 %v461, %v460
        %v484 = vpack.c.bf16 %v463, %v462
        %v485 = vpack.c.bf16 %v465, %v464
        %v486 = vpack.c.bf16 %v467, %v466
        %v487 = vpack.c.bf16 %v469, %v468
        %v488 = vpack.c.bf16 %v471, %v470
        %v489 = vpack.c.bf16 %v473, %v472
        %v490 = vld [vmem:[%s1] sm:$0xff]
        %v491 = vld [vmem:[%s1 + $0x8] sm:$0xff]
        %v492 = vld [vmem:[%s1 + $0x10] sm:$0xff]
        %v493 = vld [vmem:[%s1 + $0x18] sm:$0xff]
        %v498 = vunpack.c.l.b16 %v490
        %v499 = vunpack.c.h.b16 %v490
        %v500 = vunpack.c.l.b16 %v491
        %v501 = vunpack.c.h.b16 %v491
        %v502 = vunpack.c.l.b16 %v492
        %v503 = vunpack.c.h.b16 %v492
        %v504 = vunpack.c.l.b16 %v493
        %v505 = vunpack.c.h.b16 %v493
        %v506 = vpack.c.b16 %v500, %v498
        %v507 = vpack.c.b16 %v501, %v499
        %v508 = vpack.c.b16 %v504, %v502
        %v509 = vpack.c.b16 %v505, %v503
        %vm514 = vcmask 261120
        %v516 = vsel %vm514, %v474, 0
        %v519 = vsel %vm514, %v475, 0
        %v522 = vsel %vm514, %v476, 0
        %v525 = vsel %vm514, %v477, 0
        %v528 = vsel %vm514, %v478, 0
        %v531 = vsel %vm514, %v479, 0
        %v534 = vsel %vm514, %v480, 0
        %v537 = vsel %vm514, %v481, 0
        %v540 = vsel %vm514, %v482, 0
        %v543 = vsel %vm514, %v483, 0
        %v546 = vsel %vm514, %v484, 0
        %v549 = vsel %vm514, %v485, 0
        %v552 = vsel %vm514, %v486, 0
        %v555 = vsel %vm514, %v487, 0
        %v558 = vsel %vm514, %v488, 0
        %v561 = vsel %vm514, %v489, 0
        %563 = vmatprep.subr.bf16.mxu0 0
        %564 = vmatpush1.bf16.msra.mxu0 0
        %565 = vmatprep.subr.bf16.mxu0 0
        %566 = vmatpush1.bf16.msra.mxu0 0
        %567 = vmatprep.subr.bf16.mxu0 0
        %568 = vmatpush1.bf16.msra.mxu0 0
        %569 = vmatprep.subr.bf16.mxu0 0
        %570 = vmatpush1.bf16.msra.mxu0 0
        %571 = vmatprep.subr.bf16.mxu0 0
        %572 = vmatpush1.bf16.msra.mxu0 0
        %573 = vmatprep.subr.bf16.mxu0 0
        %574 = vmatpush1.bf16.msra.mxu0 0
        %575 = vmatprep.subr.bf16.mxu0 %v509
        %576 = vmatpush1.bf16.msra.mxu0 %v508
        %577 = vmatprep.subr.bf16.mxu0 %v507
        %578 = vmatpush1.bf16.msra.mxu0 %v506
        %579 = vmatprep.subr.bf16.mxu0 0
        %580 = vmatpush2.bf16.msra.mxu0 0
        %581 = vmatprep.subr.bf16.mxu0 0
        %582 = vmatpush2.bf16.msra.mxu0 0
        %583 = vmatprep.subr.bf16.mxu0 0
        %584 = vmatpush2.bf16.msra.mxu0 0
        %585 = vmatprep.subr.bf16.mxu0 0
        %586 = vmatpush2.bf16.msra.mxu0 0
        %587 = vmatprep.subr.bf16.mxu0 0
        %588 = vmatpush2.bf16.msra.mxu0 0
        %589 = vmatprep.subr.bf16.mxu0 0
        %590 = vmatpush2.bf16.msra.mxu0 0
        %591 = vmatprep.subr.bf16.mxu0 0
        %592 = vmatpush2.bf16.msra.mxu0 0
        %593 = vmatprep.subr.bf16.mxu0 0
        %594 = vmatpush2.bf16.msra.mxu0 0
        %595 = vmatprep.mubr.bf16.mxu0 0
        %596 = vmatmul.mubr.bf16.gmra.mxu0 %v516
        %v597 = vpop.f32.mrf.mxu0
        %v598 = vadd.f32 0.0, %v597
        %v599 = vpop.f32.mrf.mxu0
        %v600 = vadd.f32 0.0, %v599
        %v601 = vpop.f32.mrf.mxu0
        %v602 = vadd.f32 0.0, %v601
        %v603 = vpop.f32.mrf.mxu0
        %v604 = vadd.f32 0.0, %v603
        %605 = vmatprep.mubr.bf16.mxu0 0
        %606 = vmatmul.mubr.bf16.gmra.mxu0 %v519
        %v607 = vpop.f32.mrf.mxu0
        %v608 = vadd.f32 0.0, %v607
        %v609 = vpop.f32.mrf.mxu0
        %v610 = vadd.f32 0.0, %v609
        %v611 = vpop.f32.mrf.mxu0
        %v612 = vadd.f32 0.0, %v611
        %v613 = vpop.f32.mrf.mxu0
        %v614 = vadd.f32 0.0, %v613
        %615 = vmatprep.mubr.bf16.mxu0 0
        %616 = vmatmul.mubr.bf16.gmra.mxu0 %v522
        %v617 = vpop.f32.mrf.mxu0
        %v618 = vadd.f32 0.0, %v617
        %v619 = vpop.f32.mrf.mxu0
        %v620 = vadd.f32 0.0, %v619
        %v621 = vpop.f32.mrf.mxu0
        %v622 = vadd.f32 0.0, %v621
        %v623 = vpop.f32.mrf.mxu0
        %v624 = vadd.f32 0.0, %v623
        %625 = vmatprep.mubr.bf16.mxu0 0
        %626 = vmatmul.mubr.bf16.gmra.mxu0 %v525
        %v627 = vpop.f32.mrf.mxu0
        %v628 = vadd.f32 0.0, %v627
        %v629 = vpop.f32.mrf.mxu0
        %v630 = vadd.f32 0.0, %v629
        %v631 = vpop.f32.mrf.mxu0
        %v632 = vadd.f32 0.0, %v631
        %v633 = vpop.f32.mrf.mxu0
        %v634 = vadd.f32 0.0, %v633
        %635 = vmatprep.mubr.bf16.mxu0 0
        %636 = vmatmul.mubr.bf16.gmra.mxu0 %v528
        %v637 = vpop.f32.mrf.mxu0
        %v638 = vadd.f32 0.0, %v637
        %v639 = vpop.f32.mrf.mxu0
        %v640 = vadd.f32 0.0, %v639
        %v641 = vpop.f32.mrf.mxu0
        %v642 = vadd.f32 0.0, %v641
        %v643 = vpop.f32.mrf.mxu0
        %v644 = vadd.f32 0.0, %v643
        %645 = vmatprep.mubr.bf16.mxu0 0
        %646 = vmatmul.mubr.bf16.gmra.mxu0 %v531
        %v647 = vpop.f32.mrf.mxu0
        %v648 = vadd.f32 0.0, %v647
        %v649 = vpop.f32.mrf.mxu0
        %v650 = vadd.f32 0.0, %v649
        %v651 = vpop.f32.mrf.mxu0
        %v652 = vadd.f32 0.0, %v651
        %v653 = vpop.f32.mrf.mxu0
        %v654 = vadd.f32 0.0, %v653
        %655 = vmatprep.mubr.bf16.mxu0 0
        %656 = vmatmul.mubr.bf16.gmra.mxu0 %v534
        %v657 = vpop.f32.mrf.mxu0
        %v658 = vadd.f32 0.0, %v657
        %v659 = vpop.f32.mrf.mxu0
        %v660 = vadd.f32 0.0, %v659
        %v661 = vpop.f32.mrf.mxu0
        %v662 = vadd.f32 0.0, %v661
        %v663 = vpop.f32.mrf.mxu0
        %v664 = vadd.f32 0.0, %v663
        %665 = vmatprep.mubr.bf16.mxu0 0
        %666 = vmatmul.mubr.bf16.gmra.mxu0 %v537
        %v667 = vpop.f32.mrf.mxu0
        %v668 = vadd.f32 0.0, %v667
        %v669 = vpop.f32.mrf.mxu0
        %v670 = vadd.f32 0.0, %v669
        %v671 = vpop.f32.mrf.mxu0
        %v672 = vadd.f32 0.0, %v671
        %v673 = vpop.f32.mrf.mxu0
        %v674 = vadd.f32 0.0, %v673
        %675 = vmatprep.mubr.bf16.mxu0 0
        %676 = vmatmul.mubr.bf16.gmra.mxu0 %v540
        %v677 = vpop.f32.mrf.mxu0
        %v678 = vadd.f32 0.0, %v677
        %v679 = vpop.f32.mrf.mxu0
        %v680 = vadd.f32 0.0, %v679
        %v681 = vpop.f32.mrf.mxu0
        %v682 = vadd.f32 0.0, %v681
        %v683 = vpop.f32.mrf.mxu0
        %v684 = vadd.f32 0.0, %v683
        %685 = vmatprep.mubr.bf16.mxu0 0
        %686 = vmatmul.mubr.bf16.gmra.mxu0 %v543
        %v687 = vpop.f32.mrf.mxu0
        %v688 = vadd.f32 0.0, %v687
        %v689 = vpop.f32.mrf.mxu0
        %v690 = vadd.f32 0.0, %v689
        %v691 = vpop.f32.mrf.mxu0
        %v692 = vadd.f32 0.0, %v691
        %v693 = vpop.f32.mrf.mxu0
        %v694 = vadd.f32 0.0, %v693
        %695 = vmatprep.mubr.bf16.mxu0 0
        %696 = vmatmul.mubr.bf16.gmra.mxu0 %v546
        %v697 = vpop.f32.mrf.mxu0
        %v698 = vadd.f32 0.0, %v697
        %v699 = vpop.f32.mrf.mxu0
        %v700 = vadd.f32 0.0, %v699
        %v701 = vpop.f32.mrf.mxu0
        %v702 = vadd.f32 0.0, %v701
        %v703 = vpop.f32.mrf.mxu0
        %v704 = vadd.f32 0.0, %v703
        %705 = vmatprep.mubr.bf16.mxu0 0
        %706 = vmatmul.mubr.bf16.gmra.mxu0 %v549
        %v707 = vpop.f32.mrf.mxu0
        %v708 = vadd.f32 0.0, %v707
        %v709 = vpop.f32.mrf.mxu0
        %v710 = vadd.f32 0.0, %v709
        %v711 = vpop.f32.mrf.mxu0
        %v712 = vadd.f32 0.0, %v711
        %v713 = vpop.f32.mrf.mxu0
        %v714 = vadd.f32 0.0, %v713
        %715 = vmatprep.mubr.bf16.mxu0 0
        %716 = vmatmul.mubr.bf16.gmra.mxu0 %v552
        %v717 = vpop.f32.mrf.mxu0
        %v718 = vadd.f32 0.0, %v717
        %v719 = vpop.f32.mrf.mxu0
        %v720 = vadd.f32 0.0, %v719
        %v721 = vpop.f32.mrf.mxu0
        %v722 = vadd.f32 0.0, %v721
        %v723 = vpop.f32.mrf.mxu0
        %v724 = vadd.f32 0.0, %v723
        %725 = vmatprep.mubr.bf16.mxu0 0
        %726 = vmatmul.mubr.bf16.gmra.mxu0 %v555
        %v727 = vpop.f32.mrf.mxu0
        %v728 = vadd.f32 0.0, %v727
        %v729 = vpop.f32.mrf.mxu0
        %v730 = vadd.f32 0.0, %v729
        %v731 = vpop.f32.mrf.mxu0
        %v732 = vadd.f32 0.0, %v731
        %v733 = vpop.f32.mrf.mxu0
        %v734 = vadd.f32 0.0, %v733
        %735 = vmatprep.mubr.bf16.mxu0 0
        %736 = vmatmul.mubr.bf16.gmra.mxu0 %v558
        %v737 = vpop.f32.mrf.mxu0
        %v738 = vadd.f32 0.0, %v737
        %v739 = vpop.f32.mrf.mxu0
        %v740 = vadd.f32 0.0, %v739
        %v741 = vpop.f32.mrf.mxu0
        %v742 = vadd.f32 0.0, %v741
        %v743 = vpop.f32.mrf.mxu0
        %v744 = vadd.f32 0.0, %v743
        %745 = vmatprep.mubr.bf16.mxu0 0
        %746 = vmatmul.mubr.bf16.gmra.mxu0 %v561
        %v747 = vpop.f32.mrf.mxu0
        %v748 = vadd.f32 0.0, %v747
        %v749 = vpop.f32.mrf.mxu0
        %v750 = vadd.f32 0.0, %v749
        %v751 = vpop.f32.mrf.mxu0
        %v752 = vadd.f32 0.0, %v751
        %v753 = vpop.f32.mrf.mxu0
        %v754 = vadd.f32 0.0, %v753
        %755 = vdwg.mxu0
        %s756 = scalar_lea.vmem %s1, 32
        %v757 = vld [vmem:[%s756] sm:$0xff]
        %v758 = vld [vmem:[%s756 + $0x8] sm:$0xff]
        %v759 = vld [vmem:[%s756 + $0x10] sm:$0xff]
        %v760 = vld [vmem:[%s756 + $0x18] sm:$0xff]
        %v765 = vunpack.c.l.b16 %v757
        %v766 = vunpack.c.h.b16 %v757
        %v767 = vunpack.c.l.b16 %v758
        %v768 = vunpack.c.h.b16 %v758
        %v769 = vunpack.c.l.b16 %v759
        %v770 = vunpack.c.h.b16 %v759
        %v771 = vunpack.c.l.b16 %v760
        %v772 = vunpack.c.h.b16 %v760
        %v773 = vpack.c.b16 %v767, %v765
        %v774 = vpack.c.b16 %v768, %v766
        %v775 = vpack.c.b16 %v771, %v769
        %v776 = vpack.c.b16 %v772, %v770
        %781 = vmatprep.subr.bf16.mxu0 0
        %782 = vmatpush1.bf16.msra.mxu0 0
        %783 = vmatprep.subr.bf16.mxu0 0
        %784 = vmatpush1.bf16.msra.mxu0 0
        %785 = vmatprep.subr.bf16.mxu0 0
        %786 = vmatpush1.bf16.msra.mxu0 0
        %787 = vmatprep.subr.bf16.mxu0 0
        %788 = vmatpush1.bf16.msra.mxu0 0
        %789 = vmatprep.subr.bf16.mxu0 0
        %790 = vmatpush1.bf16.msra.mxu0 0
        %791 = vmatprep.subr.bf16.mxu0 0
        %792 = vmatpush1.bf16.msra.mxu0 0
        %793 = vmatprep.subr.bf16.mxu0 %v776
        %794 = vmatpush1.bf16.msra.mxu0 %v775
        %795 = vmatprep.subr.bf16.mxu0 %v774
        %796 = vmatpush1.bf16.msra.mxu0 %v773
        %797 = vmatprep.subr.bf16.mxu0 0
        %798 = vmatpush2.bf16.msra.mxu0 0
        %799 = vmatprep.subr.bf16.mxu0 0
        %800 = vmatpush2.bf16.msra.mxu0 0
        %801 = vmatprep.subr.bf16.mxu0 0
        %802 = vmatpush2.bf16.msra.mxu0 0
        %803 = vmatprep.subr.bf16.mxu0 0
        %804 = vmatpush2.bf16.msra.mxu0 0
        %805 = vmatprep.subr.bf16.mxu0 0
        %806 = vmatpush2.bf16.msra.mxu0 0
        %807 = vmatprep.subr.bf16.mxu0 0
        %808 = vmatpush2.bf16.msra.mxu0 0
        %809 = vmatprep.subr.bf16.mxu0 0
        %810 = vmatpush2.bf16.msra.mxu0 0
        %811 = vmatprep.subr.bf16.mxu0 0
        %812 = vmatpush2.bf16.msra.mxu0 0
        %813 = vmatprep.mubr.bf16.mxu0 0
        %814 = vmatmul.mubr.bf16.gmra.mxu0 %v516
        %v815 = vpop.f32.mrf.mxu0
        %v816 = vadd.f32 0.0, %v815
        %v817 = vpop.f32.mrf.mxu0
        %v818 = vadd.f32 0.0, %v817
        %v819 = vpop.f32.mrf.mxu0
        %v820 = vadd.f32 0.0, %v819
        %v821 = vpop.f32.mrf.mxu0
        %v822 = vadd.f32 0.0, %v821
        %823 = vmatprep.mubr.bf16.mxu0 0
        %824 = vmatmul.mubr.bf16.gmra.mxu0 %v519
        %v825 = vpop.f32.mrf.mxu0
        %v826 = vadd.f32 0.0, %v825
        %v827 = vpop.f32.mrf.mxu0
        %v828 = vadd.f32 0.0, %v827
        %v829 = vpop.f32.mrf.mxu0
        %v830 = vadd.f32 0.0, %v829
        %v831 = vpop.f32.mrf.mxu0
        %v832 = vadd.f32 0.0, %v831
        %833 = vmatprep.mubr.bf16.mxu0 0
        %834 = vmatmul.mubr.bf16.gmra.mxu0 %v522
        %v835 = vpop.f32.mrf.mxu0
        %v836 = vadd.f32 0.0, %v835
        %v837 = vpop.f32.mrf.mxu0
        %v838 = vadd.f32 0.0, %v837
        %v839 = vpop.f32.mrf.mxu0
        %v840 = vadd.f32 0.0, %v839
        %v841 = vpop.f32.mrf.mxu0
        %v842 = vadd.f32 0.0, %v841
        %843 = vmatprep.mubr.bf16.mxu0 0
        %844 = vmatmul.mubr.bf16.gmra.mxu0 %v525
        %v845 = vpop.f32.mrf.mxu0
        %v846 = vadd.f32 0.0, %v845
        %v847 = vpop.f32.mrf.mxu0
        %v848 = vadd.f32 0.0, %v847
        %v849 = vpop.f32.mrf.mxu0
        %v850 = vadd.f32 0.0, %v849
        %v851 = vpop.f32.mrf.mxu0
        %v852 = vadd.f32 0.0, %v851
        %853 = vmatprep.mubr.bf16.mxu0 0
        %854 = vmatmul.mubr.bf16.gmra.mxu0 %v528
        %v855 = vpop.f32.mrf.mxu0
        %v856 = vadd.f32 0.0, %v855
        %v857 = vpop.f32.mrf.mxu0
        %v858 = vadd.f32 0.0, %v857
        %v859 = vpop.f32.mrf.mxu0
        %v860 = vadd.f32 0.0, %v859
        %v861 = vpop.f32.mrf.mxu0
        %v862 = vadd.f32 0.0, %v861
        %863 = vmatprep.mubr.bf16.mxu0 0
        %864 = vmatmul.mubr.bf16.gmra.mxu0 %v531
        %v865 = vpop.f32.mrf.mxu0
        %v866 = vadd.f32 0.0, %v865
        %v867 = vpop.f32.mrf.mxu0
        %v868 = vadd.f32 0.0, %v867
        %v869 = vpop.f32.mrf.mxu0
        %v870 = vadd.f32 0.0, %v869
        %v871 = vpop.f32.mrf.mxu0
        %v872 = vadd.f32 0.0, %v871
        %873 = vmatprep.mubr.bf16.mxu0 0
        %874 = vmatmul.mubr.bf16.gmra.mxu0 %v534
        %v875 = vpop.f32.mrf.mxu0
        %v876 = vadd.f32 0.0, %v875
        %v877 = vpop.f32.mrf.mxu0
        %v878 = vadd.f32 0.0, %v877
        %v879 = vpop.f32.mrf.mxu0
        %v880 = vadd.f32 0.0, %v879
        %v881 = vpop.f32.mrf.mxu0
        %v882 = vadd.f32 0.0, %v881
        %883 = vmatprep.mubr.bf16.mxu0 0
        %884 = vmatmul.mubr.bf16.gmra.mxu0 %v537
        %v885 = vpop.f32.mrf.mxu0
        %v886 = vadd.f32 0.0, %v885
        %v887 = vpop.f32.mrf.mxu0
        %v888 = vadd.f32 0.0, %v887
        %v889 = vpop.f32.mrf.mxu0
        %v890 = vadd.f32 0.0, %v889
        %v891 = vpop.f32.mrf.mxu0
        %v892 = vadd.f32 0.0, %v891
        %893 = vmatprep.mubr.bf16.mxu0 0
        %894 = vmatmul.mubr.bf16.gmra.mxu0 %v540
        %v895 = vpop.f32.mrf.mxu0
        %v896 = vadd.f32 0.0, %v895
        %v897 = vpop.f32.mrf.mxu0
        %v898 = vadd.f32 0.0, %v897
        %v899 = vpop.f32.mrf.mxu0
        %v900 = vadd.f32 0.0, %v899
        %v901 = vpop.f32.mrf.mxu0
        %v902 = vadd.f32 0.0, %v901
        %903 = vmatprep.mubr.bf16.mxu0 0
        %904 = vmatmul.mubr.bf16.gmra.mxu0 %v543
        %v905 = vpop.f32.mrf.mxu0
        %v906 = vadd.f32 0.0, %v905
        %v907 = vpop.f32.mrf.mxu0
        %v908 = vadd.f32 0.0, %v907
        %v909 = vpop.f32.mrf.mxu0
        %v910 = vadd.f32 0.0, %v909
        %v911 = vpop.f32.mrf.mxu0
        %v912 = vadd.f32 0.0, %v911
        %913 = vmatprep.mubr.bf16.mxu0 0
        %914 = vmatmul.mubr.bf16.gmra.mxu0 %v546
        %v915 = vpop.f32.mrf.mxu0
        %v916 = vadd.f32 0.0, %v915
        %v917 = vpop.f32.mrf.mxu0
        %v918 = vadd.f32 0.0, %v917
        %v919 = vpop.f32.mrf.mxu0
        %v920 = vadd.f32 0.0, %v919
        %v921 = vpop.f32.mrf.mxu0
        %v922 = vadd.f32 0.0, %v921
        %923 = vmatprep.mubr.bf16.mxu0 0
        %924 = vmatmul.mubr.bf16.gmra.mxu0 %v549
        %v925 = vpop.f32.mrf.mxu0
        %v926 = vadd.f32 0.0, %v925
        %v927 = vpop.f32.mrf.mxu0
        %v928 = vadd.f32 0.0, %v927
        %v929 = vpop.f32.mrf.mxu0
        %v930 = vadd.f32 0.0, %v929
        %v931 = vpop.f32.mrf.mxu0
        %v932 = vadd.f32 0.0, %v931
        %933 = vmatprep.mubr.bf16.mxu0 0
        %934 = vmatmul.mubr.bf16.gmra.mxu0 %v552
        %v935 = vpop.f32.mrf.mxu0
        %v936 = vadd.f32 0.0, %v935
        %v937 = vpop.f32.mrf.mxu0
        %v938 = vadd.f32 0.0, %v937
        %v939 = vpop.f32.mrf.mxu0
        %v940 = vadd.f32 0.0, %v939
        %v941 = vpop.f32.mrf.mxu0
        %v942 = vadd.f32 0.0, %v941
        %943 = vmatprep.mubr.bf16.mxu0 0
        %944 = vmatmul.mubr.bf16.gmra.mxu0 %v555
        %v945 = vpop.f32.mrf.mxu0
        %v946 = vadd.f32 0.0, %v945
        %v947 = vpop.f32.mrf.mxu0
        %v948 = vadd.f32 0.0, %v947
        %v949 = vpop.f32.mrf.mxu0
        %v950 = vadd.f32 0.0, %v949
        %v951 = vpop.f32.mrf.mxu0
        %v952 = vadd.f32 0.0, %v951
        %953 = vmatprep.mubr.bf16.mxu0 0
        %954 = vmatmul.mubr.bf16.gmra.mxu0 %v558
        %v955 = vpop.f32.mrf.mxu0
        %v956 = vadd.f32 0.0, %v955
        %v957 = vpop.f32.mrf.mxu0
        %v958 = vadd.f32 0.0, %v957
        %v959 = vpop.f32.mrf.mxu0
        %v960 = vadd.f32 0.0, %v959
        %v961 = vpop.f32.mrf.mxu0
        %v962 = vadd.f32 0.0, %v961
        %963 = vmatprep.mubr.bf16.mxu0 0
        %964 = vmatmul.mubr.bf16.gmra.mxu0 %v561
        %v965 = vpop.f32.mrf.mxu0
        %v966 = vadd.f32 0.0, %v965
        %v967 = vpop.f32.mrf.mxu0
        %v968 = vadd.f32 0.0, %v967
        %v969 = vpop.f32.mrf.mxu0
        %v970 = vadd.f32 0.0, %v969
        %v971 = vpop.f32.mrf.mxu0
        %v972 = vadd.f32 0.0, %v971
        %973 = vdwg.mxu0
        %vm1038 = vcmask 1046528
        %v1039 = vrot.slane %v816, 1
        %v1040 = vrot.slane %v820, 1
        %v1041 = vsel %vm1038, %v1039, %v1040
        %v1042 = vrot.slane %v818, 1
        %v1043 = vrot.slane %v822, 1
        %v1044 = vsel %vm1038, %v1042, %v1043
        %v1045 = vrot.slane %v826, 1
        %v1046 = vsel %vm1038, %v1040, %v1045
        %v1047 = vrot.slane %v828, 1
        %v1048 = vsel %vm1038, %v1043, %v1047
        %v1049 = vrot.slane %v830, 1
        %v1050 = vsel %vm1038, %v1045, %v1049
        %v1051 = vrot.slane %v832, 1
        %v1052 = vsel %vm1038, %v1047, %v1051
        %v1053 = vrot.slane %v836, 1
        %v1054 = vsel %vm1038, %v1049, %v1053
        %v1055 = vrot.slane %v838, 1
        %v1056 = vsel %vm1038, %v1051, %v1055
        %v1057 = vrot.slane %v840, 1
        %v1058 = vsel %vm1038, %v1053, %v1057
        %v1059 = vrot.slane %v842, 1
        %v1060 = vsel %vm1038, %v1055, %v1059
        %v1061 = vrot.slane %v846, 1
        %v1062 = vsel %vm1038, %v1057, %v1061
        %v1063 = vrot.slane %v848, 1
        %v1064 = vsel %vm1038, %v1059, %v1063
        %v1065 = vrot.slane %v850, 1
        %v1066 = vsel %vm1038, %v1061, %v1065
        %v1067 = vrot.slane %v852, 1
        %v1068 = vsel %vm1038, %v1063, %v1067
        %v1069 = vrot.slane %v856, 1
        %v1070 = vsel %vm1038, %v1065, %v1069
        %v1071 = vrot.slane %v858, 1
        %v1072 = vsel %vm1038, %v1067, %v1071
        %v1073 = vrot.slane %v860, 1
        %v1074 = vsel %vm1038, %v1069, %v1073
        %v1075 = vrot.slane %v862, 1
        %v1076 = vsel %vm1038, %v1071, %v1075
        %v1077 = vrot.slane %v866, 1
        %v1078 = vsel %vm1038, %v1073, %v1077
        %v1079 = vrot.slane %v868, 1
        %v1080 = vsel %vm1038, %v1075, %v1079
        %v1081 = vrot.slane %v870, 1
        %v1082 = vsel %vm1038, %v1077, %v1081
        %v1083 = vrot.slane %v872, 1
        %v1084 = vsel %vm1038, %v1079, %v1083
        %v1085 = vrot.slane %v876, 1
        %v1086 = vsel %vm1038, %v1081, %v1085
        %v1087 = vrot.slane %v878, 1
        %v1088 = vsel %vm1038, %v1083, %v1087
        %v1089 = vrot.slane %v880, 1
        %v1090 = vsel %vm1038, %v1085, %v1089
        %v1091 = vrot.slane %v882, 1
        %v1092 = vsel %vm1038, %v1087, %v1091
        %v1093 = vrot.slane %v886, 1
        %v1094 = vsel %vm1038, %v1089, %v1093
        %v1095 = vrot.slane %v888, 1
        %v1096 = vsel %vm1038, %v1091, %v1095
        %v1097 = vrot.slane %v890, 1
        %v1098 = vsel %vm1038, %v1093, %v1097
        %v1099 = vrot.slane %v892, 1
        %v1100 = vsel %vm1038, %v1095, %v1099
        %v1101 = vrot.slane %v896, 1
        %v1102 = vsel %vm1038, %v1097, %v1101
        %v1103 = vrot.slane %v898, 1
        %v1104 = vsel %vm1038, %v1099, %v1103
        %v1105 = vrot.slane %v900, 1
        %v1106 = vsel %vm1038, %v1101, %v1105
        %v1107 = vrot.slane %v902, 1
        %v1108 = vsel %vm1038, %v1103, %v1107
        %v1109 = vrot.slane %v906, 1
        %v1110 = vsel %vm1038, %v1105, %v1109
        %v1111 = vrot.slane %v908, 1
        %v1112 = vsel %vm1038, %v1107, %v1111
        %v1113 = vrot.slane %v910, 1
        %v1114 = vsel %vm1038, %v1109, %v1113
        %v1115 = vrot.slane %v912, 1
        %v1116 = vsel %vm1038, %v1111, %v1115
        %v1117 = vrot.slane %v916, 1
        %v1118 = vsel %vm1038, %v1113, %v1117
        %v1119 = vrot.slane %v918, 1
        %v1120 = vsel %vm1038, %v1115, %v1119
        %v1121 = vrot.slane %v920, 1
        %v1122 = vsel %vm1038, %v1117, %v1121
        %v1123 = vrot.slane %v922, 1
        %v1124 = vsel %vm1038, %v1119, %v1123
        %v1125 = vrot.slane %v926, 1
        %v1126 = vsel %vm1038, %v1121, %v1125
        %v1127 = vrot.slane %v928, 1
        %v1128 = vsel %vm1038, %v1123, %v1127
        %v1129 = vrot.slane %v930, 1
        %v1130 = vsel %vm1038, %v1125, %v1129
        %v1131 = vrot.slane %v932, 1
        %v1132 = vsel %vm1038, %v1127, %v1131
        %v1133 = vrot.slane %v936, 1
        %v1134 = vsel %vm1038, %v1129, %v1133
        %v1135 = vrot.slane %v938, 1
        %v1136 = vsel %vm1038, %v1131, %v1135
        %v1137 = vrot.slane %v940, 1
        %v1138 = vsel %vm1038, %v1133, %v1137
        %v1139 = vrot.slane %v942, 1
        %v1140 = vsel %vm1038, %v1135, %v1139
        %v1141 = vrot.slane %v946, 1
        %v1142 = vsel %vm1038, %v1137, %v1141
        %v1143 = vrot.slane %v948, 1
        %v1144 = vsel %vm1038, %v1139, %v1143
        %v1145 = vrot.slane %v950, 1
        %v1146 = vsel %vm1038, %v1141, %v1145
        %v1147 = vrot.slane %v952, 1
        %v1148 = vsel %vm1038, %v1143, %v1147
        %v1149 = vrot.slane %v956, 1
        %v1150 = vsel %vm1038, %v1145, %v1149
        %v1151 = vrot.slane %v958, 1
        %v1152 = vsel %vm1038, %v1147, %v1151
        %v1153 = vrot.slane %v960, 1
        %v1154 = vsel %vm1038, %v1149, %v1153
        %v1155 = vrot.slane %v962, 1
        %v1156 = vsel %vm1038, %v1151, %v1155
        %v1157 = vrot.slane %v966, 1
        %v1158 = vsel %vm1038, %v1153, %v1157
        %v1159 = vrot.slane %v968, 1
        %v1160 = vsel %vm1038, %v1155, %v1159
        %v1161 = vrot.slane %v970, 1
        %v1162 = vsel %vm1038, %v1157, %v1161
        %v1163 = vrot.slane %v972, 1
        %v1164 = vsel %vm1038, %v1159, %v1163
        %v1229 = vadd.f32 %v598, %v1041
        %v1230 = vadd.f32 %v600, %v1044
        %v1231 = vadd.f32 %v602, %v1046
        %v1232 = vadd.f32 %v604, %v1048
        %v1233 = vadd.f32 %v608, %v1050
        %v1234 = vadd.f32 %v610, %v1052
        %v1235 = vadd.f32 %v612, %v1054
        %v1236 = vadd.f32 %v614, %v1056
        %v1237 = vadd.f32 %v618, %v1058
        %v1238 = vadd.f32 %v620, %v1060
        %v1239 = vadd.f32 %v622, %v1062
        %v1240 = vadd.f32 %v624, %v1064
        %v1241 = vadd.f32 %v628, %v1066
        %v1242 = vadd.f32 %v630, %v1068
        %v1243 = vadd.f32 %v632, %v1070
        %v1244 = vadd.f32 %v634, %v1072
        %v1245 = vadd.f32 %v638, %v1074
        %v1246 = vadd.f32 %v640, %v1076
        %v1247 = vadd.f32 %v642, %v1078
        %v1248 = vadd.f32 %v644, %v1080
        %v1249 = vadd.f32 %v648, %v1082
        %v1250 = vadd.f32 %v650, %v1084
        %v1251 = vadd.f32 %v652, %v1086
        %v1252 = vadd.f32 %v654, %v1088
        %v1253 = vadd.f32 %v658, %v1090
        %v1254 = vadd.f32 %v660, %v1092
        %v1255 = vadd.f32 %v662, %v1094
        %v1256 = vadd.f32 %v664, %v1096
        %v1257 = vadd.f32 %v668, %v1098
        %v1258 = vadd.f32 %v670, %v1100
        %v1259 = vadd.f32 %v672, %v1102
        %v1260 = vadd.f32 %v674, %v1104
        %v1261 = vadd.f32 %v678, %v1106
        %v1262 = vadd.f32 %v680, %v1108
        %v1263 = vadd.f32 %v682, %v1110
        %v1264 = vadd.f32 %v684, %v1112
        %v1265 = vadd.f32 %v688, %v1114
        %v1266 = vadd.f32 %v690, %v1116
        %v1267 = vadd.f32 %v692, %v1118
        %v1268 = vadd.f32 %v694, %v1120
        %v1269 = vadd.f32 %v698, %v1122
        %v1270 = vadd.f32 %v700, %v1124
        %v1271 = vadd.f32 %v702, %v1126
        %v1272 = vadd.f32 %v704, %v1128
        %v1273 = vadd.f32 %v708, %v1130
        %v1274 = vadd.f32 %v710, %v1132
        %v1275 = vadd.f32 %v712, %v1134
        %v1276 = vadd.f32 %v714, %v1136
        %v1277 = vadd.f32 %v718, %v1138
        %v1278 = vadd.f32 %v720, %v1140
        %v1279 = vadd.f32 %v722, %v1142
        %v1280 = vadd.f32 %v724, %v1144
        %v1281 = vadd.f32 %v728, %v1146
        %v1282 = vadd.f32 %v730, %v1148
        %v1283 = vadd.f32 %v732, %v1150
        %v1284 = vadd.f32 %v734, %v1152
        %v1285 = vadd.f32 %v738, %v1154
        %v1286 = vadd.f32 %v740, %v1156
        %v1287 = vadd.f32 %v742, %v1158
        %v1288 = vadd.f32 %v744, %v1160
        %v1289 = vadd.f32 %v748, %v1162
        %v1290 = vadd.f32 %v750, %v1164
        %v1291 = vadd.f32 %v752, %v1161
        %v1292 = vadd.f32 %v754, %v1163
        %s1293 = scalar_lea.vmem %s1, 64
        %v1294 = vld [vmem:[%s1293] sm:$0xff]
        %v1295 = vld [vmem:[%s1293 + $0x8] sm:$0xff]
        %v1296 = vld [vmem:[%s1293 + $0x10] sm:$0xff]
        %v1297 = vld [vmem:[%s1293 + $0x18] sm:$0xff]
        %v1302 = vunpack.c.l.b16 %v1294
        %v1303 = vunpack.c.h.b16 %v1294
        %v1304 = vunpack.c.l.b16 %v1295
        %v1305 = vunpack.c.h.b16 %v1295
        %v1306 = vunpack.c.l.b16 %v1296
        %v1307 = vunpack.c.h.b16 %v1296
        %v1308 = vunpack.c.l.b16 %v1297
        %v1309 = vunpack.c.h.b16 %v1297
        %v1310 = vpack.c.b16 %v1304, %v1302
        %v1311 = vpack.c.b16 %v1305, %v1303
        %v1312 = vpack.c.b16 %v1308, %v1306
        %v1313 = vpack.c.b16 %v1309, %v1307
        %1318 = vmatprep.subr.bf16.mxu0 0
        %1319 = vmatpush1.bf16.msra.mxu0 0
        %1320 = vmatprep.subr.bf16.mxu0 0
        %1321 = vmatpush1.bf16.msra.mxu0 0
        %1322 = vmatprep.subr.bf16.mxu0 0
        %1323 = vmatpush1.bf16.msra.mxu0 0
        %1324 = vmatprep.subr.bf16.mxu0 0
        %1325 = vmatpush1.bf16.msra.mxu0 0
        %1326 = vmatprep.subr.bf16.mxu0 0
        %1327 = vmatpush1.bf16.msra.mxu0 0
        %1328 = vmatprep.subr.bf16.mxu0 0
        %1329 = vmatpush1.bf16.msra.mxu0 0
        %1330 = vmatprep.subr.bf16.mxu0 %v1313
        %1331 = vmatpush1.bf16.msra.mxu0 %v1312
        %1332 = vmatprep.subr.bf16.mxu0 %v1311
        %1333 = vmatpush1.bf16.msra.mxu0 %v1310
        %1334 = vmatprep.subr.bf16.mxu0 0
        %1335 = vmatpush2.bf16.msra.mxu0 0
        %1336 = vmatprep.subr.bf16.mxu0 0
        %1337 = vmatpush2.bf16.msra.mxu0 0
        %1338 = vmatprep.subr.bf16.mxu0 0
        %1339 = vmatpush2.bf16.msra.mxu0 0
        %1340 = vmatprep.subr.bf16.mxu0 0
        %1341 = vmatpush2.bf16.msra.mxu0 0
        %1342 = vmatprep.subr.bf16.mxu0 0
        %1343 = vmatpush2.bf16.msra.mxu0 0
        %1344 = vmatprep.subr.bf16.mxu0 0
        %1345 = vmatpush2.bf16.msra.mxu0 0
        %1346 = vmatprep.subr.bf16.mxu0 0
        %1347 = vmatpush2.bf16.msra.mxu0 0
        %1348 = vmatprep.subr.bf16.mxu0 0
        %1349 = vmatpush2.bf16.msra.mxu0 0
        %1350 = vmatprep.mubr.bf16.mxu0 0
        %1351 = vmatmul.mubr.bf16.gmra.mxu0 %v516
        %v1352 = vpop.f32.mrf.mxu0
        %v1353 = vadd.f32 0.0, %v1352
        %v1354 = vpop.f32.mrf.mxu0
        %v1355 = vadd.f32 0.0, %v1354
        %v1356 = vpop.f32.mrf.mxu0
        %v1357 = vadd.f32 0.0, %v1356
        %v1358 = vpop.f32.mrf.mxu0
        %v1359 = vadd.f32 0.0, %v1358
        %1360 = vmatprep.mubr.bf16.mxu0 0
        %1361 = vmatmul.mubr.bf16.gmra.mxu0 %v519
        %v1362 = vpop.f32.mrf.mxu0
        %v1363 = vadd.f32 0.0, %v1362
        %v1364 = vpop.f32.mrf.mxu0
        %v1365 = vadd.f32 0.0, %v1364
        %v1366 = vpop.f32.mrf.mxu0
        %v1367 = vadd.f32 0.0, %v1366
        %v1368 = vpop.f32.mrf.mxu0
        %v1369 = vadd.f32 0.0, %v1368
        %1370 = vmatprep.mubr.bf16.mxu0 0
        %1371 = vmatmul.mubr.bf16.gmra.mxu0 %v522
        %v1372 = vpop.f32.mrf.mxu0
        %v1373 = vadd.f32 0.0, %v1372
        %v1374 = vpop.f32.mrf.mxu0
        %v1375 = vadd.f32 0.0, %v1374
        %v1376 = vpop.f32.mrf.mxu0
        %v1377 = vadd.f32 0.0, %v1376
        %v1378 = vpop.f32.mrf.mxu0
        %v1379 = vadd.f32 0.0, %v1378
        %1380 = vmatprep.mubr.bf16.mxu0 0
        %1381 = vmatmul.mubr.bf16.gmra.mxu0 %v525
        %v1382 = vpop.f32.mrf.mxu0
        %v1383 = vadd.f32 0.0, %v1382
        %v1384 = vpop.f32.mrf.mxu0
        %v1385 = vadd.f32 0.0, %v1384
        %v1386 = vpop.f32.mrf.mxu0
        %v1387 = vadd.f32 0.0, %v1386
        %v1388 = vpop.f32.mrf.mxu0
        %v1389 = vadd.f32 0.0, %v1388
        %1390 = vmatprep.mubr.bf16.mxu0 0
        %1391 = vmatmul.mubr.bf16.gmra.mxu0 %v528
        %v1392 = vpop.f32.mrf.mxu0
        %v1393 = vadd.f32 0.0, %v1392
        %v1394 = vpop.f32.mrf.mxu0
        %v1395 = vadd.f32 0.0, %v1394
        %v1396 = vpop.f32.mrf.mxu0
        %v1397 = vadd.f32 0.0, %v1396
        %v1398 = vpop.f32.mrf.mxu0
        %v1399 = vadd.f32 0.0, %v1398
        %1400 = vmatprep.mubr.bf16.mxu0 0
        %1401 = vmatmul.mubr.bf16.gmra.mxu0 %v531
        %v1402 = vpop.f32.mrf.mxu0
        %v1403 = vadd.f32 0.0, %v1402
        %v1404 = vpop.f32.mrf.mxu0
        %v1405 = vadd.f32 0.0, %v1404
        %v1406 = vpop.f32.mrf.mxu0
        %v1407 = vadd.f32 0.0, %v1406
        %v1408 = vpop.f32.mrf.mxu0
        %v1409 = vadd.f32 0.0, %v1408
        %1410 = vmatprep.mubr.bf16.mxu0 0
        %1411 = vmatmul.mubr.bf16.gmra.mxu0 %v534
        %v1412 = vpop.f32.mrf.mxu0
        %v1413 = vadd.f32 0.0, %v1412
        %v1414 = vpop.f32.mrf.mxu0
        %v1415 = vadd.f32 0.0, %v1414
        %v1416 = vpop.f32.mrf.mxu0
        %v1417 = vadd.f32 0.0, %v1416
        %v1418 = vpop.f32.mrf.mxu0
        %v1419 = vadd.f32 0.0, %v1418
        %1420 = vmatprep.mubr.bf16.mxu0 0
        %1421 = vmatmul.mubr.bf16.gmra.mxu0 %v537
        %v1422 = vpop.f32.mrf.mxu0
        %v1423 = vadd.f32 0.0, %v1422
        %v1424 = vpop.f32.mrf.mxu0
        %v1425 = vadd.f32 0.0, %v1424
        %v1426 = vpop.f32.mrf.mxu0
        %v1427 = vadd.f32 0.0, %v1426
        %v1428 = vpop.f32.mrf.mxu0
        %v1429 = vadd.f32 0.0, %v1428
        %1430 = vmatprep.mubr.bf16.mxu0 0
        %1431 = vmatmul.mubr.bf16.gmra.mxu0 %v540
        %v1432 = vpop.f32.mrf.mxu0
        %v1433 = vadd.f32 0.0, %v1432
        %v1434 = vpop.f32.mrf.mxu0
        %v1435 = vadd.f32 0.0, %v1434
        %v1436 = vpop.f32.mrf.mxu0
        %v1437 = vadd.f32 0.0, %v1436
        %v1438 = vpop.f32.mrf.mxu0
        %v1439 = vadd.f32 0.0, %v1438
        %1440 = vmatprep.mubr.bf16.mxu0 0
        %1441 = vmatmul.mubr.bf16.gmra.mxu0 %v543
        %v1442 = vpop.f32.mrf.mxu0
        %v1443 = vadd.f32 0.0, %v1442
        %v1444 = vpop.f32.mrf.mxu0
        %v1445 = vadd.f32 0.0, %v1444
        %v1446 = vpop.f32.mrf.mxu0
        %v1447 = vadd.f32 0.0, %v1446
        %v1448 = vpop.f32.mrf.mxu0
        %v1449 = vadd.f32 0.0, %v1448
        %1450 = vmatprep.mubr.bf16.mxu0 0
        %1451 = vmatmul.mubr.bf16.gmra.mxu0 %v546
        %v1452 = vpop.f32.mrf.mxu0
        %v1453 = vadd.f32 0.0, %v1452
        %v1454 = vpop.f32.mrf.mxu0
        %v1455 = vadd.f32 0.0, %v1454
        %v1456 = vpop.f32.mrf.mxu0
        %v1457 = vadd.f32 0.0, %v1456
        %v1458 = vpop.f32.mrf.mxu0
        %v1459 = vadd.f32 0.0, %v1458
        %1460 = vmatprep.mubr.bf16.mxu0 0
        %1461 = vmatmul.mubr.bf16.gmra.mxu0 %v549
        %v1462 = vpop.f32.mrf.mxu0
        %v1463 = vadd.f32 0.0, %v1462
        %v1464 = vpop.f32.mrf.mxu0
        %v1465 = vadd.f32 0.0, %v1464
        %v1466 = vpop.f32.mrf.mxu0
        %v1467 = vadd.f32 0.0, %v1466
        %v1468 = vpop.f32.mrf.mxu0
        %v1469 = vadd.f32 0.0, %v1468
        %1470 = vmatprep.mubr.bf16.mxu0 0
        %1471 = vmatmul.mubr.bf16.gmra.mxu0 %v552
        %v1472 = vpop.f32.mrf.mxu0
        %v1473 = vadd.f32 0.0, %v1472
        %v1474 = vpop.f32.mrf.mxu0
        %v1475 = vadd.f32 0.0, %v1474
        %v1476 = vpop.f32.mrf.mxu0
        %v1477 = vadd.f32 0.0, %v1476
        %v1478 = vpop.f32.mrf.mxu0
        %v1479 = vadd.f32 0.0, %v1478
        %1480 = vmatprep.mubr.bf16.mxu0 0
        %1481 = vmatmul.mubr.bf16.gmra.mxu0 %v555
        %v1482 = vpop.f32.mrf.mxu0
        %v1483 = vadd.f32 0.0, %v1482
        %v1484 = vpop.f32.mrf.mxu0
        %v1485 = vadd.f32 0.0, %v1484
        %v1486 = vpop.f32.mrf.mxu0
        %v1487 = vadd.f32 0.0, %v1486
        %v1488 = vpop.f32.mrf.mxu0
        %v1489 = vadd.f32 0.0, %v1488
        %1490 = vmatprep.mubr.bf16.mxu0 0
        %1491 = vmatmul.mubr.bf16.gmra.mxu0 %v558
        %v1492 = vpop.f32.mrf.mxu0
        %v1493 = vadd.f32 0.0, %v1492
        %v1494 = vpop.f32.mrf.mxu0
        %v1495 = vadd.f32 0.0, %v1494
        %v1496 = vpop.f32.mrf.mxu0
        %v1497 = vadd.f32 0.0, %v1496
        %v1498 = vpop.f32.mrf.mxu0
        %v1499 = vadd.f32 0.0, %v1498
        %1500 = vmatprep.mubr.bf16.mxu0 0
        %1501 = vmatmul.mubr.bf16.gmra.mxu0 %v561
        %v1502 = vpop.f32.mrf.mxu0
        %v1503 = vadd.f32 0.0, %v1502
        %v1504 = vpop.f32.mrf.mxu0
        %v1505 = vadd.f32 0.0, %v1504
        %v1506 = vpop.f32.mrf.mxu0
        %v1507 = vadd.f32 0.0, %v1506
        %v1508 = vpop.f32.mrf.mxu0
        %v1509 = vadd.f32 0.0, %v1508
        %1510 = vdwg.mxu0
        %vm1575 = vcmask 1045504
        %v1576 = vrot.slane %v1353, 2
        %v1577 = vrot.slane %v1357, 2
        %v1578 = vsel %vm1575, %v1576, %v1577
        %v1579 = vrot.slane %v1355, 2
        %v1580 = vrot.slane %v1359, 2
        %v1581 = vsel %vm1575, %v1579, %v1580
        %v1582 = vrot.slane %v1363, 2
        %v1583 = vsel %vm1575, %v1577, %v1582
        %v1584 = vrot.slane %v1365, 2
        %v1585 = vsel %vm1575, %v1580, %v1584
        %v1586 = vrot.slane %v1367, 2
        %v1587 = vsel %vm1575, %v1582, %v1586
        %v1588 = vrot.slane %v1369, 2
        %v1589 = vsel %vm1575, %v1584, %v1588
        %v1590 = vrot.slane %v1373, 2
        %v1591 = vsel %vm1575, %v1586, %v1590
        %v1592 = vrot.slane %v1375, 2
        %v1593 = vsel %vm1575, %v1588, %v1592
        %v1594 = vrot.slane %v1377, 2
        %v1595 = vsel %vm1575, %v1590, %v1594
        %v1596 = vrot.slane %v1379, 2
        %v1597 = vsel %vm1575, %v1592, %v1596
        %v1598 = vrot.slane %v1383, 2
        %v1599 = vsel %vm1575, %v1594, %v1598
        %v1600 = vrot.slane %v1385, 2
        %v1601 = vsel %vm1575, %v1596, %v1600
        %v1602 = vrot.slane %v1387, 2
        %v1603 = vsel %vm1575, %v1598, %v1602
        %v1604 = vrot.slane %v1389, 2
        %v1605 = vsel %vm1575, %v1600, %v1604
        %v1606 = vrot.slane %v1393, 2
        %v1607 = vsel %vm1575, %v1602, %v1606
        %v1608 = vrot.slane %v1395, 2
        %v1609 = vsel %vm1575, %v1604, %v1608
        %v1610 = vrot.slane %v1397, 2
        %v1611 = vsel %vm1575, %v1606, %v1610
        %v1612 = vrot.slane %v1399, 2
        %v1613 = vsel %vm1575, %v1608, %v1612
        %v1614 = vrot.slane %v1403, 2
        %v1615 = vsel %vm1575, %v1610, %v1614
        %v1616 = vrot.slane %v1405, 2
        %v1617 = vsel %vm1575, %v1612, %v1616
        %v1618 = vrot.slane %v1407, 2
        %v1619 = vsel %vm1575, %v1614, %v1618
        %v1620 = vrot.slane %v1409, 2
        %v1621 = vsel %vm1575, %v1616, %v1620
        %v1622 = vrot.slane %v1413, 2
        %v1623 = vsel %vm1575, %v1618, %v1622
        %v1624 = vrot.slane %v1415, 2
        %v1625 = vsel %vm1575, %v1620, %v1624
        %v1626 = vrot.slane %v1417, 2
        %v1627 = vsel %vm1575, %v1622, %v1626
        %v1628 = vrot.slane %v1419, 2
        %v1629 = vsel %vm1575, %v1624, %v1628
        %v1630 = vrot.slane %v1423, 2
        %v1631 = vsel %vm1575, %v1626, %v1630
        %v1632 = vrot.slane %v1425, 2
        %v1633 = vsel %vm1575, %v1628, %v1632
        %v1634 = vrot.slane %v1427, 2
        %v1635 = vsel %vm1575, %v1630, %v1634
        %v1636 = vrot.slane %v1429, 2
        %v1637 = vsel %vm1575, %v1632, %v1636
        %v1638 = vrot.slane %v1433, 2
        %v1639 = vsel %vm1575, %v1634, %v1638
        %v1640 = vrot.slane %v1435, 2
        %v1641 = vsel %vm1575, %v1636, %v1640
        %v1642 = vrot.slane %v1437, 2
        %v1643 = vsel %vm1575, %v1638, %v1642
        %v1644 = vrot.slane %v1439, 2
        %v1645 = vsel %vm1575, %v1640, %v1644
        %v1646 = vrot.slane %v1443, 2
        %v1647 = vsel %vm1575, %v1642, %v1646
        %v1648 = vrot.slane %v1445, 2
        %v1649 = vsel %vm1575, %v1644, %v1648
        %v1650 = vrot.slane %v1447, 2
        %v1651 = vsel %vm1575, %v1646, %v1650
        %v1652 = vrot.slane %v1449, 2
        %v1653 = vsel %vm1575, %v1648, %v1652
        %v1654 = vrot.slane %v1453, 2
        %v1655 = vsel %vm1575, %v1650, %v1654
        %v1656 = vrot.slane %v1455, 2
        %v1657 = vsel %vm1575, %v1652, %v1656
        %v1658 = vrot.slane %v1457, 2
        %v1659 = vsel %vm1575, %v1654, %v1658
        %v1660 = vrot.slane %v1459, 2
        %v1661 = vsel %vm1575, %v1656, %v1660
        %v1662 = vrot.slane %v1463, 2
        %v1663 = vsel %vm1575, %v1658, %v1662
        %v1664 = vrot.slane %v1465, 2
        %v1665 = vsel %vm1575, %v1660, %v1664
        %v1666 = vrot.slane %v1467, 2
        %v1667 = vsel %vm1575, %v1662, %v1666
        %v1668 = vrot.slane %v1469, 2
        %v1669 = vsel %vm1575, %v1664, %v1668
        %v1670 = vrot.slane %v1473, 2
        %v1671 = vsel %vm1575, %v1666, %v1670
        %v1672 = vrot.slane %v1475, 2
        %v1673 = vsel %vm1575, %v1668, %v1672
        %v1674 = vrot.slane %v1477, 2
        %v1675 = vsel %vm1575, %v1670, %v1674
        %v1676 = vrot.slane %v1479, 2
        %v1677 = vsel %vm1575, %v1672, %v1676
        %v1678 = vrot.slane %v1483, 2
        %v1679 = vsel %vm1575, %v1674, %v1678
        %v1680 = vrot.slane %v1485, 2
        %v1681 = vsel %vm1575, %v1676, %v1680
        %v1682 = vrot.slane %v1487, 2
        %v1683 = vsel %vm1575, %v1678, %v1682
        %v1684 = vrot.slane %v1489, 2
        %v1685 = vsel %vm1575, %v1680, %v1684
        %v1686 = vrot.slane %v1493, 2
        %v1687 = vsel %vm1575, %v1682, %v1686
        %v1688 = vrot.slane %v1495, 2
        %v1689 = vsel %vm1575, %v1684, %v1688
        %v1690 = vrot.slane %v1497, 2
        %v1691 = vsel %vm1575, %v1686, %v1690
        %v1692 = vrot.slane %v1499, 2
        %v1693 = vsel %vm1575, %v1688, %v1692
        %v1694 = vrot.slane %v1503, 2
        %v1695 = vsel %vm1575, %v1690, %v1694
        %v1696 = vrot.slane %v1505, 2
        %v1697 = vsel %vm1575, %v1692, %v1696
        %v1698 = vrot.slane %v1507, 2
        %v1699 = vsel %vm1575, %v1694, %v1698
        %v1700 = vrot.slane %v1509, 2
        %v1701 = vsel %vm1575, %v1696, %v1700
        %v1766 = vadd.f32 %v1229, %v1578
        %v1767 = vadd.f32 %v1230, %v1581
        %v1768 = vadd.f32 %v1231, %v1583
        %v1769 = vadd.f32 %v1232, %v1585
        %v1770 = vadd.f32 %v1233, %v1587
        %v1771 = vadd.f32 %v1234, %v1589
        %v1772 = vadd.f32 %v1235, %v1591
        %v1773 = vadd.f32 %v1236, %v1593
        %v1774 = vadd.f32 %v1237, %v1595
        %v1775 = vadd.f32 %v1238, %v1597
        %v1776 = vadd.f32 %v1239, %v1599
        %v1777 = vadd.f32 %v1240, %v1601
        %v1778 = vadd.f32 %v1241, %v1603
        %v1779 = vadd.f32 %v1242, %v1605
        %v1780 = vadd.f32 %v1243, %v1607
        %v1781 = vadd.f32 %v1244, %v1609
        %v1782 = vadd.f32 %v1245, %v1611
        %v1783 = vadd.f32 %v1246, %v1613
        %v1784 = vadd.f32 %v1247, %v1615
        %v1785 = vadd.f32 %v1248, %v1617
        %v1786 = vadd.f32 %v1249, %v1619
        %v1787 = vadd.f32 %v1250, %v1621
        %v1788 = vadd.f32 %v1251, %v1623
        %v1789 = vadd.f32 %v1252, %v1625
        %v1790 = vadd.f32 %v1253, %v1627
        %v1791 = vadd.f32 %v1254, %v1629
        %v1792 = vadd.f32 %v1255, %v1631
        %v1793 = vadd.f32 %v1256, %v1633
        %v1794 = vadd.f32 %v1257, %v1635
        %v1795 = vadd.f32 %v1258, %v1637
        %v1796 = vadd.f32 %v1259, %v1639
        %v1797 = vadd.f32 %v1260, %v1641
        %v1798 = vadd.f32 %v1261, %v1643
        %v1799 = vadd.f32 %v1262, %v1645
        %v1800 = vadd.f32 %v1263, %v1647
        %v1801 = vadd.f32 %v1264, %v1649
        %v1802 = vadd.f32 %v1265, %v1651
        %v1803 = vadd.f32 %v1266, %v1653
        %v1804 = vadd.f32 %v1267, %v1655
        %v1805 = vadd.f32 %v1268, %v1657
        %v1806 = vadd.f32 %v1269, %v1659
        %v1807 = vadd.f32 %v1270, %v1661
        %v1808 = vadd.f32 %v1271, %v1663
        %v1809 = vadd.f32 %v1272, %v1665
        %v1810 = vadd.f32 %v1273, %v1667
        %v1811 = vadd.f32 %v1274, %v1669
        %v1812 = vadd.f32 %v1275, %v1671
        %v1813 = vadd.f32 %v1276, %v1673
        %v1814 = vadd.f32 %v1277, %v1675
        %v1815 = vadd.f32 %v1278, %v1677
        %v1816 = vadd.f32 %v1279, %v1679
        %v1817 = vadd.f32 %v1280, %v1681
        %v1818 = vadd.f32 %v1281, %v1683
        %v1819 = vadd.f32 %v1282, %v1685
        %v1820 = vadd.f32 %v1283, %v1687
        %v1821 = vadd.f32 %v1284, %v1689
        %v1822 = vadd.f32 %v1285, %v1691
        %v1823 = vadd.f32 %v1286, %v1693
        %v1824 = vadd.f32 %v1287, %v1695
        %v1825 = vadd.f32 %v1288, %v1697
        %v1826 = vadd.f32 %v1289, %v1699
        %v1827 = vadd.f32 %v1290, %v1701
        %v1828 = vadd.f32 %v1291, %v1698
        %v1829 = vadd.f32 %v1292, %v1700
        %s1830 = scalar_lea.vmem %s1, 96
        %v1831 = vld [vmem:[%s1830] sm:$0xff]
        %v1832 = vld [vmem:[%s1830 + $0x8] sm:$0xff]
        %v1833 = vld [vmem:[%s1830 + $0x10] sm:$0xff]
        %v1834 = vld [vmem:[%s1830 + $0x18] sm:$0xff]
        %v1839 = vunpack.c.l.b16 %v1831
        %v1840 = vunpack.c.h.b16 %v1831
        %v1841 = vunpack.c.l.b16 %v1832
        %v1842 = vunpack.c.h.b16 %v1832
        %v1843 = vunpack.c.l.b16 %v1833
        %v1844 = vunpack.c.h.b16 %v1833
        %v1845 = vunpack.c.l.b16 %v1834
        %v1846 = vunpack.c.h.b16 %v1834
        %v1847 = vpack.c.b16 %v1841, %v1839
        %v1848 = vpack.c.b16 %v1842, %v1840
        %v1849 = vpack.c.b16 %v1845, %v1843
        %v1850 = vpack.c.b16 %v1846, %v1844
        %1855 = vmatprep.subr.bf16.mxu0 0
        %1856 = vmatpush1.bf16.msra.mxu0 0
        %1857 = vmatprep.subr.bf16.mxu0 0
        %1858 = vmatpush1.bf16.msra.mxu0 0
        %1859 = vmatprep.subr.bf16.mxu0 0
        %1860 = vmatpush1.bf16.msra.mxu0 0
        %1861 = vmatprep.subr.bf16.mxu0 0
        %1862 = vmatpush1.bf16.msra.mxu0 0
        %1863 = vmatprep.subr.bf16.mxu0 0
        %1864 = vmatpush1.bf16.msra.mxu0 0
        %1865 = vmatprep.subr.bf16.mxu0 0
        %1866 = vmatpush1.bf16.msra.mxu0 0
        %1867 = vmatprep.subr.bf16.mxu0 %v1850
        %1868 = vmatpush1.bf16.msra.mxu0 %v1849
        %1869 = vmatprep.subr.bf16.mxu0 %v1848
        %1870 = vmatpush1.bf16.msra.mxu0 %v1847
        %1871 = vmatprep.subr.bf16.mxu0 0
        %1872 = vmatpush2.bf16.msra.mxu0 0
        %1873 = vmatprep.subr.bf16.mxu0 0
        %1874 = vmatpush2.bf16.msra.mxu0 0
        %1875 = vmatprep.subr.bf16.mxu0 0
        %1876 = vmatpush2.bf16.msra.mxu0 0
        %1877 = vmatprep.subr.bf16.mxu0 0
        %1878 = vmatpush2.bf16.msra.mxu0 0
        %1879 = vmatprep.subr.bf16.mxu0 0
        %1880 = vmatpush2.bf16.msra.mxu0 0
        %1881 = vmatprep.subr.bf16.mxu0 0
        %1882 = vmatpush2.bf16.msra.mxu0 0
        %1883 = vmatprep.subr.bf16.mxu0 0
        %1884 = vmatpush2.bf16.msra.mxu0 0
        %1885 = vmatprep.subr.bf16.mxu0 0
        %1886 = vmatpush2.bf16.msra.mxu0 0
        %1887 = vmatprep.mubr.bf16.mxu0 0
        %1888 = vmatmul.mubr.bf16.gmra.mxu0 %v516
        %v1889 = vpop.f32.mrf.mxu0
        %v1890 = vadd.f32 0.0, %v1889
        %v1891 = vpop.f32.mrf.mxu0
        %v1892 = vadd.f32 0.0, %v1891
        %v1893 = vpop.f32.mrf.mxu0
        %v1894 = vadd.f32 0.0, %v1893
        %v1895 = vpop.f32.mrf.mxu0
        %v1896 = vadd.f32 0.0, %v1895
        %1897 = vmatprep.mubr.bf16.mxu0 0
        %1898 = vmatmul.mubr.bf16.gmra.mxu0 %v519
        %v1899 = vpop.f32.mrf.mxu0
        %v1900 = vadd.f32 0.0, %v1899
        %v1901 = vpop.f32.mrf.mxu0
        %v1902 = vadd.f32 0.0, %v1901
        %v1903 = vpop.f32.mrf.mxu0
        %v1904 = vadd.f32 0.0, %v1903
        %v1905 = vpop.f32.mrf.mxu0
        %v1906 = vadd.f32 0.0, %v1905
        %1907 = vmatprep.mubr.bf16.mxu0 0
        %1908 = vmatmul.mubr.bf16.gmra.mxu0 %v522
        %v1909 = vpop.f32.mrf.mxu0
        %v1910 = vadd.f32 0.0, %v1909
        %v1911 = vpop.f32.mrf.mxu0
        %v1912 = vadd.f32 0.0, %v1911
        %v1913 = vpop.f32.mrf.mxu0
        %v1914 = vadd.f32 0.0, %v1913
        %v1915 = vpop.f32.mrf.mxu0
        %v1916 = vadd.f32 0.0, %v1915
        %1917 = vmatprep.mubr.bf16.mxu0 0
        %1918 = vmatmul.mubr.bf16.gmra.mxu0 %v525
        %v1919 = vpop.f32.mrf.mxu0
        %v1920 = vadd.f32 0.0, %v1919
        %v1921 = vpop.f32.mrf.mxu0
        %v1922 = vadd.f32 0.0, %v1921
        %v1923 = vpop.f32.mrf.mxu0
        %v1924 = vadd.f32 0.0, %v1923
        %v1925 = vpop.f32.mrf.mxu0
        %v1926 = vadd.f32 0.0, %v1925
        %1927 = vmatprep.mubr.bf16.mxu0 0
        %1928 = vmatmul.mubr.bf16.gmra.mxu0 %v528
        %v1929 = vpop.f32.mrf.mxu0
        %v1930 = vadd.f32 0.0, %v1929
        %v1931 = vpop.f32.mrf.mxu0
        %v1932 = vadd.f32 0.0, %v1931
        %v1933 = vpop.f32.mrf.mxu0
        %v1934 = vadd.f32 0.0, %v1933
        %v1935 = vpop.f32.mrf.mxu0
        %v1936 = vadd.f32 0.0, %v1935
        %1937 = vmatprep.mubr.bf16.mxu0 0
        %1938 = vmatmul.mubr.bf16.gmra.mxu0 %v531
        %v1939 = vpop.f32.mrf.mxu0
        %v1940 = vadd.f32 0.0, %v1939
        %v1941 = vpop.f32.mrf.mxu0
        %v1942 = vadd.f32 0.0, %v1941
        %v1943 = vpop.f32.mrf.mxu0
        %v1944 = vadd.f32 0.0, %v1943
        %v1945 = vpop.f32.mrf.mxu0
        %v1946 = vadd.f32 0.0, %v1945
        %1947 = vmatprep.mubr.bf16.mxu0 0
        %1948 = vmatmul.mubr.bf16.gmra.mxu0 %v534
        %v1949 = vpop.f32.mrf.mxu0
        %v1950 = vadd.f32 0.0, %v1949
        %v1951 = vpop.f32.mrf.mxu0
        %v1952 = vadd.f32 0.0, %v1951
        %v1953 = vpop.f32.mrf.mxu0
        %v1954 = vadd.f32 0.0, %v1953
        %v1955 = vpop.f32.mrf.mxu0
        %v1956 = vadd.f32 0.0, %v1955
        %1957 = vmatprep.mubr.bf16.mxu0 0
        %1958 = vmatmul.mubr.bf16.gmra.mxu0 %v537
        %v1959 = vpop.f32.mrf.mxu0
        %v1960 = vadd.f32 0.0, %v1959
        %v1961 = vpop.f32.mrf.mxu0
        %v1962 = vadd.f32 0.0, %v1961
        %v1963 = vpop.f32.mrf.mxu0
        %v1964 = vadd.f32 0.0, %v1963
        %v1965 = vpop.f32.mrf.mxu0
        %v1966 = vadd.f32 0.0, %v1965
        %1967 = vmatprep.mubr.bf16.mxu0 0
        %1968 = vmatmul.mubr.bf16.gmra.mxu0 %v540
        %v1969 = vpop.f32.mrf.mxu0
        %v1970 = vadd.f32 0.0, %v1969
        %v1971 = vpop.f32.mrf.mxu0
        %v1972 = vadd.f32 0.0, %v1971
        %v1973 = vpop.f32.mrf.mxu0
        %v1974 = vadd.f32 0.0, %v1973
        %v1975 = vpop.f32.mrf.mxu0
        %v1976 = vadd.f32 0.0, %v1975
        %1977 = vmatprep.mubr.bf16.mxu0 0
        %1978 = vmatmul.mubr.bf16.gmra.mxu0 %v543
        %v1979 = vpop.f32.mrf.mxu0
        %v1980 = vadd.f32 0.0, %v1979
        %v1981 = vpop.f32.mrf.mxu0
        %v1982 = vadd.f32 0.0, %v1981
        %v1983 = vpop.f32.mrf.mxu0
        %v1984 = vadd.f32 0.0, %v1983
        %v1985 = vpop.f32.mrf.mxu0
        %v1986 = vadd.f32 0.0, %v1985
        %1987 = vmatprep.mubr.bf16.mxu0 0
        %1988 = vmatmul.mubr.bf16.gmra.mxu0 %v546
        %v1989 = vpop.f32.mrf.mxu0
        %v1990 = vadd.f32 0.0, %v1989
        %v1991 = vpop.f32.mrf.mxu0
        %v1992 = vadd.f32 0.0, %v1991
        %v1993 = vpop.f32.mrf.mxu0
        %v1994 = vadd.f32 0.0, %v1993
        %v1995 = vpop.f32.mrf.mxu0
        %v1996 = vadd.f32 0.0, %v1995
        %1997 = vmatprep.mubr.bf16.mxu0 0
        %1998 = vmatmul.mubr.bf16.gmra.mxu0 %v549
        %v1999 = vpop.f32.mrf.mxu0
        %v2000 = vadd.f32 0.0, %v1999
        %v2001 = vpop.f32.mrf.mxu0
        %v2002 = vadd.f32 0.0, %v2001
        %v2003 = vpop.f32.mrf.mxu0
        %v2004 = vadd.f32 0.0, %v2003
        %v2005 = vpop.f32.mrf.mxu0
        %v2006 = vadd.f32 0.0, %v2005
        %2007 = vmatprep.mubr.bf16.mxu0 0
        %2008 = vmatmul.mubr.bf16.gmra.mxu0 %v552
        %v2009 = vpop.f32.mrf.mxu0
        %v2010 = vadd.f32 0.0, %v2009
        %v2011 = vpop.f32.mrf.mxu0
        %v2012 = vadd.f32 0.0, %v2011
        %v2013 = vpop.f32.mrf.mxu0
        %v2014 = vadd.f32 0.0, %v2013
        %v2015 = vpop.f32.mrf.mxu0
        %v2016 = vadd.f32 0.0, %v2015
        %2017 = vmatprep.mubr.bf16.mxu0 0
        %2018 = vmatmul.mubr.bf16.gmra.mxu0 %v555
        %v2019 = vpop.f32.mrf.mxu0
        %v2020 = vadd.f32 0.0, %v2019
        %v2021 = vpop.f32.mrf.mxu0
        %v2022 = vadd.f32 0.0, %v2021
        %v2023 = vpop.f32.mrf.mxu0
        %v2024 = vadd.f32 0.0, %v2023
        %v2025 = vpop.f32.mrf.mxu0
        %v2026 = vadd.f32 0.0, %v2025
        %2027 = vmatprep.mubr.bf16.mxu0 0
        %2028 = vmatmul.mubr.bf16.gmra.mxu0 %v558
        %v2029 = vpop.f32.mrf.mxu0
        %v2030 = vadd.f32 0.0, %v2029
        %v2031 = vpop.f32.mrf.mxu0
        %v2032 = vadd.f32 0.0, %v2031
        %v2033 = vpop.f32.mrf.mxu0
        %v2034 = vadd.f32 0.0, %v2033
        %v2035 = vpop.f32.mrf.mxu0
        %v2036 = vadd.f32 0.0, %v2035
        %2037 = vmatprep.mubr.bf16.mxu0 0
        %2038 = vmatmul.mubr.bf16.gmra.mxu0 %v561
        %v2039 = vpop.f32.mrf.mxu0
        %v2040 = vadd.f32 0.0, %v2039
        %v2041 = vpop.f32.mrf.mxu0
        %v2042 = vadd.f32 0.0, %v2041
        %v2043 = vpop.f32.mrf.mxu0
        %v2044 = vadd.f32 0.0, %v2043
        %v2045 = vpop.f32.mrf.mxu0
        %v2046 = vadd.f32 0.0, %v2045
        %2047 = vdwg.mxu0
        %vm2112 = vcmask 1044480
        %v2113 = vrot.slane %v1890, 3
        %v2114 = vrot.slane %v1894, 3
        %v2115 = vsel %vm2112, %v2113, %v2114
        %v2116 = vrot.slane %v1892, 3
        %v2117 = vrot.slane %v1896, 3
        %v2118 = vsel %vm2112, %v2116, %v2117
        %v2119 = vrot.slane %v1900, 3
        %v2120 = vsel %vm2112, %v2114, %v2119
        %v2121 = vrot.slane %v1902, 3
        %v2122 = vsel %vm2112, %v2117, %v2121
        %v2123 = vrot.slane %v1904, 3
        %v2124 = vsel %vm2112, %v2119, %v2123
        %v2125 = vrot.slane %v1906, 3
        %v2126 = vsel %vm2112, %v2121, %v2125
        %v2127 = vrot.slane %v1910, 3
        %v2128 = vsel %vm2112, %v2123, %v2127
        %v2129 = vrot.slane %v1912, 3
        %v2130 = vsel %vm2112, %v2125, %v2129
        %v2131 = vrot.slane %v1914, 3
        %v2132 = vsel %vm2112, %v2127, %v2131
        %v2133 = vrot.slane %v1916, 3
        %v2134 = vsel %vm2112, %v2129, %v2133
        %v2135 = vrot.slane %v1920, 3
        %v2136 = vsel %vm2112, %v2131, %v2135
        %v2137 = vrot.slane %v1922, 3
        %v2138 = vsel %vm2112, %v2133, %v2137
        %v2139 = vrot.slane %v1924, 3
        %v2140 = vsel %vm2112, %v2135, %v2139
        %v2141 = vrot.slane %v1926, 3
        %v2142 = vsel %vm2112, %v2137, %v2141
        %v2143 = vrot.slane %v1930, 3
        %v2144 = vsel %vm2112, %v2139, %v2143
        %v2145 = vrot.slane %v1932, 3
        %v2146 = vsel %vm2112, %v2141, %v2145
        %v2147 = vrot.slane %v1934, 3
        %v2148 = vsel %vm2112, %v2143, %v2147
        %v2149 = vrot.slane %v1936, 3
        %v2150 = vsel %vm2112, %v2145, %v2149
        %v2151 = vrot.slane %v1940, 3
        %v2152 = vsel %vm2112, %v2147, %v2151
        %v2153 = vrot.slane %v1942, 3
        %v2154 = vsel %vm2112, %v2149, %v2153
        %v2155 = vrot.slane %v1944, 3
        %v2156 = vsel %vm2112, %v2151, %v2155
        %v2157 = vrot.slane %v1946, 3
        %v2158 = vsel %vm2112, %v2153, %v2157
        %v2159 = vrot.slane %v1950, 3
        %v2160 = vsel %vm2112, %v2155, %v2159
        %v2161 = vrot.slane %v1952, 3
        %v2162 = vsel %vm2112, %v2157, %v2161
        %v2163 = vrot.slane %v1954, 3
        %v2164 = vsel %vm2112, %v2159, %v2163
        %v2165 = vrot.slane %v1956, 3
        %v2166 = vsel %vm2112, %v2161, %v2165
        %v2167 = vrot.slane %v1960, 3
        %v2168 = vsel %vm2112, %v2163, %v2167
        %v2169 = vrot.slane %v1962, 3
        %v2170 = vsel %vm2112, %v2165, %v2169
        %v2171 = vrot.slane %v1964, 3
        %v2172 = vsel %vm2112, %v2167, %v2171
        %v2173 = vrot.slane %v1966, 3
        %v2174 = vsel %vm2112, %v2169, %v2173
        %v2175 = vrot.slane %v1970, 3
        %v2176 = vsel %vm2112, %v2171, %v2175
        %v2177 = vrot.slane %v1972, 3
        %v2178 = vsel %vm2112, %v2173, %v2177
        %v2179 = vrot.slane %v1974, 3
        %v2180 = vsel %vm2112, %v2175, %v2179
        %v2181 = vrot.slane %v1976, 3
        %v2182 = vsel %vm2112, %v2177, %v2181
        %v2183 = vrot.slane %v1980, 3
        %v2184 = vsel %vm2112, %v2179, %v2183
        %v2185 = vrot.slane %v1982, 3
        %v2186 = vsel %vm2112, %v2181, %v2185
        %v2187 = vrot.slane %v1984, 3
        %v2188 = vsel %vm2112, %v2183, %v2187
        %v2189 = vrot.slane %v1986, 3
        %v2190 = vsel %vm2112, %v2185, %v2189
        %v2191 = vrot.slane %v1990, 3
        %v2192 = vsel %vm2112, %v2187, %v2191
        %v2193 = vrot.slane %v1992, 3
        %v2194 = vsel %vm2112, %v2189, %v2193
        %v2195 = vrot.slane %v1994, 3
        %v2196 = vsel %vm2112, %v2191, %v2195
        %v2197 = vrot.slane %v1996, 3
        %v2198 = vsel %vm2112, %v2193, %v2197
        %v2199 = vrot.slane %v2000, 3
        %v2200 = vsel %vm2112, %v2195, %v2199
        %v2201 = vrot.slane %v2002, 3
        %v2202 = vsel %vm2112, %v2197, %v2201
        %v2203 = vrot.slane %v2004, 3
        %v2204 = vsel %vm2112, %v2199, %v2203
        %v2205 = vrot.slane %v2006, 3
        %v2206 = vsel %vm2112, %v2201, %v2205
        %v2207 = vrot.slane %v2010, 3
        %v2208 = vsel %vm2112, %v2203, %v2207
        %v2209 = vrot.slane %v2012, 3
        %v2210 = vsel %vm2112, %v2205, %v2209
        %v2211 = vrot.slane %v2014, 3
        %v2212 = vsel %vm2112, %v2207, %v2211
        %v2213 = vrot.slane %v2016, 3
        %v2214 = vsel %vm2112, %v2209, %v2213
        %v2215 = vrot.slane %v2020, 3
        %v2216 = vsel %vm2112, %v2211, %v2215
        %v2217 = vrot.slane %v2022, 3
        %v2218 = vsel %vm2112, %v2213, %v2217
        %v2219 = vrot.slane %v2024, 3
        %v2220 = vsel %vm2112, %v2215, %v2219
        %v2221 = vrot.slane %v2026, 3
        %v2222 = vsel %vm2112, %v2217, %v2221
        %v2223 = vrot.slane %v2030, 3
        %v2224 = vsel %vm2112, %v2219, %v2223
        %v2225 = vrot.slane %v2032, 3
        %v2226 = vsel %vm2112, %v2221, %v2225
        %v2227 = vrot.slane %v2034, 3
        %v2228 = vsel %vm2112, %v2223, %v2227
        %v2229 = vrot.slane %v2036, 3
        %v2230 = vsel %vm2112, %v2225, %v2229
        %v2231 = vrot.slane %v2040, 3
        %v2232 = vsel %vm2112, %v2227, %v2231
        %v2233 = vrot.slane %v2042, 3
        %v2234 = vsel %vm2112, %v2229, %v2233
        %v2235 = vrot.slane %v2044, 3
        %v2236 = vsel %vm2112, %v2231, %v2235
        %v2237 = vrot.slane %v2046, 3
        %v2238 = vsel %vm2112, %v2233, %v2237
        %v2303 = vadd.f32 %v1766, %v2115
        %v2304 = vadd.f32 %v1767, %v2118
        %v2305 = vadd.f32 %v1768, %v2120
        %v2306 = vadd.f32 %v1769, %v2122
        %v2307 = vadd.f32 %v1770, %v2124
        %v2308 = vadd.f32 %v1771, %v2126
        %v2309 = vadd.f32 %v1772, %v2128
        %v2310 = vadd.f32 %v1773, %v2130
        %v2311 = vadd.f32 %v1774, %v2132
        %v2312 = vadd.f32 %v1775, %v2134
        %v2313 = vadd.f32 %v1776, %v2136
        %v2314 = vadd.f32 %v1777, %v2138
        %v2315 = vadd.f32 %v1778, %v2140
        %v2316 = vadd.f32 %v1779, %v2142
        %v2317 = vadd.f32 %v1780, %v2144
        %v2318 = vadd.f32 %v1781, %v2146
        %v2319 = vadd.f32 %v1782, %v2148
        %v2320 = vadd.f32 %v1783, %v2150
        %v2321 = vadd.f32 %v1784, %v2152
        %v2322 = vadd.f32 %v1785, %v2154
        %v2323 = vadd.f32 %v1786, %v2156
        %v2324 = vadd.f32 %v1787, %v2158
        %v2325 = vadd.f32 %v1788, %v2160
        %v2326 = vadd.f32 %v1789, %v2162
        %v2327 = vadd.f32 %v1790, %v2164
        %v2328 = vadd.f32 %v1791, %v2166
        %v2329 = vadd.f32 %v1792, %v2168
        %v2330 = vadd.f32 %v1793, %v2170
        %v2331 = vadd.f32 %v1794, %v2172
        %v2332 = vadd.f32 %v1795, %v2174
        %v2333 = vadd.f32 %v1796, %v2176
        %v2334 = vadd.f32 %v1797, %v2178
        %v2335 = vadd.f32 %v1798, %v2180
        %v2336 = vadd.f32 %v1799, %v2182
        %v2337 = vadd.f32 %v1800, %v2184
        %v2338 = vadd.f32 %v1801, %v2186
        %v2339 = vadd.f32 %v1802, %v2188
        %v2340 = vadd.f32 %v1803, %v2190
        %v2341 = vadd.f32 %v1804, %v2192
        %v2342 = vadd.f32 %v1805, %v2194
        %v2343 = vadd.f32 %v1806, %v2196
        %v2344 = vadd.f32 %v1807, %v2198
        %v2345 = vadd.f32 %v1808, %v2200
        %v2346 = vadd.f32 %v1809, %v2202
        %v2347 = vadd.f32 %v1810, %v2204
        %v2348 = vadd.f32 %v1811, %v2206
        %v2349 = vadd.f32 %v1812, %v2208
        %v2350 = vadd.f32 %v1813, %v2210
        %v2351 = vadd.f32 %v1814, %v2212
        %v2352 = vadd.f32 %v1815, %v2214
        %v2353 = vadd.f32 %v1816, %v2216
        %v2354 = vadd.f32 %v1817, %v2218
        %v2355 = vadd.f32 %v1818, %v2220
        %v2356 = vadd.f32 %v1819, %v2222
        %v2357 = vadd.f32 %v1820, %v2224
        %v2358 = vadd.f32 %v1821, %v2226
        %v2359 = vadd.f32 %v1822, %v2228
        %v2360 = vadd.f32 %v1823, %v2230
        %v2361 = vadd.f32 %v1824, %v2232
        %v2362 = vadd.f32 %v1825, %v2234
        %v2363 = vadd.f32 %v1826, %v2236
        %v2364 = vadd.f32 %v1827, %v2238
        %v2365 = vadd.f32 %v1828, %v2235
        %v2366 = vadd.f32 %v1829, %v2237
        %s2367 = scalar_lea.vmem %s1, 128
        %v2368 = vld [vmem:[%s2367] sm:$0xff]
        %v2369 = vld [vmem:[%s2367 + $0x8] sm:$0xff]
        %v2370 = vld [vmem:[%s2367 + $0x10] sm:$0xff]
        %v2371 = vld [vmem:[%s2367 + $0x18] sm:$0xff]
        %v2376 = vunpack.c.l.b16 %v2368
        %v2377 = vunpack.c.h.b16 %v2368
        %v2378 = vunpack.c.l.b16 %v2369
        %v2379 = vunpack.c.h.b16 %v2369
        %v2380 = vunpack.c.l.b16 %v2370
        %v2381 = vunpack.c.h.b16 %v2370
        %v2382 = vunpack.c.l.b16 %v2371
        %v2383 = vunpack.c.h.b16 %v2371
        %v2384 = vpack.c.b16 %v2378, %v2376
        %v2385 = vpack.c.b16 %v2379, %v2377
        %v2386 = vpack.c.b16 %v2382, %v2380
        %v2387 = vpack.c.b16 %v2383, %v2381
        %2392 = vmatprep.subr.bf16.mxu0 0
        %2393 = vmatpush1.bf16.msra.mxu0 0
        %2394 = vmatprep.subr.bf16.mxu0 0
        %2395 = vmatpush1.bf16.msra.mxu0 0
        %2396 = vmatprep.subr.bf16.mxu0 0
        %2397 = vmatpush1.bf16.msra.mxu0 0
        %2398 = vmatprep.subr.bf16.mxu0 0
        %2399 = vmatpush1.bf16.msra.mxu0 0
        %2400 = vmatprep.subr.bf16.mxu0 0
        %2401 = vmatpush1.bf16.msra.mxu0 0
        %2402 = vmatprep.subr.bf16.mxu0 0
        %2403 = vmatpush1.bf16.msra.mxu0 0
        %2404 = vmatprep.subr.bf16.mxu0 %v2387
        %2405 = vmatpush1.bf16.msra.mxu0 %v2386
        %2406 = vmatprep.subr.bf16.mxu0 %v2385
        %2407 = vmatpush1.bf16.msra.mxu0 %v2384
        %2408 = vmatprep.subr.bf16.mxu0 0
        %2409 = vmatpush2.bf16.msra.mxu0 0
        %2410 = vmatprep.subr.bf16.mxu0 0
        %2411 = vmatpush2.bf16.msra.mxu0 0
        %2412 = vmatprep.subr.bf16.mxu0 0
        %2413 = vmatpush2.bf16.msra.mxu0 0
        %2414 = vmatprep.subr.bf16.mxu0 0
        %2415 = vmatpush2.bf16.msra.mxu0 0
        %2416 = vmatprep.subr.bf16.mxu0 0
        %2417 = vmatpush2.bf16.msra.mxu0 0
        %2418 = vmatprep.subr.bf16.mxu0 0
        %2419 = vmatpush2.bf16.msra.mxu0 0
        %2420 = vmatprep.subr.bf16.mxu0 0
        %2421 = vmatpush2.bf16.msra.mxu0 0
        %2422 = vmatprep.subr.bf16.mxu0 0
        %2423 = vmatpush2.bf16.msra.mxu0 0
        %2424 = vmatprep.mubr.bf16.mxu0 0
        %2425 = vmatmul.mubr.bf16.gmra.mxu0 %v516
        %v2426 = vpop.f32.mrf.mxu0
        %v2427 = vadd.f32 0.0, %v2426
        %v2428 = vpop.f32.mrf.mxu0
        %v2429 = vadd.f32 0.0, %v2428
        %v2430 = vpop.f32.mrf.mxu0
        %v2431 = vadd.f32 0.0, %v2430
        %v2432 = vpop.f32.mrf.mxu0
        %v2433 = vadd.f32 0.0, %v2432
        %2434 = vmatprep.mubr.bf16.mxu0 0
        %2435 = vmatmul.mubr.bf16.gmra.mxu0 %v519
        %v2436 = vpop.f32.mrf.mxu0
        %v2437 = vadd.f32 0.0, %v2436
        %v2438 = vpop.f32.mrf.mxu0
        %v2439 = vadd.f32 0.0, %v2438
        %v2440 = vpop.f32.mrf.mxu0
        %v2441 = vadd.f32 0.0, %v2440
        %v2442 = vpop.f32.mrf.mxu0
        %v2443 = vadd.f32 0.0, %v2442
        %2444 = vmatprep.mubr.bf16.mxu0 0
        %2445 = vmatmul.mubr.bf16.gmra.mxu0 %v522
        %v2446 = vpop.f32.mrf.mxu0
        %v2447 = vadd.f32 0.0, %v2446
        %v2448 = vpop.f32.mrf.mxu0
        %v2449 = vadd.f32 0.0, %v2448
        %v2450 = vpop.f32.mrf.mxu0
        %v2451 = vadd.f32 0.0, %v2450
        %v2452 = vpop.f32.mrf.mxu0
        %v2453 = vadd.f32 0.0, %v2452
        %2454 = vmatprep.mubr.bf16.mxu0 0
        %2455 = vmatmul.mubr.bf16.gmra.mxu0 %v525
        %v2456 = vpop.f32.mrf.mxu0
        %v2457 = vadd.f32 0.0, %v2456
        %v2458 = vpop.f32.mrf.mxu0
        %v2459 = vadd.f32 0.0, %v2458
        %v2460 = vpop.f32.mrf.mxu0
        %v2461 = vadd.f32 0.0, %v2460
        %v2462 = vpop.f32.mrf.mxu0
        %v2463 = vadd.f32 0.0, %v2462
        %2464 = vmatprep.mubr.bf16.mxu0 0
        %2465 = vmatmul.mubr.bf16.gmra.mxu0 %v528
        %v2466 = vpop.f32.mrf.mxu0
        %v2467 = vadd.f32 0.0, %v2466
        %v2468 = vpop.f32.mrf.mxu0
        %v2469 = vadd.f32 0.0, %v2468
        %v2470 = vpop.f32.mrf.mxu0
        %v2471 = vadd.f32 0.0, %v2470
        %v2472 = vpop.f32.mrf.mxu0
        %v2473 = vadd.f32 0.0, %v2472
        %2474 = vmatprep.mubr.bf16.mxu0 0
        %2475 = vmatmul.mubr.bf16.gmra.mxu0 %v531
        %v2476 = vpop.f32.mrf.mxu0
        %v2477 = vadd.f32 0.0, %v2476
        %v2478 = vpop.f32.mrf.mxu0
        %v2479 = vadd.f32 0.0, %v2478
        %v2480 = vpop.f32.mrf.mxu0
        %v2481 = vadd.f32 0.0, %v2480
        %v2482 = vpop.f32.mrf.mxu0
        %v2483 = vadd.f32 0.0, %v2482
        %2484 = vmatprep.mubr.bf16.mxu0 0
        %2485 = vmatmul.mubr.bf16.gmra.mxu0 %v534
        %v2486 = vpop.f32.mrf.mxu0
        %v2487 = vadd.f32 0.0, %v2486
        %v2488 = vpop.f32.mrf.mxu0
        %v2489 = vadd.f32 0.0, %v2488
        %v2490 = vpop.f32.mrf.mxu0
        %v2491 = vadd.f32 0.0, %v2490
        %v2492 = vpop.f32.mrf.mxu0
        %v2493 = vadd.f32 0.0, %v2492
        %2494 = vmatprep.mubr.bf16.mxu0 0
        %2495 = vmatmul.mubr.bf16.gmra.mxu0 %v537
        %v2496 = vpop.f32.mrf.mxu0
        %v2497 = vadd.f32 0.0, %v2496
        %v2498 = vpop.f32.mrf.mxu0
        %v2499 = vadd.f32 0.0, %v2498
        %v2500 = vpop.f32.mrf.mxu0
        %v2501 = vadd.f32 0.0, %v2500
        %v2502 = vpop.f32.mrf.mxu0
        %v2503 = vadd.f32 0.0, %v2502
        %2504 = vmatprep.mubr.bf16.mxu0 0
        %2505 = vmatmul.mubr.bf16.gmra.mxu0 %v540
        %v2506 = vpop.f32.mrf.mxu0
        %v2507 = vadd.f32 0.0, %v2506
        %v2508 = vpop.f32.mrf.mxu0
        %v2509 = vadd.f32 0.0, %v2508
        %v2510 = vpop.f32.mrf.mxu0
        %v2511 = vadd.f32 0.0, %v2510
        %v2512 = vpop.f32.mrf.mxu0
        %v2513 = vadd.f32 0.0, %v2512
        %2514 = vmatprep.mubr.bf16.mxu0 0
        %2515 = vmatmul.mubr.bf16.gmra.mxu0 %v543
        %v2516 = vpop.f32.mrf.mxu0
        %v2517 = vadd.f32 0.0, %v2516
        %v2518 = vpop.f32.mrf.mxu0
        %v2519 = vadd.f32 0.0, %v2518
        %v2520 = vpop.f32.mrf.mxu0
        %v2521 = vadd.f32 0.0, %v2520
        %v2522 = vpop.f32.mrf.mxu0
        %v2523 = vadd.f32 0.0, %v2522
        %2524 = vmatprep.mubr.bf16.mxu0 0
        %2525 = vmatmul.mubr.bf16.gmra.mxu0 %v546
        %v2526 = vpop.f32.mrf.mxu0
        %v2527 = vadd.f32 0.0, %v2526
        %v2528 = vpop.f32.mrf.mxu0
        %v2529 = vadd.f32 0.0, %v2528
        %v2530 = vpop.f32.mrf.mxu0
        %v2531 = vadd.f32 0.0, %v2530
        %v2532 = vpop.f32.mrf.mxu0
        %v2533 = vadd.f32 0.0, %v2532
        %2534 = vmatprep.mubr.bf16.mxu0 0
        %2535 = vmatmul.mubr.bf16.gmra.mxu0 %v549
        %v2536 = vpop.f32.mrf.mxu0
        %v2537 = vadd.f32 0.0, %v2536
        %v2538 = vpop.f32.mrf.mxu0
        %v2539 = vadd.f32 0.0, %v2538
        %v2540 = vpop.f32.mrf.mxu0
        %v2541 = vadd.f32 0.0, %v2540
        %v2542 = vpop.f32.mrf.mxu0
        %v2543 = vadd.f32 0.0, %v2542
        %2544 = vmatprep.mubr.bf16.mxu0 0
        %2545 = vmatmul.mubr.bf16.gmra.mxu0 %v552
        %v2546 = vpop.f32.mrf.mxu0
        %v2547 = vadd.f32 0.0, %v2546
        %v2548 = vpop.f32.mrf.mxu0
        %v2549 = vadd.f32 0.0, %v2548
        %v2550 = vpop.f32.mrf.mxu0
        %v2551 = vadd.f32 0.0, %v2550
        %v2552 = vpop.f32.mrf.mxu0
        %v2553 = vadd.f32 0.0, %v2552
        %2554 = vmatprep.mubr.bf16.mxu0 0
        %2555 = vmatmul.mubr.bf16.gmra.mxu0 %v555
        %v2556 = vpop.f32.mrf.mxu0
        %v2557 = vadd.f32 0.0, %v2556
        %v2558 = vpop.f32.mrf.mxu0
        %v2559 = vadd.f32 0.0, %v2558
        %v2560 = vpop.f32.mrf.mxu0
        %v2561 = vadd.f32 0.0, %v2560
        %v2562 = vpop.f32.mrf.mxu0
        %v2563 = vadd.f32 0.0, %v2562
        %2564 = vmatprep.mubr.bf16.mxu0 0
        %2565 = vmatmul.mubr.bf16.gmra.mxu0 %v558
        %v2566 = vpop.f32.mrf.mxu0
        %v2567 = vadd.f32 0.0, %v2566
        %v2568 = vpop.f32.mrf.mxu0
        %v2569 = vadd.f32 0.0, %v2568
        %v2570 = vpop.f32.mrf.mxu0
        %v2571 = vadd.f32 0.0, %v2570
        %v2572 = vpop.f32.mrf.mxu0
        %v2573 = vadd.f32 0.0, %v2572
        %2574 = vmatprep.mubr.bf16.mxu0 0
        %2575 = vmatmul.mubr.bf16.gmra.mxu0 %v561
        %v2576 = vpop.f32.mrf.mxu0
        %v2577 = vadd.f32 0.0, %v2576
        %v2578 = vpop.f32.mrf.mxu0
        %v2579 = vadd.f32 0.0, %v2578
        %v2580 = vpop.f32.mrf.mxu0
        %v2581 = vadd.f32 0.0, %v2580
        %v2582 = vpop.f32.mrf.mxu0
        %v2583 = vadd.f32 0.0, %v2582
        %2584 = vdwg.mxu0
        %vm2649 = vcmask 1043456
        %v2650 = vrot.slane %v2427, 4
        %v2651 = vrot.slane %v2431, 4
        %v2652 = vsel %vm2649, %v2650, %v2651
        %v2653 = vrot.slane %v2429, 4
        %v2654 = vrot.slane %v2433, 4
        %v2655 = vsel %vm2649, %v2653, %v2654
        %v2656 = vrot.slane %v2437, 4
        %v2657 = vsel %vm2649, %v2651, %v2656
        %v2658 = vrot.slane %v2439, 4
        %v2659 = vsel %vm2649, %v2654, %v2658
        %v2660 = vrot.slane %v2441, 4
        %v2661 = vsel %vm2649, %v2656, %v2660
        %v2662 = vrot.slane %v2443, 4
        %v2663 = vsel %vm2649, %v2658, %v2662
        %v2664 = vrot.slane %v2447, 4
        %v2665 = vsel %vm2649, %v2660, %v2664
        %v2666 = vrot.slane %v2449, 4
        %v2667 = vsel %vm2649, %v2662, %v2666
        %v2668 = vrot.slane %v2451, 4
        %v2669 = vsel %vm2649, %v2664, %v2668
        %v2670 = vrot.slane %v2453, 4
        %v2671 = vsel %vm2649, %v2666, %v2670
        %v2672 = vrot.slane %v2457, 4
        %v2673 = vsel %vm2649, %v2668, %v2672
        %v2674 = vrot.slane %v2459, 4
        %v2675 = vsel %vm2649, %v2670, %v2674
        %v2676 = vrot.slane %v2461, 4
        %v2677 = vsel %vm2649, %v2672, %v2676
        %v2678 = vrot.slane %v2463, 4
        %v2679 = vsel %vm2649, %v2674, %v2678
        %v2680 = vrot.slane %v2467, 4
        %v2681 = vsel %vm2649, %v2676, %v2680
        %v2682 = vrot.slane %v2469, 4
        %v2683 = vsel %vm2649, %v2678, %v2682
        %v2684 = vrot.slane %v2471, 4
        %v2685 = vsel %vm2649, %v2680, %v2684
        %v2686 = vrot.slane %v2473, 4
        %v2687 = vsel %vm2649, %v2682, %v2686
        %v2688 = vrot.slane %v2477, 4
        %v2689 = vsel %vm2649, %v2684, %v2688
        %v2690 = vrot.slane %v2479, 4
        %v2691 = vsel %vm2649, %v2686, %v2690
        %v2692 = vrot.slane %v2481, 4
        %v2693 = vsel %vm2649, %v2688, %v2692
        %v2694 = vrot.slane %v2483, 4
        %v2695 = vsel %vm2649, %v2690, %v2694
        %v2696 = vrot.slane %v2487, 4
        %v2697 = vsel %vm2649, %v2692, %v2696
        %v2698 = vrot.slane %v2489, 4
        %v2699 = vsel %vm2649, %v2694, %v2698
        %v2700 = vrot.slane %v2491, 4
        %v2701 = vsel %vm2649, %v2696, %v2700
        %v2702 = vrot.slane %v2493, 4
        %v2703 = vsel %vm2649, %v2698, %v2702
        %v2704 = vrot.slane %v2497, 4
        %v2705 = vsel %vm2649, %v2700, %v2704
        %v2706 = vrot.slane %v2499, 4
        %v2707 = vsel %vm2649, %v2702, %v2706
        %v2708 = vrot.slane %v2501, 4
        %v2709 = vsel %vm2649, %v2704, %v2708
        %v2710 = vrot.slane %v2503, 4
        %v2711 = vsel %vm2649, %v2706, %v2710
        %v2712 = vrot.slane %v2507, 4
        %v2713 = vsel %vm2649, %v2708, %v2712
        %v2714 = vrot.slane %v2509, 4
        %v2715 = vsel %vm2649, %v2710, %v2714
        %v2716 = vrot.slane %v2511, 4
        %v2717 = vsel %vm2649, %v2712, %v2716
        %v2718 = vrot.slane %v2513, 4
        %v2719 = vsel %vm2649, %v2714, %v2718
        %v2720 = vrot.slane %v2517, 4
        %v2721 = vsel %vm2649, %v2716, %v2720
        %v2722 = vrot.slane %v2519, 4
        %v2723 = vsel %vm2649, %v2718, %v2722
        %v2724 = vrot.slane %v2521, 4
        %v2725 = vsel %vm2649, %v2720, %v2724
        %v2726 = vrot.slane %v2523, 4
        %v2727 = vsel %vm2649, %v2722, %v2726
        %v2728 = vrot.slane %v2527, 4
        %v2729 = vsel %vm2649, %v2724, %v2728
        %v2730 = vrot.slane %v2529, 4
        %v2731 = vsel %vm2649, %v2726, %v2730
        %v2732 = vrot.slane %v2531, 4
        %v2733 = vsel %vm2649, %v2728, %v2732
        %v2734 = vrot.slane %v2533, 4
        %v2735 = vsel %vm2649, %v2730, %v2734
        %v2736 = vrot.slane %v2537, 4
        %v2737 = vsel %vm2649, %v2732, %v2736
        %v2738 = vrot.slane %v2539, 4
        %v2739 = vsel %vm2649, %v2734, %v2738
        %v2740 = vrot.slane %v2541, 4
        %v2741 = vsel %vm2649, %v2736, %v2740
        %v2742 = vrot.slane %v2543, 4
        %v2743 = vsel %vm2649, %v2738, %v2742
        %v2744 = vrot.slane %v2547, 4
        %v2745 = vsel %vm2649, %v2740, %v2744
        %v2746 = vrot.slane %v2549, 4
        %v2747 = vsel %vm2649, %v2742, %v2746
        %v2748 = vrot.slane %v2551, 4
        %v2749 = vsel %vm2649, %v2744, %v2748
        %v2750 = vrot.slane %v2553, 4
        %v2751 = vsel %vm2649, %v2746, %v2750
        %v2752 = vrot.slane %v2557, 4
        %v2753 = vsel %vm2649, %v2748, %v2752
        %v2754 = vrot.slane %v2559, 4
        %v2755 = vsel %vm2649, %v2750, %v2754
        %v2756 = vrot.slane %v2561, 4
        %v2757 = vsel %vm2649, %v2752, %v2756
        %v2758 = vrot.slane %v2563, 4
        %v2759 = vsel %vm2649, %v2754, %v2758
        %v2760 = vrot.slane %v2567, 4
        %v2761 = vsel %vm2649, %v2756, %v2760
        %v2762 = vrot.slane %v2569, 4
        %v2763 = vsel %vm2649, %v2758, %v2762
        %v2764 = vrot.slane %v2571, 4
        %v2765 = vsel %vm2649, %v2760, %v2764
        %v2766 = vrot.slane %v2573, 4
        %v2767 = vsel %vm2649, %v2762, %v2766
        %v2768 = vrot.slane %v2577, 4
        %v2769 = vsel %vm2649, %v2764, %v2768
        %v2770 = vrot.slane %v2579, 4
        %v2771 = vsel %vm2649, %v2766, %v2770
        %v2772 = vrot.slane %v2581, 4
        %v2773 = vsel %vm2649, %v2768, %v2772
        %v2774 = vrot.slane %v2583, 4
        %v2775 = vsel %vm2649, %v2770, %v2774
        %v2840 = vadd.f32 %v2303, %v2652
        %v2841 = vadd.f32 %v2304, %v2655
        %v2842 = vadd.f32 %v2305, %v2657
        %v2843 = vadd.f32 %v2306, %v2659
        %v2844 = vadd.f32 %v2307, %v2661
        %v2845 = vadd.f32 %v2308, %v2663
        %v2846 = vadd.f32 %v2309, %v2665
        %v2847 = vadd.f32 %v2310, %v2667
        %v2848 = vadd.f32 %v2311, %v2669
        %v2849 = vadd.f32 %v2312, %v2671
        %v2850 = vadd.f32 %v2313, %v2673
        %v2851 = vadd.f32 %v2314, %v2675
        %v2852 = vadd.f32 %v2315, %v2677
        %v2853 = vadd.f32 %v2316, %v2679
        %v2854 = vadd.f32 %v2317, %v2681
        %v2855 = vadd.f32 %v2318, %v2683
        %v2856 = vadd.f32 %v2319, %v2685
        %v2857 = vadd.f32 %v2320, %v2687
        %v2858 = vadd.f32 %v2321, %v2689
        %v2859 = vadd.f32 %v2322, %v2691
        %v2860 = vadd.f32 %v2323, %v2693
        %v2861 = vadd.f32 %v2324, %v2695
        %v2862 = vadd.f32 %v2325, %v2697
        %v2863 = vadd.f32 %v2326, %v2699
        %v2864 = vadd.f32 %v2327, %v2701
        %v2865 = vadd.f32 %v2328, %v2703
        %v2866 = vadd.f32 %v2329, %v2705
        %v2867 = vadd.f32 %v2330, %v2707
        %v2868 = vadd.f32 %v2331, %v2709
        %v2869 = vadd.f32 %v2332, %v2711
        %v2870 = vadd.f32 %v2333, %v2713
        %v2871 = vadd.f32 %v2334, %v2715
        %v2872 = vadd.f32 %v2335, %v2717
        %v2873 = vadd.f32 %v2336, %v2719
        %v2874 = vadd.f32 %v2337, %v2721
        %v2875 = vadd.f32 %v2338, %v2723
        %v2876 = vadd.f32 %v2339, %v2725
        %v2877 = vadd.f32 %v2340, %v2727
        %v2878 = vadd.f32 %v2341, %v2729
        %v2879 = vadd.f32 %v2342, %v2731
        %v2880 = vadd.f32 %v2343, %v2733
        %v2881 = vadd.f32 %v2344, %v2735
        %v2882 = vadd.f32 %v2345, %v2737
        %v2883 = vadd.f32 %v2346, %v2739
        %v2884 = vadd.f32 %v2347, %v2741
        %v2885 = vadd.f32 %v2348, %v2743
        %v2886 = vadd.f32 %v2349, %v2745
        %v2887 = vadd.f32 %v2350, %v2747
        %v2888 = vadd.f32 %v2351, %v2749
        %v2889 = vadd.f32 %v2352, %v2751
        %v2890 = vadd.f32 %v2353, %v2753
        %v2891 = vadd.f32 %v2354, %v2755
        %v2892 = vadd.f32 %v2355, %v2757
        %v2893 = vadd.f32 %v2356, %v2759
        %v2894 = vadd.f32 %v2357, %v2761
        %v2895 = vadd.f32 %v2358, %v2763
        %v2896 = vadd.f32 %v2359, %v2765
        %v2897 = vadd.f32 %v2360, %v2767
        %v2898 = vadd.f32 %v2361, %v2769
        %v2899 = vadd.f32 %v2362, %v2771
        %v2900 = vadd.f32 %v2363, %v2773
        %v2901 = vadd.f32 %v2364, %v2775
        %v2902 = vadd.f32 %v2365, %v2772
        %v2903 = vadd.f32 %v2366, %v2774
        %v2904 = vld [vmem:[%s2] sm:$0x3]
        %v2906 = vlaneseq
        %v2907 = vshrl.u32 %v2906, 7
        %v2908 = vsub.s32 0, %v2907
        %v2909 = vrot.slane %v2904, %v2908
        %v2910 = vlaneseq
        %v2911 = vshrl.u32 %v2910, 7
        %v2912 = vsub.s32 1, %v2911
        %v2913 = vrot.slane %v2904, %v2912
        %v2916 = vadd.f32 %v2840, %v2909
        %v2917 = vadd.f32 %v2841, %v2913
        %v2918 = vadd.f32 %v2842, %v2909
        %v2919 = vadd.f32 %v2843, %v2913
        %v2920 = vadd.f32 %v2844, %v2909
        %v2921 = vadd.f32 %v2845, %v2913
        %v2922 = vadd.f32 %v2846, %v2909
        %v2923 = vadd.f32 %v2847, %v2913
        %v2924 = vadd.f32 %v2848, %v2909
        %v2925 = vadd.f32 %v2849, %v2913
        %v2926 = vadd.f32 %v2850, %v2909
        %v2927 = vadd.f32 %v2851, %v2913
        %v2928 = vadd.f32 %v2852, %v2909
        %v2929 = vadd.f32 %v2853, %v2913
        %v2930 = vadd.f32 %v2854, %v2909
        %v2931 = vadd.f32 %v2855, %v2913
        %v2932 = vadd.f32 %v2856, %v2909
        %v2933 = vadd.f32 %v2857, %v2913
        %v2934 = vadd.f32 %v2858, %v2909
        %v2935 = vadd.f32 %v2859, %v2913
        %v2936 = vadd.f32 %v2860, %v2909
        %v2937 = vadd.f32 %v2861, %v2913
        %v2938 = vadd.f32 %v2862, %v2909
        %v2939 = vadd.f32 %v2863, %v2913
        %v2940 = vadd.f32 %v2864, %v2909
        %v2941 = vadd.f32 %v2865, %v2913
        %v2942 = vadd.f32 %v2866, %v2909
        %v2943 = vadd.f32 %v2867, %v2913
        %v2944 = vadd.f32 %v2868, %v2909
        %v2945 = vadd.f32 %v2869, %v2913
        %v2946 = vadd.f32 %v2870, %v2909
        %v2947 = vadd.f32 %v2871, %v2913
        %v2948 = vadd.f32 %v2872, %v2909
        %v2949 = vadd.f32 %v2873, %v2913
        %v2950 = vadd.f32 %v2874, %v2909
        %v2951 = vadd.f32 %v2875, %v2913
        %v2952 = vadd.f32 %v2876, %v2909
        %v2953 = vadd.f32 %v2877, %v2913
        %v2954 = vadd.f32 %v2878, %v2909
        %v2955 = vadd.f32 %v2879, %v2913
        %v2956 = vadd.f32 %v2880, %v2909
        %v2957 = vadd.f32 %v2881, %v2913
        %v2958 = vadd.f32 %v2882, %v2909
        %v2959 = vadd.f32 %v2883, %v2913
        %v2960 = vadd.f32 %v2884, %v2909
        %v2961 = vadd.f32 %v2885, %v2913
        %v2962 = vadd.f32 %v2886, %v2909
        %v2963 = vadd.f32 %v2887, %v2913
        %v2964 = vadd.f32 %v2888, %v2909
        %v2965 = vadd.f32 %v2889, %v2913
        %v2966 = vadd.f32 %v2890, %v2909
        %v2967 = vadd.f32 %v2891, %v2913
        %v2968 = vadd.f32 %v2892, %v2909
        %v2969 = vadd.f32 %v2893, %v2913
        %v2970 = vadd.f32 %v2894, %v2909
        %v2971 = vadd.f32 %v2895, %v2913
        %v2972 = vadd.f32 %v2896, %v2909
        %v2973 = vadd.f32 %v2897, %v2913
        %v2974 = vadd.f32 %v2898, %v2909
        %v2975 = vadd.f32 %v2899, %v2913
        %v2976 = vadd.f32 %v2900, %v2909
        %v2977 = vadd.f32 %v2901, %v2913
        %v2978 = vadd.f32 %v2902, %v2909
        %v2979 = vadd.f32 %v2903, %v2913
        %v2980 = vmax.f32 %v2916, 0.0
        %v2981 = vmax.f32 %v2917, 0.0
        %v2982 = vmax.f32 %v2918, 0.0
        %v2983 = vmax.f32 %v2919, 0.0
        %v2984 = vmax.f32 %v2920, 0.0
        %v2985 = vmax.f32 %v2921, 0.0
        %v2986 = vmax.f32 %v2922, 0.0
        %v2987 = vmax.f32 %v2923, 0.0
        %v2988 = vmax.f32 %v2924, 0.0
        %v2989 = vmax.f32 %v2925, 0.0
        %v2990 = vmax.f32 %v2926, 0.0
        %v2991 = vmax.f32 %v2927, 0.0
        %v2992 = vmax.f32 %v2928, 0.0
        %v2993 = vmax.f32 %v2929, 0.0
        %v2994 = vmax.f32 %v2930, 0.0
        %v2995 = vmax.f32 %v2931, 0.0
        %v2996 = vmax.f32 %v2932, 0.0
        %v2997 = vmax.f32 %v2933, 0.0
        %v2998 = vmax.f32 %v2934, 0.0
        %v2999 = vmax.f32 %v2935, 0.0
        %v3000 = vmax.f32 %v2936, 0.0
        %v3001 = vmax.f32 %v2937, 0.0
        %v3002 = vmax.f32 %v2938, 0.0
        %v3003 = vmax.f32 %v2939, 0.0
        %v3004 = vmax.f32 %v2940, 0.0
        %v3005 = vmax.f32 %v2941, 0.0
        %v3006 = vmax.f32 %v2942, 0.0
        %v3007 = vmax.f32 %v2943, 0.0
        %v3008 = vmax.f32 %v2944, 0.0
        %v3009 = vmax.f32 %v2945, 0.0
        %v3010 = vmax.f32 %v2946, 0.0
        %v3011 = vmax.f32 %v2947, 0.0
        %v3012 = vmax.f32 %v2948, 0.0
        %v3013 = vmax.f32 %v2949, 0.0
        %v3014 = vmax.f32 %v2950, 0.0
        %v3015 = vmax.f32 %v2951, 0.0
        %v3016 = vmax.f32 %v2952, 0.0
        %v3017 = vmax.f32 %v2953, 0.0
        %v3018 = vmax.f32 %v2954, 0.0
        %v3019 = vmax.f32 %v2955, 0.0
        %v3020 = vmax.f32 %v2956, 0.0
        %v3021 = vmax.f32 %v2957, 0.0
        %v3022 = vmax.f32 %v2958, 0.0
        %v3023 = vmax.f32 %v2959, 0.0
        %v3024 = vmax.f32 %v2960, 0.0
        %v3025 = vmax.f32 %v2961, 0.0
        %v3026 = vmax.f32 %v2962, 0.0
        %v3027 = vmax.f32 %v2963, 0.0
        %v3028 = vmax.f32 %v2964, 0.0
        %v3029 = vmax.f32 %v2965, 0.0
        %v3030 = vmax.f32 %v2966, 0.0
        %v3031 = vmax.f32 %v2967, 0.0
        %v3032 = vmax.f32 %v2968, 0.0
        %v3033 = vmax.f32 %v2969, 0.0
        %v3034 = vmax.f32 %v2970, 0.0
        %v3035 = vmax.f32 %v2971, 0.0
        %v3036 = vmax.f32 %v2972, 0.0
        %v3037 = vmax.f32 %v2973, 0.0
        %v3038 = vmax.f32 %v2974, 0.0
        %v3039 = vmax.f32 %v2975, 0.0
        %v3040 = vmax.f32 %v2976, 0.0
        %v3041 = vmax.f32 %v2977, 0.0
        %v3042 = vmax.f32 %v2978, 0.0
        %v3043 = vmax.f32 %v2979, 0.0
        %3108 = vrot.lane.b32.xlu0 %v2980, 122
        %v3109 = vpop.permute.xlu0 %3108
        %3110 = vrot.lane.b32.xlu0 %v2981, 122
        %v3111 = vpop.permute.xlu0 %3110
        %3112 = vrot.lane.b32.xlu0 %v2982, 122
        %v3113 = vpop.permute.xlu0 %3112
        %3114 = vrot.lane.b32.xlu0 %v2983, 122
        %v3115 = vpop.permute.xlu0 %3114
        %3116 = vrot.lane.b32.xlu0 %v2984, 122
        %v3117 = vpop.permute.xlu0 %3116
        %3118 = vrot.lane.b32.xlu0 %v2985, 122
        %v3119 = vpop.permute.xlu0 %3118
        %3120 = vrot.lane.b32.xlu0 %v2986, 122
        %v3121 = vpop.permute.xlu0 %3120
        %3122 = vrot.lane.b32.xlu0 %v2987, 122
        %v3123 = vpop.permute.xlu0 %3122
        %3124 = vrot.lane.b32.xlu0 %v2988, 122
        %v3125 = vpop.permute.xlu0 %3124
        %3126 = vrot.lane.b32.xlu0 %v2989, 122
        %v3127 = vpop.permute.xlu0 %3126
        %3128 = vrot.lane.b32.xlu0 %v2990, 122
        %v3129 = vpop.permute.xlu0 %3128
        %3130 = vrot.lane.b32.xlu0 %v2991, 122
        %v3131 = vpop.permute.xlu0 %3130
        %3132 = vrot.lane.b32.xlu0 %v2992, 122
        %v3133 = vpop.permute.xlu0 %3132
        %3134 = vrot.lane.b32.xlu0 %v2993, 122
        %v3135 = vpop.permute.xlu0 %3134
        %3136 = vrot.lane.b32.xlu0 %v2994, 122
        %v3137 = vpop.permute.xlu0 %3136
        %3138 = vrot.lane.b32.xlu0 %v2995, 122
        %v3139 = vpop.permute.xlu0 %3138
        %3140 = vrot.lane.b32.xlu0 %v2996, 122
        %v3141 = vpop.permute.xlu0 %3140
        %3142 = vrot.lane.b32.xlu0 %v2997, 122
        %v3143 = vpop.permute.xlu0 %3142
        %3144 = vrot.lane.b32.xlu0 %v2998, 122
        %v3145 = vpop.permute.xlu0 %3144
        %3146 = vrot.lane.b32.xlu0 %v2999, 122
        %v3147 = vpop.permute.xlu0 %3146
        %3148 = vrot.lane.b32.xlu0 %v3000, 122
        %v3149 = vpop.permute.xlu0 %3148
        %3150 = vrot.lane.b32.xlu0 %v3001, 122
        %v3151 = vpop.permute.xlu0 %3150
        %3152 = vrot.lane.b32.xlu0 %v3002, 122
        %v3153 = vpop.permute.xlu0 %3152
        %3154 = vrot.lane.b32.xlu0 %v3003, 122
        %v3155 = vpop.permute.xlu0 %3154
        %3156 = vrot.lane.b32.xlu0 %v3004, 122
        %v3157 = vpop.permute.xlu0 %3156
        %3158 = vrot.lane.b32.xlu0 %v3005, 122
        %v3159 = vpop.permute.xlu0 %3158
        %3160 = vrot.lane.b32.xlu0 %v3006, 122
        %v3161 = vpop.permute.xlu0 %3160
        %3162 = vrot.lane.b32.xlu0 %v3007, 122
        %v3163 = vpop.permute.xlu0 %3162
        %3164 = vrot.lane.b32.xlu0 %v3008, 122
        %v3165 = vpop.permute.xlu0 %3164
        %3166 = vrot.lane.b32.xlu0 %v3009, 122
        %v3167 = vpop.permute.xlu0 %3166
        %3168 = vrot.lane.b32.xlu0 %v3010, 122
        %v3169 = vpop.permute.xlu0 %3168
        %3170 = vrot.lane.b32.xlu0 %v3011, 122
        %v3171 = vpop.permute.xlu0 %3170
        %3172 = vrot.lane.b32.xlu0 %v3012, 122
        %v3173 = vpop.permute.xlu0 %3172
        %3174 = vrot.lane.b32.xlu0 %v3013, 122
        %v3175 = vpop.permute.xlu0 %3174
        %3176 = vrot.lane.b32.xlu0 %v3014, 122
        %v3177 = vpop.permute.xlu0 %3176
        %3178 = vrot.lane.b32.xlu0 %v3015, 122
        %v3179 = vpop.permute.xlu0 %3178
        %3180 = vrot.lane.b32.xlu0 %v3016, 122
        %v3181 = vpop.permute.xlu0 %3180
        %3182 = vrot.lane.b32.xlu0 %v3017, 122
        %v3183 = vpop.permute.xlu0 %3182
        %3184 = vrot.lane.b32.xlu0 %v3018, 122
        %v3185 = vpop.permute.xlu0 %3184
        %3186 = vrot.lane.b32.xlu0 %v3019, 122
        %v3187 = vpop.permute.xlu0 %3186
        %3188 = vrot.lane.b32.xlu0 %v3020, 122
        %v3189 = vpop.permute.xlu0 %3188
        %3190 = vrot.lane.b32.xlu0 %v3021, 122
        %v3191 = vpop.permute.xlu0 %3190
        %3192 = vrot.lane.b32.xlu0 %v3022, 122
        %v3193 = vpop.permute.xlu0 %3192
        %3194 = vrot.lane.b32.xlu0 %v3023, 122
        %v3195 = vpop.permute.xlu0 %3194
        %3196 = vrot.lane.b32.xlu0 %v3024, 122
        %v3197 = vpop.permute.xlu0 %3196
        %3198 = vrot.lane.b32.xlu0 %v3025, 122
        %v3199 = vpop.permute.xlu0 %3198
        %3200 = vrot.lane.b32.xlu0 %v3026, 122
        %v3201 = vpop.permute.xlu0 %3200
        %3202 = vrot.lane.b32.xlu0 %v3027, 122
        %v3203 = vpop.permute.xlu0 %3202
        %3204 = vrot.lane.b32.xlu0 %v3028, 122
        %v3205 = vpop.permute.xlu0 %3204
        %3206 = vrot.lane.b32.xlu0 %v3029, 122
        %v3207 = vpop.permute.xlu0 %3206
        %3208 = vrot.lane.b32.xlu0 %v3030, 122
        %v3209 = vpop.permute.xlu0 %3208
        %3210 = vrot.lane.b32.xlu0 %v3031, 122
        %v3211 = vpop.permute.xlu0 %3210
        %3212 = vrot.lane.b32.xlu0 %v3032, 122
        %v3213 = vpop.permute.xlu0 %3212
        %3214 = vrot.lane.b32.xlu0 %v3033, 122
        %v3215 = vpop.permute.xlu0 %3214
        %3216 = vrot.lane.b32.xlu0 %v3034, 122
        %v3217 = vpop.permute.xlu0 %3216
        %3218 = vrot.lane.b32.xlu0 %v3035, 122
        %v3219 = vpop.permute.xlu0 %3218
        %3220 = vrot.lane.b32.xlu0 %v3036, 122
        %v3221 = vpop.permute.xlu0 %3220
        %3222 = vrot.lane.b32.xlu0 %v3037, 122
        %v3223 = vpop.permute.xlu0 %3222
        %3224 = vrot.lane.b32.xlu0 %v3038, 122
        %v3225 = vpop.permute.xlu0 %3224
        %3226 = vrot.lane.b32.xlu0 %v3039, 122
        %v3227 = vpop.permute.xlu0 %3226
        %3228 = vrot.lane.b32.xlu0 %v3040, 122
        %v3229 = vpop.permute.xlu0 %3228
        %3230 = vrot.lane.b32.xlu0 %v3041, 122
        %v3231 = vpop.permute.xlu0 %3230
        %3232 = vrot.lane.b32.xlu0 %v3042, 122
        %v3233 = vpop.permute.xlu0 %3232
        %3234 = vrot.lane.b32.xlu0 %v3043, 122
        %v3235 = vpop.permute.xlu0 %3234
        %vm3236 = vcmask 998400
        %v3237 = vsel %vm3236, %v3109, %v3111
        %v3238 = vsel %vm3236, %v3113, %v3115
        %v3239 = vsel %vm3236, %v3117, %v3119
        %v3240 = vsel %vm3236, %v3121, %v3123
        %v3241 = vsel %vm3236, %v3125, %v3127
        %v3242 = vsel %vm3236, %v3129, %v3131
        %v3243 = vsel %vm3236, %v3133, %v3135
        %v3244 = vsel %vm3236, %v3137, %v3139
        %v3245 = vsel %vm3236, %v3141, %v3143
        %v3246 = vsel %vm3236, %v3145, %v3147
        %v3247 = vsel %vm3236, %v3149, %v3151
        %v3248 = vsel %vm3236, %v3153, %v3155
        %v3249 = vsel %vm3236, %v3157, %v3159
        %v3250 = vsel %vm3236, %v3161, %v3163
        %v3251 = vsel %vm3236, %v3165, %v3167
        %v3252 = vsel %vm3236, %v3169, %v3171
        %v3253 = vsel %vm3236, %v3173, %v3175
        %v3254 = vsel %vm3236, %v3177, %v3179
        %v3255 = vsel %vm3236, %v3181, %v3183
        %v3256 = vsel %vm3236, %v3185, %v3187
        %v3257 = vsel %vm3236, %v3189, %v3191
        %v3258 = vsel %vm3236, %v3193, %v3195
        %v3259 = vsel %vm3236, %v3197, %v3199
        %v3260 = vsel %vm3236, %v3201, %v3203
        %v3261 = vsel %vm3236, %v3205, %v3207
        %v3262 = vsel %vm3236, %v3209, %v3211
        %v3263 = vsel %vm3236, %v3213, %v3215
        %v3264 = vsel %vm3236, %v3217, %v3219
        %v3265 = vsel %vm3236, %v3221, %v3223
        %v3266 = vsel %vm3236, %v3225, %v3227
        %v3267 = vsel %vm3236, %v3229, %v3231
        %v3268 = vsel %vm3236, %v3233, %v3235
        %v3333 = vmax.f32 %v2980, %v3237
        %v3334 = vmax.f32 %v2981, %v3111
        %v3335 = vmax.f32 %v2982, %v3238
        %v3336 = vmax.f32 %v2983, %v3115
        %v3337 = vmax.f32 %v2984, %v3239
        %v3338 = vmax.f32 %v2985, %v3119
        %v3339 = vmax.f32 %v2986, %v3240
        %v3340 = vmax.f32 %v2987, %v3123
        %v3341 = vmax.f32 %v2988, %v3241
        %v3342 = vmax.f32 %v2989, %v3127
        %v3343 = vmax.f32 %v2990, %v3242
        %v3344 = vmax.f32 %v2991, %v3131
        %v3345 = vmax.f32 %v2992, %v3243
        %v3346 = vmax.f32 %v2993, %v3135
        %v3347 = vmax.f32 %v2994, %v3244
        %v3348 = vmax.f32 %v2995, %v3139
        %v3349 = vmax.f32 %v2996, %v3245
        %v3350 = vmax.f32 %v2997, %v3143
        %v3351 = vmax.f32 %v2998, %v3246
        %v3352 = vmax.f32 %v2999, %v3147
        %v3353 = vmax.f32 %v3000, %v3247
        %v3354 = vmax.f32 %v3001, %v3151
        %v3355 = vmax.f32 %v3002, %v3248
        %v3356 = vmax.f32 %v3003, %v3155
        %v3357 = vmax.f32 %v3004, %v3249
        %v3358 = vmax.f32 %v3005, %v3159
        %v3359 = vmax.f32 %v3006, %v3250
        %v3360 = vmax.f32 %v3007, %v3163
        %v3361 = vmax.f32 %v3008, %v3251
        %v3362 = vmax.f32 %v3009, %v3167
        %v3363 = vmax.f32 %v3010, %v3252
        %v3364 = vmax.f32 %v3011, %v3171
        %v3365 = vmax.f32 %v3012, %v3253
        %v3366 = vmax.f32 %v3013, %v3175
        %v3367 = vmax.f32 %v3014, %v3254
        %v3368 = vmax.f32 %v3015, %v3179
        %v3369 = vmax.f32 %v3016, %v3255
        %v3370 = vmax.f32 %v3017, %v3183
        %v3371 = vmax.f32 %v3018, %v3256
        %v3372 = vmax.f32 %v3019, %v3187
        %v3373 = vmax.f32 %v3020, %v3257
        %v3374 = vmax.f32 %v3021, %v3191
        %v3375 = vmax.f32 %v3022, %v3258
        %v3376 = vmax.f32 %v3023, %v3195
        %v3377 = vmax.f32 %v3024, %v3259
        %v3378 = vmax.f32 %v3025, %v3199
        %v3379 = vmax.f32 %v3026, %v3260
        %v3380 = vmax.f32 %v3027, %v3203
        %v3381 = vmax.f32 %v3028, %v3261
        %v3382 = vmax.f32 %v3029, %v3207
        %v3383 = vmax.f32 %v3030, %v3262
        %v3384 = vmax.f32 %v3031, %v3211
        %v3385 = vmax.f32 %v3032, %v3263
        %v3386 = vmax.f32 %v3033, %v3215
        %v3387 = vmax.f32 %v3034, %v3264
        %v3388 = vmax.f32 %v3035, %v3219
        %v3389 = vmax.f32 %v3036, %v3265
        %v3390 = vmax.f32 %v3037, %v3223
        %v3391 = vmax.f32 %v3038, %v3266
        %v3392 = vmax.f32 %v3039, %v3227
        %v3393 = vmax.f32 %v3040, %v3267
        %v3394 = vmax.f32 %v3041, %v3231
        %v3395 = vmax.f32 %v3042, %v3268
        %v3396 = vmax.f32 %v3043, %v3235
        %v3461 = vrot.slane %v3333, 1
        %v3462 = vrot.slane %v3335, 1
        %v3463 = vsel %vm1038, %v3461, %v3462
        %v3464 = vrot.slane %v3334, 1
        %v3465 = vrot.slane %v3336, 1
        %v3466 = vsel %vm1038, %v3464, %v3465
        %v3467 = vrot.slane %v3337, 1
        %v3468 = vsel %vm1038, %v3462, %v3467
        %v3469 = vrot.slane %v3338, 1
        %v3470 = vsel %vm1038, %v3465, %v3469
        %v3471 = vrot.slane %v3339, 1
        %v3472 = vsel %vm1038, %v3467, %v3471
        %v3473 = vrot.slane %v3340, 1
        %v3474 = vsel %vm1038, %v3469, %v3473
        %v3475 = vrot.slane %v3341, 1
        %v3476 = vsel %vm1038, %v3471, %v3475
        %v3477 = vrot.slane %v3342, 1
        %v3478 = vsel %vm1038, %v3473, %v3477
        %v3479 = vrot.slane %v3343, 1
        %v3480 = vsel %vm1038, %v3475, %v3479
        %v3481 = vrot.slane %v3344, 1
        %v3482 = vsel %vm1038, %v3477, %v3481
        %v3483 = vrot.slane %v3345, 1
        %v3484 = vsel %vm1038, %v3479, %v3483
        %v3485 = vrot.slane %v3346, 1
        %v3486 = vsel %vm1038, %v3481, %v3485
        %v3487 = vrot.slane %v3347, 1
        %v3488 = vsel %vm1038, %v3483, %v3487
        %v3489 = vrot.slane %v3348, 1
        %v3490 = vsel %vm1038, %v3485, %v3489
        %v3491 = vrot.slane %v3349, 1
        %v3492 = vsel %vm1038, %v3487, %v3491
        %v3493 = vrot.slane %v3350, 1
        %v3494 = vsel %vm1038, %v3489, %v3493
        %v3495 = vrot.slane %v3351, 1
        %v3496 = vsel %vm1038, %v3491, %v3495
        %v3497 = vrot.slane %v3352, 1
        %v3498 = vsel %vm1038, %v3493, %v3497
        %v3499 = vrot.slane %v3353, 1
        %v3500 = vsel %vm1038, %v3495, %v3499
        %v3501 = vrot.slane %v3354, 1
        %v3502 = vsel %vm1038, %v3497, %v3501
        %v3503 = vrot.slane %v3355, 1
        %v3504 = vsel %vm1038, %v3499, %v3503
        %v3505 = vrot.slane %v3356, 1
        %v3506 = vsel %vm1038, %v3501, %v3505
        %v3507 = vrot.slane %v3357, 1
        %v3508 = vsel %vm1038, %v3503, %v3507
        %v3509 = vrot.slane %v3358, 1
        %v3510 = vsel %vm1038, %v3505, %v3509
        %v3511 = vrot.slane %v3359, 1
        %v3512 = vsel %vm1038, %v3507, %v3511
        %v3513 = vrot.slane %v3360, 1
        %v3514 = vsel %vm1038, %v3509, %v3513
        %v3515 = vrot.slane %v3361, 1
        %v3516 = vsel %vm1038, %v3511, %v3515
        %v3517 = vrot.slane %v3362, 1
        %v3518 = vsel %vm1038, %v3513, %v3517
        %v3519 = vrot.slane %v3363, 1
        %v3520 = vsel %vm1038, %v3515, %v3519
        %v3521 = vrot.slane %v3364, 1
        %v3522 = vsel %vm1038, %v3517, %v3521
        %v3523 = vrot.slane %v3365, 1
        %v3524 = vsel %vm1038, %v3519, %v3523
        %v3525 = vrot.slane %v3366, 1
        %v3526 = vsel %vm1038, %v3521, %v3525
        %v3527 = vrot.slane %v3367, 1
        %v3528 = vsel %vm1038, %v3523, %v3527
        %v3529 = vrot.slane %v3368, 1
        %v3530 = vsel %vm1038, %v3525, %v3529
        %v3531 = vrot.slane %v3369, 1
        %v3532 = vsel %vm1038, %v3527, %v3531
        %v3533 = vrot.slane %v3370, 1
        %v3534 = vsel %vm1038, %v3529, %v3533
        %v3535 = vrot.slane %v3371, 1
        %v3536 = vsel %vm1038, %v3531, %v3535
        %v3537 = vrot.slane %v3372, 1
        %v3538 = vsel %vm1038, %v3533, %v3537
        %v3539 = vrot.slane %v3373, 1
        %v3540 = vsel %vm1038, %v3535, %v3539
        %v3541 = vrot.slane %v3374, 1
        %v3542 = vsel %vm1038, %v3537, %v3541
        %v3543 = vrot.slane %v3375, 1
        %v3544 = vsel %vm1038, %v3539, %v3543
        %v3545 = vrot.slane %v3376, 1
        %v3546 = vsel %vm1038, %v3541, %v3545
        %v3547 = vrot.slane %v3377, 1
        %v3548 = vsel %vm1038, %v3543, %v3547
        %v3549 = vrot.slane %v3378, 1
        %v3550 = vsel %vm1038, %v3545, %v3549
        %v3551 = vrot.slane %v3379, 1
        %v3552 = vsel %vm1038, %v3547, %v3551
        %v3553 = vrot.slane %v3380, 1
        %v3554 = vsel %vm1038, %v3549, %v3553
        %v3555 = vrot.slane %v3381, 1
        %v3556 = vsel %vm1038, %v3551, %v3555
        %v3557 = vrot.slane %v3382, 1
        %v3558 = vsel %vm1038, %v3553, %v3557
        %v3559 = vrot.slane %v3383, 1
        %v3560 = vsel %vm1038, %v3555, %v3559
        %v3561 = vrot.slane %v3384, 1
        %v3562 = vsel %vm1038, %v3557, %v3561
        %v3563 = vrot.slane %v3385, 1
        %v3564 = vsel %vm1038, %v3559, %v3563
        %v3565 = vrot.slane %v3386, 1
        %v3566 = vsel %vm1038, %v3561, %v3565
        %v3567 = vrot.slane %v3387, 1
        %v3568 = vsel %vm1038, %v3563, %v3567
        %v3569 = vrot.slane %v3388, 1
        %v3570 = vsel %vm1038, %v3565, %v3569
        %v3571 = vrot.slane %v3389, 1
        %v3572 = vsel %vm1038, %v3567, %v3571
        %v3573 = vrot.slane %v3390, 1
        %v3574 = vsel %vm1038, %v3569, %v3573
        %v3575 = vrot.slane %v3391, 1
        %v3576 = vsel %vm1038, %v3571, %v3575
        %v3577 = vrot.slane %v3392, 1
        %v3578 = vsel %vm1038, %v3573, %v3577
        %v3579 = vrot.slane %v3393, 1
        %v3580 = vsel %vm1038, %v3575, %v3579
        %v3581 = vrot.slane %v3394, 1
        %v3582 = vsel %vm1038, %v3577, %v3581
        %v3583 = vrot.slane %v3395, 1
        %v3584 = vsel %vm1038, %v3579, %v3583
        %v3585 = vrot.slane %v3396, 1
        %v3586 = vsel %vm1038, %v3581, %v3585
        %v3651 = vmax.f32 %v3333, %v3463
        %v3652 = vmax.f32 %v3334, %v3466
        %v3653 = vmax.f32 %v3335, %v3468
        %v3654 = vmax.f32 %v3336, %v3470
        %v3655 = vmax.f32 %v3337, %v3472
        %v3656 = vmax.f32 %v3338, %v3474
        %v3657 = vmax.f32 %v3339, %v3476
        %v3658 = vmax.f32 %v3340, %v3478
        %v3659 = vmax.f32 %v3341, %v3480
        %v3660 = vmax.f32 %v3342, %v3482
        %v3661 = vmax.f32 %v3343, %v3484
        %v3662 = vmax.f32 %v3344, %v3486
        %v3663 = vmax.f32 %v3345, %v3488
        %v3664 = vmax.f32 %v3346, %v3490
        %v3665 = vmax.f32 %v3347, %v3492
        %v3666 = vmax.f32 %v3348, %v3494
        %v3667 = vmax.f32 %v3349, %v3496
        %v3668 = vmax.f32 %v3350, %v3498
        %v3669 = vmax.f32 %v3351, %v3500
        %v3670 = vmax.f32 %v3352, %v3502
        %v3671 = vmax.f32 %v3353, %v3504
        %v3672 = vmax.f32 %v3354, %v3506
        %v3673 = vmax.f32 %v3355, %v3508
        %v3674 = vmax.f32 %v3356, %v3510
        %v3675 = vmax.f32 %v3357, %v3512
        %v3676 = vmax.f32 %v3358, %v3514
        %v3677 = vmax.f32 %v3359, %v3516
        %v3678 = vmax.f32 %v3360, %v3518
        %v3679 = vmax.f32 %v3361, %v3520
        %v3680 = vmax.f32 %v3362, %v3522
        %v3681 = vmax.f32 %v3363, %v3524
        %v3682 = vmax.f32 %v3364, %v3526
        %v3683 = vmax.f32 %v3365, %v3528
        %v3684 = vmax.f32 %v3366, %v3530
        %v3685 = vmax.f32 %v3367, %v3532
        %v3686 = vmax.f32 %v3368, %v3534
        %v3687 = vmax.f32 %v3369, %v3536
        %v3688 = vmax.f32 %v3370, %v3538
        %v3689 = vmax.f32 %v3371, %v3540
        %v3690 = vmax.f32 %v3372, %v3542
        %v3691 = vmax.f32 %v3373, %v3544
        %v3692 = vmax.f32 %v3374, %v3546
        %v3693 = vmax.f32 %v3375, %v3548
        %v3694 = vmax.f32 %v3376, %v3550
        %v3695 = vmax.f32 %v3377, %v3552
        %v3696 = vmax.f32 %v3378, %v3554
        %v3697 = vmax.f32 %v3379, %v3556
        %v3698 = vmax.f32 %v3380, %v3558
        %v3699 = vmax.f32 %v3381, %v3560
        %v3700 = vmax.f32 %v3382, %v3562
        %v3701 = vmax.f32 %v3383, %v3564
        %v3702 = vmax.f32 %v3384, %v3566
        %v3703 = vmax.f32 %v3385, %v3568
        %v3704 = vmax.f32 %v3386, %v3570
        %v3705 = vmax.f32 %v3387, %v3572
        %v3706 = vmax.f32 %v3388, %v3574
        %v3707 = vmax.f32 %v3389, %v3576
        %v3708 = vmax.f32 %v3390, %v3578
        %v3709 = vmax.f32 %v3391, %v3580
        %v3710 = vmax.f32 %v3392, %v3582
        %v3711 = vmax.f32 %v3393, %v3584
        %v3712 = vmax.f32 %v3394, %v3586
        %v3713 = vmax.f32 %v3395, %v3583
        %v3714 = vmax.f32 %v3396, %v3585
        %v3715 = vpack.c.bf16 %v3653, %v3651
        %v3716 = vpack.c.bf16 %v3654, %v3652
        %v3717 = vpack.c.bf16 %v3657, %v3655
        %v3718 = vpack.c.bf16 %v3658, %v3656
        %v3719 = vpack.c.bf16 %v3661, %v3659
        %v3720 = vpack.c.bf16 %v3662, %v3660
        %v3721 = vpack.c.bf16 %v3665, %v3663
        %v3722 = vpack.c.bf16 %v3666, %v3664
        %v3723 = vpack.c.bf16 %v3669, %v3667
        %v3724 = vpack.c.bf16 %v3670, %v3668
        %v3725 = vpack.c.bf16 %v3673, %v3671
        %v3726 = vpack.c.bf16 %v3674, %v3672
        %v3727 = vpack.c.bf16 %v3677, %v3675
        %v3728 = vpack.c.bf16 %v3678, %v3676
        %v3729 = vpack.c.bf16 %v3681, %v3679
        %v3730 = vpack.c.bf16 %v3682, %v3680
        %v3731 = vpack.c.bf16 %v3685, %v3683
        %v3732 = vpack.c.bf16 %v3686, %v3684
        %v3733 = vpack.c.bf16 %v3689, %v3687
        %v3734 = vpack.c.bf16 %v3690, %v3688
        %v3735 = vpack.c.bf16 %v3693, %v3691
        %v3736 = vpack.c.bf16 %v3694, %v3692
        %v3737 = vpack.c.bf16 %v3697, %v3695
        %v3738 = vpack.c.bf16 %v3698, %v3696
        %v3739 = vpack.c.bf16 %v3701, %v3699
        %v3740 = vpack.c.bf16 %v3702, %v3700
        %v3741 = vpack.c.bf16 %v3705, %v3703
        %v3742 = vpack.c.bf16 %v3706, %v3704
        %v3743 = vpack.c.bf16 %v3709, %v3707
        %v3744 = vpack.c.bf16 %v3710, %v3708
        %v3745 = vpack.c.bf16 %v3713, %v3711
        %v3746 = vpack.c.bf16 %v3714, %v3712
        %v3747 = vld [vmem:[%s3] sm:$0xff]
        %v3748 = vld [vmem:[%s3 + $0x8] sm:$0xff]
        %v3749 = vld [vmem:[%s3 + $0x10] sm:$0xff]
        %v3750 = vld [vmem:[%s3 + $0x18] sm:$0xff]
        %v3751 = vld [vmem:[%s3 + $0x20] sm:$0xff]
        %v3752 = vld [vmem:[%s3 + $0x28] sm:$0xff]
        %v3753 = vld [vmem:[%s3 + $0x30] sm:$0xff]
        %v3754 = vld [vmem:[%s3 + $0x38] sm:$0xff]
        %v3755 = vld [vmem:[%s3 + $0x40] sm:$0xff]
        %v3756 = vld [vmem:[%s3 + $0x48] sm:$0xff]
        %v3757 = vld [vmem:[%s3 + $0x50] sm:$0xff]
        %v3758 = vld [vmem:[%s3 + $0x58] sm:$0xff]
        %v3759 = vld [vmem:[%s3 + $0x60] sm:$0xff]
        %v3760 = vld [vmem:[%s3 + $0x68] sm:$0xff]
        %v3761 = vld [vmem:[%s3 + $0x70] sm:$0xff]
        %v3762 = vld [vmem:[%s3 + $0x78] sm:$0xff]
        %v3779 = vunpack.c.l.b16 %v3747
        %v3780 = vunpack.c.h.b16 %v3747
        %v3781 = vunpack.c.l.b16 %v3748
        %v3782 = vunpack.c.h.b16 %v3748
        %v3783 = vunpack.c.l.b16 %v3749
        %v3784 = vunpack.c.h.b16 %v3749
        %v3785 = vunpack.c.l.b16 %v3750
        %v3786 = vunpack.c.h.b16 %v3750
        %v3787 = vunpack.c.l.b16 %v3751
        %v3788 = vunpack.c.h.b16 %v3751
        %v3789 = vunpack.c.l.b16 %v3752
        %v3790 = vunpack.c.h.b16 %v3752
        %v3791 = vunpack.c.l.b16 %v3753
        %v3792 = vunpack.c.h.b16 %v3753
        %v3793 = vunpack.c.l.b16 %v3754
        %v3794 = vunpack.c.h.b16 %v3754
        %v3795 = vunpack.c.l.b16 %v3755
        %v3796 = vunpack.c.h.b16 %v3755
        %v3797 = vunpack.c.l.b16 %v3756
        %v3798 = vunpack.c.h.b16 %v3756
        %v3799 = vunpack.c.l.b16 %v3757
        %v3800 = vunpack.c.h.b16 %v3757
        %v3801 = vunpack.c.l.b16 %v3758
        %v3802 = vunpack.c.h.b16 %v3758
        %v3803 = vunpack.c.l.b16 %v3759
        %v3804 = vunpack.c.h.b16 %v3759
        %v3805 = vunpack.c.l.b16 %v3760
        %v3806 = vunpack.c.h.b16 %v3760
        %v3807 = vunpack.c.l.b16 %v3761
        %v3808 = vunpack.c.h.b16 %v3761
        %v3809 = vunpack.c.l.b16 %v3762
        %v3810 = vunpack.c.h.b16 %v3762
        %v3811 = vpack.c.b16 %v3781, %v3779
        %v3812 = vpack.c.b16 %v3782, %v3780
        %v3813 = vpack.c.b16 %v3785, %v3783
        %v3814 = vpack.c.b16 %v3786, %v3784
        %v3815 = vpack.c.b16 %v3789, %v3787
        %v3816 = vpack.c.b16 %v3790, %v3788
        %v3817 = vpack.c.b16 %v3793, %v3791
        %v3818 = vpack.c.b16 %v3794, %v3792
        %v3819 = vpack.c.b16 %v3797, %v3795
        %v3820 = vpack.c.b16 %v3798, %v3796
        %v3821 = vpack.c.b16 %v3801, %v3799
        %v3822 = vpack.c.b16 %v3802, %v3800
        %v3823 = vpack.c.b16 %v3805, %v3803
        %v3824 = vpack.c.b16 %v3806, %v3804
        %v3825 = vpack.c.b16 %v3809, %v3807
        %v3826 = vpack.c.b16 %v3810, %v3808
        %vm3835 = vcmask 1006592
        %v3837 = vsel %vm3835, %v3812, 0
        %v3840 = vsel %vm3835, %v3814, 0
        %v3843 = vsel %vm3835, %v3816, 0
        %v3846 = vsel %vm3835, %v3818, 0
        %v3849 = vsel %vm3835, %v3820, 0
        %v3852 = vsel %vm3835, %v3822, 0
        %v3855 = vsel %vm3835, %v3824, 0
        %v3858 = vsel %vm3835, %v3826, 0
        %v3860 = vsel %vm2112, 4294967295, 65535
        %v3861 = vsel %vm1575, %v3860, 0
        %v3863 = vand.u32 %v3745, %v3861
        %v3866 = vand.u32 %v3746, %v3861
        %3868 = vmatprep.subr.bf16.mxu0 %v3730
        %3869 = vmatpush1.bf16.msra.mxu0 %v3729
        %3870 = vmatprep.subr.bf16.mxu0 %v3728
        %3871 = vmatpush1.bf16.msra.mxu0 %v3727
        %3872 = vmatprep.subr.bf16.mxu0 %v3726
        %3873 = vmatpush1.bf16.msra.mxu0 %v3725
        %3874 = vmatprep.subr.bf16.mxu0 %v3724
        %3875 = vmatpush1.bf16.msra.mxu0 %v3723
        %3876 = vmatprep.subr.bf16.mxu0 %v3722
        %3877 = vmatpush1.bf16.msra.mxu0 %v3721
        %3878 = vmatprep.subr.bf16.mxu0 %v3720
        %3879 = vmatpush1.bf16.msra.mxu0 %v3719
        %3880 = vmatprep.subr.bf16.mxu0 %v3718
        %3881 = vmatpush1.bf16.msra.mxu0 %v3717
        %3882 = vmatprep.subr.bf16.mxu0 %v3716
        %3883 = vmatpush1.bf16.msra.mxu0 %v3715
        %3884 = vmatprep.subr.bf16.mxu0 %v3866
        %3885 = vmatpush2.bf16.msra.mxu0 %v3863
        %3886 = vmatprep.subr.bf16.mxu0 %v3744
        %3887 = vmatpush2.bf16.msra.mxu0 %v3743
        %3888 = vmatprep.subr.bf16.mxu0 %v3742
        %3889 = vmatpush2.bf16.msra.mxu0 %v3741
        %3890 = vmatprep.subr.bf16.mxu0 %v3740
        %3891 = vmatpush2.bf16.msra.mxu0 %v3739
        %3892 = vmatprep.subr.bf16.mxu0 %v3738
        %3893 = vmatpush2.bf16.msra.mxu0 %v3737
        %3894 = vmatprep.subr.bf16.mxu0 %v3736
        %3895 = vmatpush2.bf16.msra.mxu0 %v3735
        %3896 = vmatprep.subr.bf16.mxu0 %v3734
        %3897 = vmatpush2.bf16.msra.mxu0 %v3733
        %3898 = vmatprep.subr.bf16.mxu0 %v3732
        %3899 = vmatpush2.bf16.msra.mxu0 %v3731
        %3900 = vmatprep.mubr.bf16.mxu0 %v3837
        %3901 = vmatmul.mubr.bf16.gmra.mxu0 %v3811
        %v3902 = vpop.f32.mrf.mxu0
        %v3903 = vadd.f32 0.0, %v3902
        %v3904 = vpop.f32.mrf.mxu0
        %v3905 = vadd.f32 0.0, %v3904
        %v3906 = vpop.f32.mrf.mxu0
        %v3907 = vadd.f32 0.0, %v3906
        %v3908 = vpop.f32.mrf.mxu0
        %v3909 = vadd.f32 0.0, %v3908
        %3910 = vmatprep.mubr.bf16.mxu0 %v3840
        %3911 = vmatmul.mubr.bf16.gmra.mxu0 %v3813
        %v3912 = vpop.f32.mrf.mxu0
        %v3913 = vadd.f32 0.0, %v3912
        %v3914 = vpop.f32.mrf.mxu0
        %v3915 = vadd.f32 0.0, %v3914
        %v3916 = vpop.f32.mrf.mxu0
        %v3917 = vadd.f32 0.0, %v3916
        %v3918 = vpop.f32.mrf.mxu0
        %v3919 = vadd.f32 0.0, %v3918
        %3920 = vmatprep.mubr.bf16.mxu0 %v3843
        %3921 = vmatmul.mubr.bf16.gmra.mxu0 %v3815
        %v3922 = vpop.f32.mrf.mxu0
        %v3923 = vadd.f32 0.0, %v3922
        %v3924 = vpop.f32.mrf.mxu0
        %v3925 = vadd.f32 0.0, %v3924
        %v3926 = vpop.f32.mrf.mxu0
        %v3927 = vadd.f32 0.0, %v3926
        %v3928 = vpop.f32.mrf.mxu0
        %v3929 = vadd.f32 0.0, %v3928
        %3930 = vmatprep.mubr.bf16.mxu0 %v3846
        %3931 = vmatmul.mubr.bf16.gmra.mxu0 %v3817
        %v3932 = vpop.f32.mrf.mxu0
        %v3933 = vadd.f32 0.0, %v3932
        %v3934 = vpop.f32.mrf.mxu0
        %v3935 = vadd.f32 0.0, %v3934
        %v3936 = vpop.f32.mrf.mxu0
        %v3937 = vadd.f32 0.0, %v3936
        %v3938 = vpop.f32.mrf.mxu0
        %v3939 = vadd.f32 0.0, %v3938
        %3940 = vmatprep.mubr.bf16.mxu0 %v3849
        %3941 = vmatmul.mubr.bf16.gmra.mxu0 %v3819
        %v3942 = vpop.f32.mrf.mxu0
        %v3943 = vadd.f32 0.0, %v3942
        %v3944 = vpop.f32.mrf.mxu0
        %v3945 = vadd.f32 0.0, %v3944
        %v3946 = vpop.f32.mrf.mxu0
        %v3947 = vadd.f32 0.0, %v3946
        %v3948 = vpop.f32.mrf.mxu0
        %v3949 = vadd.f32 0.0, %v3948
        %3950 = vmatprep.mubr.bf16.mxu0 %v3852
        %3951 = vmatmul.mubr.bf16.gmra.mxu0 %v3821
        %v3952 = vpop.f32.mrf.mxu0
        %v3953 = vadd.f32 0.0, %v3952
        %v3954 = vpop.f32.mrf.mxu0
        %v3955 = vadd.f32 0.0, %v3954
        %v3956 = vpop.f32.mrf.mxu0
        %v3957 = vadd.f32 0.0, %v3956
        %v3958 = vpop.f32.mrf.mxu0
        %v3959 = vadd.f32 0.0, %v3958
        %3960 = vmatprep.mubr.bf16.mxu0 %v3855
        %3961 = vmatmul.mubr.bf16.gmra.mxu0 %v3823
        %v3962 = vpop.f32.mrf.mxu0
        %v3963 = vadd.f32 0.0, %v3962
        %v3964 = vpop.f32.mrf.mxu0
        %v3965 = vadd.f32 0.0, %v3964
        %v3966 = vpop.f32.mrf.mxu0
        %v3967 = vadd.f32 0.0, %v3966
        %v3968 = vpop.f32.mrf.mxu0
        %v3969 = vadd.f32 0.0, %v3968
        %3970 = vmatprep.mubr.bf16.mxu0 %v3858
        %3971 = vmatmul.mubr.bf16.gmra.mxu0 %v3825
        %v3972 = vpop.f32.mrf.mxu0
        %v3973 = vadd.f32 0.0, %v3972
        %v3974 = vpop.f32.mrf.mxu0
        %v3975 = vadd.f32 0.0, %v3974
        %v3976 = vpop.f32.mrf.mxu0
        %v3977 = vadd.f32 0.0, %v3976
        %v3978 = vpop.f32.mrf.mxu0
        %v3979 = vadd.f32 0.0, %v3978
        %3980 = vdwg.mxu0
        %v3981 = vpack.c.bf16 %v3907, %v3903
        %v3982 = vpack.c.bf16 %v3909, %v3905
        %v3983 = vpack.c.bf16 %v3917, %v3913
        %v3984 = vpack.c.bf16 %v3919, %v3915
        %v3985 = vpack.c.bf16 %v3927, %v3923
        %v3986 = vpack.c.bf16 %v3929, %v3925
        %v3987 = vpack.c.bf16 %v3937, %v3933
        %v3988 = vpack.c.bf16 %v3939, %v3935
        %v3989 = vpack.c.bf16 %v3947, %v3943
        %v3990 = vpack.c.bf16 %v3949, %v3945
        %v3991 = vpack.c.bf16 %v3957, %v3953
        %v3992 = vpack.c.bf16 %v3959, %v3955
        %v3993 = vpack.c.bf16 %v3967, %v3963
        %v3994 = vpack.c.bf16 %v3969, %v3965
        %v3995 = vpack.c.bf16 %v3977, %v3973
        %v3996 = vpack.c.bf16 %v3979, %v3975
        %v3997 = vld [vmem:[%s4] sm:$0xff]
        %v3998 = vld [vmem:[%s4 + $0x8] sm:$0xff]
        %v3999 = vld [vmem:[%s4 + $0x10] sm:$0xff]
        %v4000 = vld [vmem:[%s4 + $0x18] sm:$0xff]
        %v4001 = vld [vmem:[%s4 + $0x20] sm:$0xff]
        %v4002 = vld [vmem:[%s4 + $0x28] sm:$0xff]
        %v4003 = vld [vmem:[%s4 + $0x30] sm:$0xff]
        %v4004 = vld [vmem:[%s4 + $0x38] sm:$0xff]
        %v4005 = vld [vmem:[%s4 + $0x40] sm:$0xff]
        %v4006 = vld [vmem:[%s4 + $0x48] sm:$0xff]
        %v4007 = vld [vmem:[%s4 + $0x50] sm:$0xff]
        %v4008 = vld [vmem:[%s4 + $0x58] sm:$0xff]
        %v4009 = vld [vmem:[%s4 + $0x60] sm:$0xff]
        %v4010 = vld [vmem:[%s4 + $0x68] sm:$0xff]
        %v4011 = vld [vmem:[%s4 + $0x70] sm:$0xff]
        %v4012 = vld [vmem:[%s4 + $0x78] sm:$0xff]
        %v4013 = vld [vmem:[%s4 + $0x80] sm:$0xff]
        %v4014 = vld [vmem:[%s4 + $0x88] sm:$0xff]
        %v4015 = vld [vmem:[%s4 + $0x90] sm:$0xff]
        %v4016 = vld [vmem:[%s4 + $0x98] sm:$0xff]
        %v4017 = vld [vmem:[%s4 + $0xa0] sm:$0x11]
        %v4039 = vunpack.c.l.b16 %v3997
        %v4040 = vunpack.c.h.b16 %v3997
        %v4041 = vunpack.c.l.b16 %v3998
        %v4042 = vunpack.c.h.b16 %v3998
        %v4043 = vunpack.c.l.b16 %v3999
        %v4044 = vunpack.c.h.b16 %v3999
        %v4045 = vunpack.c.l.b16 %v4000
        %v4046 = vunpack.c.h.b16 %v4000
        %v4047 = vunpack.c.l.b16 %v4001
        %v4048 = vunpack.c.h.b16 %v4001
        %v4049 = vunpack.c.l.b16 %v4002
        %v4050 = vunpack.c.h.b16 %v4002
        %v4051 = vunpack.c.l.b16 %v4003
        %v4052 = vunpack.c.h.b16 %v4003
        %v4053 = vunpack.c.l.b16 %v4004
        %v4054 = vunpack.c.h.b16 %v4004
        %v4055 = vunpack.c.l.b16 %v4005
        %v4056 = vunpack.c.h.b16 %v4005
        %v4057 = vunpack.c.l.b16 %v4006
        %v4058 = vunpack.c.h.b16 %v4006
        %v4059 = vunpack.c.l.b16 %v4007
        %v4060 = vunpack.c.h.b16 %v4007
        %v4061 = vunpack.c.l.b16 %v4008
        %v4062 = vunpack.c.h.b16 %v4008
        %v4063 = vunpack.c.l.b16 %v4009
        %v4064 = vunpack.c.h.b16 %v4009
        %v4065 = vunpack.c.l.b16 %v4010
        %v4066 = vunpack.c.h.b16 %v4010
        %v4067 = vunpack.c.l.b16 %v4011
        %v4068 = vunpack.c.h.b16 %v4011
        %v4069 = vunpack.c.l.b16 %v4012
        %v4070 = vunpack.c.h.b16 %v4012
        %v4071 = vunpack.c.l.b16 %v4013
        %v4072 = vunpack.c.h.b16 %v4013
        %v4073 = vunpack.c.l.b16 %v4014
        %v4074 = vunpack.c.h.b16 %v4014
        %v4075 = vunpack.c.l.b16 %v4015
        %v4076 = vunpack.c.h.b16 %v4015
        %v4077 = vunpack.c.l.b16 %v4016
        %v4078 = vunpack.c.h.b16 %v4016
        %v4079 = vunpack.c.l.b16 %v4017
        %v4080 = vunpack.c.h.b16 %v4017
        %v4081 = vpack.c.b16 %v4041, %v4039
        %v4082 = vpack.c.b16 %v4042, %v4040
        %v4083 = vpack.c.b16 %v4045, %v4043
        %v4084 = vpack.c.b16 %v4046, %v4044
        %v4085 = vpack.c.b16 %v4049, %v4047
        %v4086 = vpack.c.b16 %v4050, %v4048
        %v4087 = vpack.c.b16 %v4053, %v4051
        %v4088 = vpack.c.b16 %v4054, %v4052
        %v4089 = vpack.c.b16 %v4057, %v4055
        %v4090 = vpack.c.b16 %v4058, %v4056
        %v4091 = vpack.c.b16 %v4061, %v4059
        %v4092 = vpack.c.b16 %v4062, %v4060
        %v4093 = vpack.c.b16 %v4065, %v4063
        %v4094 = vpack.c.b16 %v4066, %v4064
        %v4095 = vpack.c.b16 %v4069, %v4067
        %v4096 = vpack.c.b16 %v4070, %v4068
        %v4097 = vpack.c.b16 %v4073, %v4071
        %v4098 = vpack.c.b16 %v4074, %v4072
        %v4099 = vpack.c.b16 %v4077, %v4075
        %v4100 = vpack.c.b16 %v4078, %v4076
        %v4101 = vpack.c.b16 %v4079, %v4079
        %v4102 = vpack.c.b16 %v4080, %v4080
        %vm4123 = vcmask 277504
        %v4125 = vsel %vm4123, %v3982, 0
        %v4128 = vsel %vm4123, %v3984, 0
        %v4131 = vsel %vm4123, %v3986, 0
        %v4134 = vsel %vm4123, %v3988, 0
        %v4137 = vsel %vm4123, %v3990, 0
        %v4140 = vsel %vm4123, %v3992, 0
        %v4143 = vsel %vm4123, %v3994, 0
        %v4146 = vsel %vm4123, %v3996, 0
        %vm4148 = vcmask 1040384
        %v4150 = vsel %vm4148, %v4101, 0
        %v4153 = vsel %vm4148, %v4102, 0
        %4155 = vmatprep.subr.bf16.mxu0 %v4096
        %4156 = vmatpush1.bf16.msra.mxu0 %v4095
        %4157 = vmatprep.subr.bf16.mxu0 %v4094
        %4158 = vmatpush1.bf16.msra.mxu0 %v4093
        %4159 = vmatprep.subr.bf16.mxu0 %v4092
        %4160 = vmatpush1.bf16.msra.mxu0 %v4091
        %4161 = vmatprep.subr.bf16.mxu0 %v4090
        %4162 = vmatpush1.bf16.msra.mxu0 %v4089
        %4163 = vmatprep.subr.bf16.mxu0 %v4088
        %4164 = vmatpush1.bf16.msra.mxu0 %v4087
        %4165 = vmatprep.subr.bf16.mxu0 %v4086
        %4166 = vmatpush1.bf16.msra.mxu0 %v4085
        %4167 = vmatprep.subr.bf16.mxu0 %v4084
        %4168 = vmatpush1.bf16.msra.mxu0 %v4083
        %4169 = vmatprep.subr.bf16.mxu0 %v4082
        %4170 = vmatpush1.bf16.msra.mxu0 %v4081
        %4171 = vmatprep.subr.bf16.mxu0 0
        %4172 = vmatpush2.bf16.msra.mxu0 0
        %4173 = vmatprep.subr.bf16.mxu0 0
        %4174 = vmatpush2.bf16.msra.mxu0 0
        %4175 = vmatprep.subr.bf16.mxu0 0
        %4176 = vmatpush2.bf16.msra.mxu0 0
        %4177 = vmatprep.subr.bf16.mxu0 0
        %4178 = vmatpush2.bf16.msra.mxu0 0
        %4179 = vmatprep.subr.bf16.mxu0 0
        %4180 = vmatpush2.bf16.msra.mxu0 0
        %4181 = vmatprep.subr.bf16.mxu0 %v4153
        %4182 = vmatpush2.bf16.msra.mxu0 %v4150
        %4183 = vmatprep.subr.bf16.mxu0 %v4100
        %4184 = vmatpush2.bf16.msra.mxu0 %v4099
        %4185 = vmatprep.subr.bf16.mxu0 %v4098
        %4186 = vmatpush2.bf16.msra.mxu0 %v4097
        %4187 = vmatprep.mubr.bf16.mxu0 %v4125
        %4188 = vmatmul.mubr.bf16.gmra.mxu0 %v3981
        %v4189 = vpop.f32.mrf.mxu0
        %v4190 = vadd.f32 0.0, %v4189
        %v4191 = vpop.f32.mrf.mxu0
        %v4192 = vadd.f32 0.0, %v4191
        %v4193 = vpop.f32.mrf.mxu0
        %v4194 = vadd.f32 0.0, %v4193
        %v4195 = vpop.f32.mrf.mxu0
        %v4196 = vadd.f32 0.0, %v4195
        %4197 = vmatprep.mubr.bf16.mxu0 %v4128
        %4198 = vmatmul.mubr.bf16.gmra.mxu0 %v3983
        %v4199 = vpop.f32.mrf.mxu0
        %v4200 = vadd.f32 0.0, %v4199
        %v4201 = vpop.f32.mrf.mxu0
        %v4202 = vadd.f32 0.0, %v4201
        %v4203 = vpop.f32.mrf.mxu0
        %v4204 = vadd.f32 0.0, %v4203
        %v4205 = vpop.f32.mrf.mxu0
        %v4206 = vadd.f32 0.0, %v4205
        %4207 = vmatprep.mubr.bf16.mxu0 %v4131
        %4208 = vmatmul.mubr.bf16.gmra.mxu0 %v3985
        %v4209 = vpop.f32.mrf.mxu0
        %v4210 = vadd.f32 0.0, %v4209
        %v4211 = vpop.f32.mrf.mxu0
        %v4212 = vadd.f32 0.0, %v4211
        %v4213 = vpop.f32.mrf.mxu0
        %v4214 = vadd.f32 0.0, %v4213
        %v4215 = vpop.f32.mrf.mxu0
        %v4216 = vadd.f32 0.0, %v4215
        %4217 = vmatprep.mubr.bf16.mxu0 %v4134
        %4218 = vmatmul.mubr.bf16.gmra.mxu0 %v3987
        %v4219 = vpop.f32.mrf.mxu0
        %v4220 = vadd.f32 0.0, %v4219
        %v4221 = vpop.f32.mrf.mxu0
        %v4222 = vadd.f32 0.0, %v4221
        %v4223 = vpop.f32.mrf.mxu0
        %v4224 = vadd.f32 0.0, %v4223
        %v4225 = vpop.f32.mrf.mxu0
        %v4226 = vadd.f32 0.0, %v4225
        %4227 = vmatprep.mubr.bf16.mxu0 %v4137
        %4228 = vmatmul.mubr.bf16.gmra.mxu0 %v3989
        %v4229 = vpop.f32.mrf.mxu0
        %v4230 = vadd.f32 0.0, %v4229
        %v4231 = vpop.f32.mrf.mxu0
        %v4232 = vadd.f32 0.0, %v4231
        %v4233 = vpop.f32.mrf.mxu0
        %v4234 = vadd.f32 0.0, %v4233
        %v4235 = vpop.f32.mrf.mxu0
        %v4236 = vadd.f32 0.0, %v4235
        %4237 = vmatprep.mubr.bf16.mxu0 %v4140
        %4238 = vmatmul.mubr.bf16.gmra.mxu0 %v3991
        %v4239 = vpop.f32.mrf.mxu0
        %v4240 = vadd.f32 0.0, %v4239
        %v4241 = vpop.f32.mrf.mxu0
        %v4242 = vadd.f32 0.0, %v4241
        %v4243 = vpop.f32.mrf.mxu0
        %v4244 = vadd.f32 0.0, %v4243
        %v4245 = vpop.f32.mrf.mxu0
        %v4246 = vadd.f32 0.0, %v4245
        %4247 = vmatprep.mubr.bf16.mxu0 %v4143
        %4248 = vmatmul.mubr.bf16.gmra.mxu0 %v3993
        %v4249 = vpop.f32.mrf.mxu0
        %v4250 = vadd.f32 0.0, %v4249
        %v4251 = vpop.f32.mrf.mxu0
        %v4252 = vadd.f32 0.0, %v4251
        %v4253 = vpop.f32.mrf.mxu0
        %v4254 = vadd.f32 0.0, %v4253
        %v4255 = vpop.f32.mrf.mxu0
        %v4256 = vadd.f32 0.0, %v4255
        %4257 = vmatprep.mubr.bf16.mxu0 %v4146
        %4258 = vmatmul.mubr.bf16.gmra.mxu0 %v3995
        %v4259 = vpop.f32.mrf.mxu0
        %v4260 = vadd.f32 0.0, %v4259
        %v4261 = vpop.f32.mrf.mxu0
        %v4262 = vadd.f32 0.0, %v4261
        %v4263 = vpop.f32.mrf.mxu0
        %v4264 = vadd.f32 0.0, %v4263
        %v4265 = vpop.f32.mrf.mxu0
        %v4266 = vadd.f32 0.0, %v4265
        %4267 = vdwg.mxu0
        %s4268 = scalar_lea.vmem %s4, 168
        %v4269 = vld [vmem:[%s4268] sm:$0xff]
        %v4270 = vld [vmem:[%s4268 + $0x8] sm:$0xff]
        %v4271 = vld [vmem:[%s4268 + $0x10] sm:$0xff]
        %v4272 = vld [vmem:[%s4268 + $0x18] sm:$0xff]
        %v4273 = vld [vmem:[%s4268 + $0x20] sm:$0xff]
        %v4274 = vld [vmem:[%s4268 + $0x28] sm:$0xff]
        %v4275 = vld [vmem:[%s4268 + $0x30] sm:$0xff]
        %v4276 = vld [vmem:[%s4268 + $0x38] sm:$0xff]
        %v4277 = vld [vmem:[%s4268 + $0x40] sm:$0xff]
        %v4278 = vld [vmem:[%s4268 + $0x48] sm:$0xff]
        %v4279 = vld [vmem:[%s4268 + $0x50] sm:$0xff]
        %v4280 = vld [vmem:[%s4268 + $0x58] sm:$0xff]
        %v4281 = vld [vmem:[%s4268 + $0x60] sm:$0xff]
        %v4282 = vld [vmem:[%s4268 + $0x68] sm:$0xff]
        %v4283 = vld [vmem:[%s4268 + $0x70] sm:$0xff]
        %v4284 = vld [vmem:[%s4268 + $0x78] sm:$0xff]
        %v4285 = vld [vmem:[%s4268 + $0x80] sm:$0xff]
        %v4286 = vld [vmem:[%s4268 + $0x88] sm:$0xff]
        %v4287 = vld [vmem:[%s4268 + $0x90] sm:$0xff]
        %v4288 = vld [vmem:[%s4268 + $0x98] sm:$0xff]
        %v4289 = vld [vmem:[%s4268 + $0xa0] sm:$0x11]
        %v4311 = vunpack.c.l.b16 %v4269
        %v4312 = vunpack.c.h.b16 %v4269
        %v4313 = vunpack.c.l.b16 %v4270
        %v4314 = vunpack.c.h.b16 %v4270
        %v4315 = vunpack.c.l.b16 %v4271
        %v4316 = vunpack.c.h.b16 %v4271
        %v4317 = vunpack.c.l.b16 %v4272
        %v4318 = vunpack.c.h.b16 %v4272
        %v4319 = vunpack.c.l.b16 %v4273
        %v4320 = vunpack.c.h.b16 %v4273
        %v4321 = vunpack.c.l.b16 %v4274
        %v4322 = vunpack.c.h.b16 %v4274
        %v4323 = vunpack.c.l.b16 %v4275
        %v4324 = vunpack.c.h.b16 %v4275
        %v4325 = vunpack.c.l.b16 %v4276
        %v4326 = vunpack.c.h.b16 %v4276
        %v4327 = vunpack.c.l.b16 %v4277
        %v4328 = vunpack.c.h.b16 %v4277
        %v4329 = vunpack.c.l.b16 %v4278
        %v4330 = vunpack.c.h.b16 %v4278
        %v4331 = vunpack.c.l.b16 %v4279
        %v4332 = vunpack.c.h.b16 %v4279
        %v4333 = vunpack.c.l.b16 %v4280
        %v4334 = vunpack.c.h.b16 %v4280
        %v4335 = vunpack.c.l.b16 %v4281
        %v4336 = vunpack.c.h.b16 %v4281
        %v4337 = vunpack.c.l.b16 %v4282
        %v4338 = vunpack.c.h.b16 %v4282
        %v4339 = vunpack.c.l.b16 %v4283
        %v4340 = vunpack.c.h.b16 %v4283
        %v4341 = vunpack.c.l.b16 %v4284
        %v4342 = vunpack.c.h.b16 %v4284
        %v4343 = vunpack.c.l.b16 %v4285
        %v4344 = vunpack.c.h.b16 %v4285
        %v4345 = vunpack.c.l.b16 %v4286
        %v4346 = vunpack.c.h.b16 %v4286
        %v4347 = vunpack.c.l.b16 %v4287
        %v4348 = vunpack.c.h.b16 %v4287
        %v4349 = vunpack.c.l.b16 %v4288
        %v4350 = vunpack.c.h.b16 %v4288
        %v4351 = vunpack.c.l.b16 %v4289
        %v4352 = vunpack.c.h.b16 %v4289
        %v4353 = vpack.c.b16 %v4313, %v4311
        %v4354 = vpack.c.b16 %v4314, %v4312
        %v4355 = vpack.c.b16 %v4317, %v4315
        %v4356 = vpack.c.b16 %v4318, %v4316
        %v4357 = vpack.c.b16 %v4321, %v4319
        %v4358 = vpack.c.b16 %v4322, %v4320
        %v4359 = vpack.c.b16 %v4325, %v4323
        %v4360 = vpack.c.b16 %v4326, %v4324
        %v4361 = vpack.c.b16 %v4329, %v4327
        %v4362 = vpack.c.b16 %v4330, %v4328
        %v4363 = vpack.c.b16 %v4333, %v4331
        %v4364 = vpack.c.b16 %v4334, %v4332
        %v4365 = vpack.c.b16 %v4337, %v4335
        %v4366 = vpack.c.b16 %v4338, %v4336
        %v4367 = vpack.c.b16 %v4341, %v4339
        %v4368 = vpack.c.b16 %v4342, %v4340
        %v4369 = vpack.c.b16 %v4345, %v4343
        %v4370 = vpack.c.b16 %v4346, %v4344
        %v4371 = vpack.c.b16 %v4349, %v4347
        %v4372 = vpack.c.b16 %v4350, %v4348
        %v4373 = vpack.c.b16 %v4351, %v4351
        %v4374 = vpack.c.b16 %v4352, %v4352
        %v4396 = vsel %vm4148, %v4373, 0
        %v4399 = vsel %vm4148, %v4374, 0
        %4401 = vmatprep.subr.bf16.mxu0 %v4368
        %4402 = vmatpush1.bf16.msra.mxu0 %v4367
        %4403 = vmatprep.subr.bf16.mxu0 %v4366
        %4404 = vmatpush1.bf16.msra.mxu0 %v4365
        %4405 = vmatprep.subr.bf16.mxu0 %v4364
        %4406 = vmatpush1.bf16.msra.mxu0 %v4363
        %4407 = vmatprep.subr.bf16.mxu0 %v4362
        %4408 = vmatpush1.bf16.msra.mxu0 %v4361
        %4409 = vmatprep.subr.bf16.mxu0 %v4360
        %4410 = vmatpush1.bf16.msra.mxu0 %v4359
        %4411 = vmatprep.subr.bf16.mxu0 %v4358
        %4412 = vmatpush1.bf16.msra.mxu0 %v4357
        %4413 = vmatprep.subr.bf16.mxu0 %v4356
        %4414 = vmatpush1.bf16.msra.mxu0 %v4355
        %4415 = vmatprep.subr.bf16.mxu0 %v4354
        %4416 = vmatpush1.bf16.msra.mxu0 %v4353
        %4417 = vmatprep.subr.bf16.mxu0 0
        %4418 = vmatpush2.bf16.msra.mxu0 0
        %4419 = vmatprep.subr.bf16.mxu0 0
        %4420 = vmatpush2.bf16.msra.mxu0 0
        %4421 = vmatprep.subr.bf16.mxu0 0
        %4422 = vmatpush2.bf16.msra.mxu0 0
        %4423 = vmatprep.subr.bf16.mxu0 0
        %4424 = vmatpush2.bf16.msra.mxu0 0
        %4425 = vmatprep.subr.bf16.mxu0 0
        %4426 = vmatpush2.bf16.msra.mxu0 0
        %4427 = vmatprep.subr.bf16.mxu0 %v4399
        %4428 = vmatpush2.bf16.msra.mxu0 %v4396
        %4429 = vmatprep.subr.bf16.mxu0 %v4372
        %4430 = vmatpush2.bf16.msra.mxu0 %v4371
        %4431 = vmatprep.subr.bf16.mxu0 %v4370
        %4432 = vmatpush2.bf16.msra.mxu0 %v4369
        %4433 = vmatprep.mubr.bf16.mxu0 %v4125
        %4434 = vmatmul.mubr.bf16.gmra.mxu0 %v3981
        %v4435 = vpop.f32.mrf.mxu0
        %v4436 = vadd.f32 0.0, %v4435
        %v4437 = vpop.f32.mrf.mxu0
        %v4438 = vadd.f32 0.0, %v4437
        %v4439 = vpop.f32.mrf.mxu0
        %v4440 = vadd.f32 0.0, %v4439
        %v4441 = vpop.f32.mrf.mxu0
        %v4442 = vadd.f32 0.0, %v4441
        %4443 = vmatprep.mubr.bf16.mxu0 %v4128
        %4444 = vmatmul.mubr.bf16.gmra.mxu0 %v3983
        %v4445 = vpop.f32.mrf.mxu0
        %v4446 = vadd.f32 0.0, %v4445
        %v4447 = vpop.f32.mrf.mxu0
        %v4448 = vadd.f32 0.0, %v4447
        %v4449 = vpop.f32.mrf.mxu0
        %v4450 = vadd.f32 0.0, %v4449
        %v4451 = vpop.f32.mrf.mxu0
        %v4452 = vadd.f32 0.0, %v4451
        %4453 = vmatprep.mubr.bf16.mxu0 %v4131
        %4454 = vmatmul.mubr.bf16.gmra.mxu0 %v3985
        %v4455 = vpop.f32.mrf.mxu0
        %v4456 = vadd.f32 0.0, %v4455
        %v4457 = vpop.f32.mrf.mxu0
        %v4458 = vadd.f32 0.0, %v4457
        %v4459 = vpop.f32.mrf.mxu0
        %v4460 = vadd.f32 0.0, %v4459
        %v4461 = vpop.f32.mrf.mxu0
        %v4462 = vadd.f32 0.0, %v4461
        %4463 = vmatprep.mubr.bf16.mxu0 %v4134
        %4464 = vmatmul.mubr.bf16.gmra.mxu0 %v3987
        %v4465 = vpop.f32.mrf.mxu0
        %v4466 = vadd.f32 0.0, %v4465
        %v4467 = vpop.f32.mrf.mxu0
        %v4468 = vadd.f32 0.0, %v4467
        %v4469 = vpop.f32.mrf.mxu0
        %v4470 = vadd.f32 0.0, %v4469
        %v4471 = vpop.f32.mrf.mxu0
        %v4472 = vadd.f32 0.0, %v4471
        %4473 = vmatprep.mubr.bf16.mxu0 %v4137
        %4474 = vmatmul.mubr.bf16.gmra.mxu0 %v3989
        %v4475 = vpop.f32.mrf.mxu0
        %v4476 = vadd.f32 0.0, %v4475
        %v4477 = vpop.f32.mrf.mxu0
        %v4478 = vadd.f32 0.0, %v4477
        %v4479 = vpop.f32.mrf.mxu0
        %v4480 = vadd.f32 0.0, %v4479
        %v4481 = vpop.f32.mrf.mxu0
        %v4482 = vadd.f32 0.0, %v4481
        %4483 = vmatprep.mubr.bf16.mxu0 %v4140
        %4484 = vmatmul.mubr.bf16.gmra.mxu0 %v3991
        %v4485 = vpop.f32.mrf.mxu0
        %v4486 = vadd.f32 0.0, %v4485
        %v4487 = vpop.f32.mrf.mxu0
        %v4488 = vadd.f32 0.0, %v4487
        %v4489 = vpop.f32.mrf.mxu0
        %v4490 = vadd.f32 0.0, %v4489
        %v4491 = vpop.f32.mrf.mxu0
        %v4492 = vadd.f32 0.0, %v4491
        %4493 = vmatprep.mubr.bf16.mxu0 %v4143
        %4494 = vmatmul.mubr.bf16.gmra.mxu0 %v3993
        %v4495 = vpop.f32.mrf.mxu0
        %v4496 = vadd.f32 0.0, %v4495
        %v4497 = vpop.f32.mrf.mxu0
        %v4498 = vadd.f32 0.0, %v4497
        %v4499 = vpop.f32.mrf.mxu0
        %v4500 = vadd.f32 0.0, %v4499
        %v4501 = vpop.f32.mrf.mxu0
        %v4502 = vadd.f32 0.0, %v4501
        %4503 = vmatprep.mubr.bf16.mxu0 %v4146
        %4504 = vmatmul.mubr.bf16.gmra.mxu0 %v3995
        %v4505 = vpop.f32.mrf.mxu0
        %v4506 = vadd.f32 0.0, %v4505
        %v4507 = vpop.f32.mrf.mxu0
        %v4508 = vadd.f32 0.0, %v4507
        %v4509 = vpop.f32.mrf.mxu0
        %v4510 = vadd.f32 0.0, %v4509
        %v4511 = vpop.f32.mrf.mxu0
        %v4512 = vadd.f32 0.0, %v4511
        %4513 = vdwg.mxu0
        %v4546 = vrot.slane %v4436, 1
        %v4547 = vrot.slane %v4440, 1
        %v4548 = vsel %vm1038, %v4546, %v4547
        %v4549 = vrot.slane %v4438, 1
        %v4550 = vrot.slane %v4442, 1
        %v4551 = vsel %vm1038, %v4549, %v4550
        %v4552 = vrot.slane %v4446, 1
        %v4553 = vsel %vm1038, %v4547, %v4552
        %v4554 = vrot.slane %v4448, 1
        %v4555 = vsel %vm1038, %v4550, %v4554
        %v4556 = vrot.slane %v4450, 1
        %v4557 = vsel %vm1038, %v4552, %v4556
        %v4558 = vrot.slane %v4452, 1
        %v4559 = vsel %vm1038, %v4554, %v4558
        %v4560 = vrot.slane %v4456, 1
        %v4561 = vsel %vm1038, %v4556, %v4560
        %v4562 = vrot.slane %v4458, 1
        %v4563 = vsel %vm1038, %v4558, %v4562
        %v4564 = vrot.slane %v4460, 1
        %v4565 = vsel %vm1038, %v4560, %v4564
        %v4566 = vrot.slane %v4462, 1
        %v4567 = vsel %vm1038, %v4562, %v4566
        %v4568 = vrot.slane %v4466, 1
        %v4569 = vsel %vm1038, %v4564, %v4568
        %v4570 = vrot.slane %v4468, 1
        %v4571 = vsel %vm1038, %v4566, %v4570
        %v4572 = vrot.slane %v4470, 1
        %v4573 = vsel %vm1038, %v4568, %v4572
        %v4574 = vrot.slane %v4472, 1
        %v4575 = vsel %vm1038, %v4570, %v4574
        %v4576 = vrot.slane %v4476, 1
        %v4577 = vsel %vm1038, %v4572, %v4576
        %v4578 = vrot.slane %v4478, 1
        %v4579 = vsel %vm1038, %v4574, %v4578
        %v4580 = vrot.slane %v4480, 1
        %v4581 = vsel %vm1038, %v4576, %v4580
        %v4582 = vrot.slane %v4482, 1
        %v4583 = vsel %vm1038, %v4578, %v4582
        %v4584 = vrot.slane %v4486, 1
        %v4585 = vsel %vm1038, %v4580, %v4584
        %v4586 = vrot.slane %v4488, 1
        %v4587 = vsel %vm1038, %v4582, %v4586
        %v4588 = vrot.slane %v4490, 1
        %v4589 = vsel %vm1038, %v4584, %v4588
        %v4590 = vrot.slane %v4492, 1
        %v4591 = vsel %vm1038, %v4586, %v4590
        %v4592 = vrot.slane %v4496, 1
        %v4593 = vsel %vm1038, %v4588, %v4592
        %v4594 = vrot.slane %v4498, 1
        %v4595 = vsel %vm1038, %v4590, %v4594
        %v4596 = vrot.slane %v4500, 1
        %v4597 = vsel %vm1038, %v4592, %v4596
        %v4598 = vrot.slane %v4502, 1
        %v4599 = vsel %vm1038, %v4594, %v4598
        %v4600 = vrot.slane %v4506, 1
        %v4601 = vsel %vm1038, %v4596, %v4600
        %v4602 = vrot.slane %v4508, 1
        %v4603 = vsel %vm1038, %v4598, %v4602
        %v4604 = vrot.slane %v4510, 1
        %v4605 = vsel %vm1038, %v4600, %v4604
        %v4606 = vrot.slane %v4512, 1
        %v4607 = vsel %vm1038, %v4602, %v4606
        %v4640 = vadd.f32 %v4190, %v4548
        %v4641 = vadd.f32 %v4192, %v4551
        %v4642 = vadd.f32 %v4194, %v4553
        %v4643 = vadd.f32 %v4196, %v4555
        %v4644 = vadd.f32 %v4200, %v4557
        %v4645 = vadd.f32 %v4202, %v4559
        %v4646 = vadd.f32 %v4204, %v4561
        %v4647 = vadd.f32 %v4206, %v4563
        %v4648 = vadd.f32 %v4210, %v4565
        %v4649 = vadd.f32 %v4212, %v4567
        %v4650 = vadd.f32 %v4214, %v4569
        %v4651 = vadd.f32 %v4216, %v4571
        %v4652 = vadd.f32 %v4220, %v4573
        %v4653 = vadd.f32 %v4222, %v4575
        %v4654 = vadd.f32 %v4224, %v4577
        %v4655 = vadd.f32 %v4226, %v4579
        %v4656 = vadd.f32 %v4230, %v4581
        %v4657 = vadd.f32 %v4232, %v4583
        %v4658 = vadd.f32 %v4234, %v4585
        %v4659 = vadd.f32 %v4236, %v4587
        %v4660 = vadd.f32 %v4240, %v4589
        %v4661 = vadd.f32 %v4242, %v4591
        %v4662 = vadd.f32 %v4244, %v4593
        %v4663 = vadd.f32 %v4246, %v4595
        %v4664 = vadd.f32 %v4250, %v4597
        %v4665 = vadd.f32 %v4252, %v4599
        %v4666 = vadd.f32 %v4254, %v4601
        %v4667 = vadd.f32 %v4256, %v4603
        %v4668 = vadd.f32 %v4260, %v4605
        %v4669 = vadd.f32 %v4262, %v4607
        %v4670 = vadd.f32 %v4264, %v4604
        %v4671 = vadd.f32 %v4266, %v4606
        %s4672 = scalar_lea.vmem %s4, 336
        %v4673 = vld [vmem:[%s4672] sm:$0xff]
        %v4674 = vld [vmem:[%s4672 + $0x8] sm:$0xff]
        %v4675 = vld [vmem:[%s4672 + $0x10] sm:$0xff]
        %v4676 = vld [vmem:[%s4672 + $0x18] sm:$0xff]
        %v4677 = vld [vmem:[%s4672 + $0x20] sm:$0xff]
        %v4678 = vld [vmem:[%s4672 + $0x28] sm:$0xff]
        %v4679 = vld [vmem:[%s4672 + $0x30] sm:$0xff]
        %v4680 = vld [vmem:[%s4672 + $0x38] sm:$0xff]
        %v4681 = vld [vmem:[%s4672 + $0x40] sm:$0xff]
        %v4682 = vld [vmem:[%s4672 + $0x48] sm:$0xff]
        %v4683 = vld [vmem:[%s4672 + $0x50] sm:$0xff]
        %v4684 = vld [vmem:[%s4672 + $0x58] sm:$0xff]
        %v4685 = vld [vmem:[%s4672 + $0x60] sm:$0xff]
        %v4686 = vld [vmem:[%s4672 + $0x68] sm:$0xff]
        %v4687 = vld [vmem:[%s4672 + $0x70] sm:$0xff]
        %v4688 = vld [vmem:[%s4672 + $0x78] sm:$0xff]
        %v4689 = vld [vmem:[%s4672 + $0x80] sm:$0xff]
        %v4690 = vld [vmem:[%s4672 + $0x88] sm:$0xff]
        %v4691 = vld [vmem:[%s4672 + $0x90] sm:$0xff]
        %v4692 = vld [vmem:[%s4672 + $0x98] sm:$0xff]
        %v4693 = vld [vmem:[%s4672 + $0xa0] sm:$0x11]
        %v4715 = vunpack.c.l.b16 %v4673
        %v4716 = vunpack.c.h.b16 %v4673
        %v4717 = vunpack.c.l.b16 %v4674
        %v4718 = vunpack.c.h.b16 %v4674
        %v4719 = vunpack.c.l.b16 %v4675
        %v4720 = vunpack.c.h.b16 %v4675
        %v4721 = vunpack.c.l.b16 %v4676
        %v4722 = vunpack.c.h.b16 %v4676
        %v4723 = vunpack.c.l.b16 %v4677
        %v4724 = vunpack.c.h.b16 %v4677
        %v4725 = vunpack.c.l.b16 %v4678
        %v4726 = vunpack.c.h.b16 %v4678
        %v4727 = vunpack.c.l.b16 %v4679
        %v4728 = vunpack.c.h.b16 %v4679
        %v4729 = vunpack.c.l.b16 %v4680
        %v4730 = vunpack.c.h.b16 %v4680
        %v4731 = vunpack.c.l.b16 %v4681
        %v4732 = vunpack.c.h.b16 %v4681
        %v4733 = vunpack.c.l.b16 %v4682
        %v4734 = vunpack.c.h.b16 %v4682
        %v4735 = vunpack.c.l.b16 %v4683
        %v4736 = vunpack.c.h.b16 %v4683
        %v4737 = vunpack.c.l.b16 %v4684
        %v4738 = vunpack.c.h.b16 %v4684
        %v4739 = vunpack.c.l.b16 %v4685
        %v4740 = vunpack.c.h.b16 %v4685
        %v4741 = vunpack.c.l.b16 %v4686
        %v4742 = vunpack.c.h.b16 %v4686
        %v4743 = vunpack.c.l.b16 %v4687
        %v4744 = vunpack.c.h.b16 %v4687
        %v4745 = vunpack.c.l.b16 %v4688
        %v4746 = vunpack.c.h.b16 %v4688
        %v4747 = vunpack.c.l.b16 %v4689
        %v4748 = vunpack.c.h.b16 %v4689
        %v4749 = vunpack.c.l.b16 %v4690
        %v4750 = vunpack.c.h.b16 %v4690
        %v4751 = vunpack.c.l.b16 %v4691
        %v4752 = vunpack.c.h.b16 %v4691
        %v4753 = vunpack.c.l.b16 %v4692
        %v4754 = vunpack.c.h.b16 %v4692
        %v4755 = vunpack.c.l.b16 %v4693
        %v4756 = vunpack.c.h.b16 %v4693
        %v4757 = vpack.c.b16 %v4717, %v4715
        %v4758 = vpack.c.b16 %v4718, %v4716
        %v4759 = vpack.c.b16 %v4721, %v4719
        %v4760 = vpack.c.b16 %v4722, %v4720
        %v4761 = vpack.c.b16 %v4725, %v4723
        %v4762 = vpack.c.b16 %v4726, %v4724
        %v4763 = vpack.c.b16 %v4729, %v4727
        %v4764 = vpack.c.b16 %v4730, %v4728
        %v4765 = vpack.c.b16 %v4733, %v4731
        %v4766 = vpack.c.b16 %v4734, %v4732
        %v4767 = vpack.c.b16 %v4737, %v4735
        %v4768 = vpack.c.b16 %v4738, %v4736
        %v4769 = vpack.c.b16 %v4741, %v4739
        %v4770 = vpack.c.b16 %v4742, %v4740
        %v4771 = vpack.c.b16 %v4745, %v4743
        %v4772 = vpack.c.b16 %v4746, %v4744
        %v4773 = vpack.c.b16 %v4749, %v4747
        %v4774 = vpack.c.b16 %v4750, %v4748
        %v4775 = vpack.c.b16 %v4753, %v4751
        %v4776 = vpack.c.b16 %v4754, %v4752
        %v4777 = vpack.c.b16 %v4755, %v4755
        %v4778 = vpack.c.b16 %v4756, %v4756
        %v4800 = vsel %vm4148, %v4777, 0
        %v4803 = vsel %vm4148, %v4778, 0
        %4805 = vmatprep.subr.bf16.mxu0 %v4772
        %4806 = vmatpush1.bf16.msra.mxu0 %v4771
        %4807 = vmatprep.subr.bf16.mxu0 %v4770
        %4808 = vmatpush1.bf16.msra.mxu0 %v4769
        %4809 = vmatprep.subr.bf16.mxu0 %v4768
        %4810 = vmatpush1.bf16.msra.mxu0 %v4767
        %4811 = vmatprep.subr.bf16.mxu0 %v4766
        %4812 = vmatpush1.bf16.msra.mxu0 %v4765
        %4813 = vmatprep.subr.bf16.mxu0 %v4764
        %4814 = vmatpush1.bf16.msra.mxu0 %v4763
        %4815 = vmatprep.subr.bf16.mxu0 %v4762
        %4816 = vmatpush1.bf16.msra.mxu0 %v4761
        %4817 = vmatprep.subr.bf16.mxu0 %v4760
        %4818 = vmatpush1.bf16.msra.mxu0 %v4759
        %4819 = vmatprep.subr.bf16.mxu0 %v4758
        %4820 = vmatpush1.bf16.msra.mxu0 %v4757
        %4821 = vmatprep.subr.bf16.mxu0 0
        %4822 = vmatpush2.bf16.msra.mxu0 0
        %4823 = vmatprep.subr.bf16.mxu0 0
        %4824 = vmatpush2.bf16.msra.mxu0 0
        %4825 = vmatprep.subr.bf16.mxu0 0
        %4826 = vmatpush2.bf16.msra.mxu0 0
        %4827 = vmatprep.subr.bf16.mxu0 0
        %4828 = vmatpush2.bf16.msra.mxu0 0
        %4829 = vmatprep.subr.bf16.mxu0 0
        %4830 = vmatpush2.bf16.msra.mxu0 0
        %4831 = vmatprep.subr.bf16.mxu0 %v4803
        %4832 = vmatpush2.bf16.msra.mxu0 %v4800
        %4833 = vmatprep.subr.bf16.mxu0 %v4776
        %4834 = vmatpush2.bf16.msra.mxu0 %v4775
        %4835 = vmatprep.subr.bf16.mxu0 %v4774
        %4836 = vmatpush2.bf16.msra.mxu0 %v4773
        %4837 = vmatprep.mubr.bf16.mxu0 %v4125
        %4838 = vmatmul.mubr.bf16.gmra.mxu0 %v3981
        %v4839 = vpop.f32.mrf.mxu0
        %v4840 = vadd.f32 0.0, %v4839
        %v4841 = vpop.f32.mrf.mxu0
        %v4842 = vadd.f32 0.0, %v4841
        %v4843 = vpop.f32.mrf.mxu0
        %v4844 = vadd.f32 0.0, %v4843
        %v4845 = vpop.f32.mrf.mxu0
        %v4846 = vadd.f32 0.0, %v4845
        %4847 = vmatprep.mubr.bf16.mxu0 %v4128
        %4848 = vmatmul.mubr.bf16.gmra.mxu0 %v3983
        %v4849 = vpop.f32.mrf.mxu0
        %v4850 = vadd.f32 0.0, %v4849
        %v4851 = vpop.f32.mrf.mxu0
        %v4852 = vadd.f32 0.0, %v4851
        %v4853 = vpop.f32.mrf.mxu0
        %v4854 = vadd.f32 0.0, %v4853
        %v4855 = vpop.f32.mrf.mxu0
        %v4856 = vadd.f32 0.0, %v4855
        %4857 = vmatprep.mubr.bf16.mxu0 %v4131
        %4858 = vmatmul.mubr.bf16.gmra.mxu0 %v3985
        %v4859 = vpop.f32.mrf.mxu0
        %v4860 = vadd.f32 0.0, %v4859
        %v4861 = vpop.f32.mrf.mxu0
        %v4862 = vadd.f32 0.0, %v4861
        %v4863 = vpop.f32.mrf.mxu0
        %v4864 = vadd.f32 0.0, %v4863
        %v4865 = vpop.f32.mrf.mxu0
        %v4866 = vadd.f32 0.0, %v4865
        %4867 = vmatprep.mubr.bf16.mxu0 %v4134
        %4868 = vmatmul.mubr.bf16.gmra.mxu0 %v3987
        %v4869 = vpop.f32.mrf.mxu0
        %v4870 = vadd.f32 0.0, %v4869
        %v4871 = vpop.f32.mrf.mxu0
        %v4872 = vadd.f32 0.0, %v4871
        %v4873 = vpop.f32.mrf.mxu0
        %v4874 = vadd.f32 0.0, %v4873
        %v4875 = vpop.f32.mrf.mxu0
        %v4876 = vadd.f32 0.0, %v4875
        %4877 = vmatprep.mubr.bf16.mxu0 %v4137
        %4878 = vmatmul.mubr.bf16.gmra.mxu0 %v3989
        %v4879 = vpop.f32.mrf.mxu0
        %v4880 = vadd.f32 0.0, %v4879
        %v4881 = vpop.f32.mrf.mxu0
        %v4882 = vadd.f32 0.0, %v4881
        %v4883 = vpop.f32.mrf.mxu0
        %v4884 = vadd.f32 0.0, %v4883
        %v4885 = vpop.f32.mrf.mxu0
        %v4886 = vadd.f32 0.0, %v4885
        %4887 = vmatprep.mubr.bf16.mxu0 %v4140
        %4888 = vmatmul.mubr.bf16.gmra.mxu0 %v3991
        %v4889 = vpop.f32.mrf.mxu0
        %v4890 = vadd.f32 0.0, %v4889
        %v4891 = vpop.f32.mrf.mxu0
        %v4892 = vadd.f32 0.0, %v4891
        %v4893 = vpop.f32.mrf.mxu0
        %v4894 = vadd.f32 0.0, %v4893
        %v4895 = vpop.f32.mrf.mxu0
        %v4896 = vadd.f32 0.0, %v4895
        %4897 = vmatprep.mubr.bf16.mxu0 %v4143
        %4898 = vmatmul.mubr.bf16.gmra.mxu0 %v3993
        %v4899 = vpop.f32.mrf.mxu0
        %v4900 = vadd.f32 0.0, %v4899
        %v4901 = vpop.f32.mrf.mxu0
        %v4902 = vadd.f32 0.0, %v4901
        %v4903 = vpop.f32.mrf.mxu0
        %v4904 = vadd.f32 0.0, %v4903
        %v4905 = vpop.f32.mrf.mxu0
        %v4906 = vadd.f32 0.0, %v4905
        %4907 = vmatprep.mubr.bf16.mxu0 %v4146
        %4908 = vmatmul.mubr.bf16.gmra.mxu0 %v3995
        %v4909 = vpop.f32.mrf.mxu0
        %v4910 = vadd.f32 0.0, %v4909
        %v4911 = vpop.f32.mrf.mxu0
        %v4912 = vadd.f32 0.0, %v4911
        %v4913 = vpop.f32.mrf.mxu0
        %v4914 = vadd.f32 0.0, %v4913
        %v4915 = vpop.f32.mrf.mxu0
        %v4916 = vadd.f32 0.0, %v4915
        %4917 = vdwg.mxu0
        %v4950 = vrot.slane %v4840, 2
        %v4951 = vrot.slane %v4844, 2
        %v4952 = vsel %vm1575, %v4950, %v4951
        %v4953 = vrot.slane %v4842, 2
        %v4954 = vrot.slane %v4846, 2
        %v4955 = vsel %vm1575, %v4953, %v4954
        %v4956 = vrot.slane %v4850, 2
        %v4957 = vsel %vm1575, %v4951, %v4956
        %v4958 = vrot.slane %v4852, 2
        %v4959 = vsel %vm1575, %v4954, %v4958
        %v4960 = vrot.slane %v4854, 2
        %v4961 = vsel %vm1575, %v4956, %v4960
        %v4962 = vrot.slane %v4856, 2
        %v4963 = vsel %vm1575, %v4958, %v4962
        %v4964 = vrot.slane %v4860, 2
        %v4965 = vsel %vm1575, %v4960, %v4964
        %v4966 = vrot.slane %v4862, 2
        %v4967 = vsel %vm1575, %v4962, %v4966
        %v4968 = vrot.slane %v4864, 2
        %v4969 = vsel %vm1575, %v4964, %v4968
        %v4970 = vrot.slane %v4866, 2
        %v4971 = vsel %vm1575, %v4966, %v4970
        %v4972 = vrot.slane %v4870, 2
        %v4973 = vsel %vm1575, %v4968, %v4972
        %v4974 = vrot.slane %v4872, 2
        %v4975 = vsel %vm1575, %v4970, %v4974
        %v4976 = vrot.slane %v4874, 2
        %v4977 = vsel %vm1575, %v4972, %v4976
        %v4978 = vrot.slane %v4876, 2
        %v4979 = vsel %vm1575, %v4974, %v4978
        %v4980 = vrot.slane %v4880, 2
        %v4981 = vsel %vm1575, %v4976, %v4980
        %v4982 = vrot.slane %v4882, 2
        %v4983 = vsel %vm1575, %v4978, %v4982
        %v4984 = vrot.slane %v4884, 2
        %v4985 = vsel %vm1575, %v4980, %v4984
        %v4986 = vrot.slane %v4886, 2
        %v4987 = vsel %vm1575, %v4982, %v4986
        %v4988 = vrot.slane %v4890, 2
        %v4989 = vsel %vm1575, %v4984, %v4988
        %v4990 = vrot.slane %v4892, 2
        %v4991 = vsel %vm1575, %v4986, %v4990
        %v4992 = vrot.slane %v4894, 2
        %v4993 = vsel %vm1575, %v4988, %v4992
        %v4994 = vrot.slane %v4896, 2
        %v4995 = vsel %vm1575, %v4990, %v4994
        %v4996 = vrot.slane %v4900, 2
        %v4997 = vsel %vm1575, %v4992, %v4996
        %v4998 = vrot.slane %v4902, 2
        %v4999 = vsel %vm1575, %v4994, %v4998
        %v5000 = vrot.slane %v4904, 2
        %v5001 = vsel %vm1575, %v4996, %v5000
        %v5002 = vrot.slane %v4906, 2
        %v5003 = vsel %vm1575, %v4998, %v5002
        %v5004 = vrot.slane %v4910, 2
        %v5005 = vsel %vm1575, %v5000, %v5004
        %v5006 = vrot.slane %v4912, 2
        %v5007 = vsel %vm1575, %v5002, %v5006
        %v5008 = vrot.slane %v4914, 2
        %v5009 = vsel %vm1575, %v5004, %v5008
        %v5010 = vrot.slane %v4916, 2
        %v5011 = vsel %vm1575, %v5006, %v5010
        %v5044 = vadd.f32 %v4640, %v4952
        %v5045 = vadd.f32 %v4641, %v4955
        %v5046 = vadd.f32 %v4642, %v4957
        %v5047 = vadd.f32 %v4643, %v4959
        %v5048 = vadd.f32 %v4644, %v4961
        %v5049 = vadd.f32 %v4645, %v4963
        %v5050 = vadd.f32 %v4646, %v4965
        %v5051 = vadd.f32 %v4647, %v4967
        %v5052 = vadd.f32 %v4648, %v4969
        %v5053 = vadd.f32 %v4649, %v4971
        %v5054 = vadd.f32 %v4650, %v4973
        %v5055 = vadd.f32 %v4651, %v4975
        %v5056 = vadd.f32 %v4652, %v4977
        %v5057 = vadd.f32 %v4653, %v4979
        %v5058 = vadd.f32 %v4654, %v4981
        %v5059 = vadd.f32 %v4655, %v4983
        %v5060 = vadd.f32 %v4656, %v4985
        %v5061 = vadd.f32 %v4657, %v4987
        %v5062 = vadd.f32 %v4658, %v4989
        %v5063 = vadd.f32 %v4659, %v4991
        %v5064 = vadd.f32 %v4660, %v4993
        %v5065 = vadd.f32 %v4661, %v4995
        %v5066 = vadd.f32 %v4662, %v4997
        %v5067 = vadd.f32 %v4663, %v4999
        %v5068 = vadd.f32 %v4664, %v5001
        %v5069 = vadd.f32 %v4665, %v5003
        %v5070 = vadd.f32 %v4666, %v5005
        %v5071 = vadd.f32 %v4667, %v5007
        %v5072 = vadd.f32 %v4668, %v5009
        %v5073 = vadd.f32 %v4669, %v5011
        %v5074 = vadd.f32 %v4670, %v5008
        %v5075 = vadd.f32 %v4671, %v5010
        %s5076 = scalar_lea.vmem %s4, 504
        %v5077 = vld [vmem:[%s5076] sm:$0xff]
        %v5078 = vld [vmem:[%s5076 + $0x8] sm:$0xff]
        %v5079 = vld [vmem:[%s5076 + $0x10] sm:$0xff]
        %v5080 = vld [vmem:[%s5076 + $0x18] sm:$0xff]
        %v5081 = vld [vmem:[%s5076 + $0x20] sm:$0xff]
        %v5082 = vld [vmem:[%s5076 + $0x28] sm:$0xff]
        %v5083 = vld [vmem:[%s5076 + $0x30] sm:$0xff]
        %v5084 = vld [vmem:[%s5076 + $0x38] sm:$0xff]
        %v5085 = vld [vmem:[%s5076 + $0x40] sm:$0xff]
        %v5086 = vld [vmem:[%s5076 + $0x48] sm:$0xff]
        %v5087 = vld [vmem:[%s5076 + $0x50] sm:$0xff]
        %v5088 = vld [vmem:[%s5076 + $0x58] sm:$0xff]
        %v5089 = vld [vmem:[%s5076 + $0x60] sm:$0xff]
        %v5090 = vld [vmem:[%s5076 + $0x68] sm:$0xff]
        %v5091 = vld [vmem:[%s5076 + $0x70] sm:$0xff]
        %v5092 = vld [vmem:[%s5076 + $0x78] sm:$0xff]
        %v5093 = vld [vmem:[%s5076 + $0x80] sm:$0xff]
        %v5094 = vld [vmem:[%s5076 + $0x88] sm:$0xff]
        %v5095 = vld [vmem:[%s5076 + $0x90] sm:$0xff]
        %v5096 = vld [vmem:[%s5076 + $0x98] sm:$0xff]
        %v5097 = vld [vmem:[%s5076 + $0xa0] sm:$0x11]
        %v5119 = vunpack.c.l.b16 %v5077
        %v5120 = vunpack.c.h.b16 %v5077
        %v5121 = vunpack.c.l.b16 %v5078
        %v5122 = vunpack.c.h.b16 %v5078
        %v5123 = vunpack.c.l.b16 %v5079
        %v5124 = vunpack.c.h.b16 %v5079
        %v5125 = vunpack.c.l.b16 %v5080
        %v5126 = vunpack.c.h.b16 %v5080
        %v5127 = vunpack.c.l.b16 %v5081
        %v5128 = vunpack.c.h.b16 %v5081
        %v5129 = vunpack.c.l.b16 %v5082
        %v5130 = vunpack.c.h.b16 %v5082
        %v5131 = vunpack.c.l.b16 %v5083
        %v5132 = vunpack.c.h.b16 %v5083
        %v5133 = vunpack.c.l.b16 %v5084
        %v5134 = vunpack.c.h.b16 %v5084
        %v5135 = vunpack.c.l.b16 %v5085
        %v5136 = vunpack.c.h.b16 %v5085
        %v5137 = vunpack.c.l.b16 %v5086
        %v5138 = vunpack.c.h.b16 %v5086
        %v5139 = vunpack.c.l.b16 %v5087
        %v5140 = vunpack.c.h.b16 %v5087
        %v5141 = vunpack.c.l.b16 %v5088
        %v5142 = vunpack.c.h.b16 %v5088
        %v5143 = vunpack.c.l.b16 %v5089
        %v5144 = vunpack.c.h.b16 %v5089
        %v5145 = vunpack.c.l.b16 %v5090
        %v5146 = vunpack.c.h.b16 %v5090
        %v5147 = vunpack.c.l.b16 %v5091
        %v5148 = vunpack.c.h.b16 %v5091
        %v5149 = vunpack.c.l.b16 %v5092
        %v5150 = vunpack.c.h.b16 %v5092
        %v5151 = vunpack.c.l.b16 %v5093
        %v5152 = vunpack.c.h.b16 %v5093
        %v5153 = vunpack.c.l.b16 %v5094
        %v5154 = vunpack.c.h.b16 %v5094
        %v5155 = vunpack.c.l.b16 %v5095
        %v5156 = vunpack.c.h.b16 %v5095
        %v5157 = vunpack.c.l.b16 %v5096
        %v5158 = vunpack.c.h.b16 %v5096
        %v5159 = vunpack.c.l.b16 %v5097
        %v5160 = vunpack.c.h.b16 %v5097
        %v5161 = vpack.c.b16 %v5121, %v5119
        %v5162 = vpack.c.b16 %v5122, %v5120
        %v5163 = vpack.c.b16 %v5125, %v5123
        %v5164 = vpack.c.b16 %v5126, %v5124
        %v5165 = vpack.c.b16 %v5129, %v5127
        %v5166 = vpack.c.b16 %v5130, %v5128
        %v5167 = vpack.c.b16 %v5133, %v5131
        %v5168 = vpack.c.b16 %v5134, %v5132
        %v5169 = vpack.c.b16 %v5137, %v5135
        %v5170 = vpack.c.b16 %v5138, %v5136
        %v5171 = vpack.c.b16 %v5141, %v5139
        %v5172 = vpack.c.b16 %v5142, %v5140
        %v5173 = vpack.c.b16 %v5145, %v5143
        %v5174 = vpack.c.b16 %v5146, %v5144
        %v5175 = vpack.c.b16 %v5149, %v5147
        %v5176 = vpack.c.b16 %v5150, %v5148
        %v5177 = vpack.c.b16 %v5153, %v5151
        %v5178 = vpack.c.b16 %v5154, %v5152
        %v5179 = vpack.c.b16 %v5157, %v5155
        %v5180 = vpack.c.b16 %v5158, %v5156
        %v5181 = vpack.c.b16 %v5159, %v5159
        %v5182 = vpack.c.b16 %v5160, %v5160
        %v5204 = vsel %vm4148, %v5181, 0
        %v5207 = vsel %vm4148, %v5182, 0
        %5209 = vmatprep.subr.bf16.mxu0 %v5176
        %5210 = vmatpush1.bf16.msra.mxu0 %v5175
        %5211 = vmatprep.subr.bf16.mxu0 %v5174
        %5212 = vmatpush1.bf16.msra.mxu0 %v5173
        %5213 = vmatprep.subr.bf16.mxu0 %v5172
        %5214 = vmatpush1.bf16.msra.mxu0 %v5171
        %5215 = vmatprep.subr.bf16.mxu0 %v5170
        %5216 = vmatpush1.bf16.msra.mxu0 %v5169
        %5217 = vmatprep.subr.bf16.mxu0 %v5168
        %5218 = vmatpush1.bf16.msra.mxu0 %v5167
        %5219 = vmatprep.subr.bf16.mxu0 %v5166
        %5220 = vmatpush1.bf16.msra.mxu0 %v5165
        %5221 = vmatprep.subr.bf16.mxu0 %v5164
        %5222 = vmatpush1.bf16.msra.mxu0 %v5163
        %5223 = vmatprep.subr.bf16.mxu0 %v5162
        %5224 = vmatpush1.bf16.msra.mxu0 %v5161
        %5225 = vmatprep.subr.bf16.mxu0 0
        %5226 = vmatpush2.bf16.msra.mxu0 0
        %5227 = vmatprep.subr.bf16.mxu0 0
        %5228 = vmatpush2.bf16.msra.mxu0 0
        %5229 = vmatprep.subr.bf16.mxu0 0
        %5230 = vmatpush2.bf16.msra.mxu0 0
        %5231 = vmatprep.subr.bf16.mxu0 0
        %5232 = vmatpush2.bf16.msra.mxu0 0
        %5233 = vmatprep.subr.bf16.mxu0 0
        %5234 = vmatpush2.bf16.msra.mxu0 0
        %5235 = vmatprep.subr.bf16.mxu0 %v5207
        %5236 = vmatpush2.bf16.msra.mxu0 %v5204
        %5237 = vmatprep.subr.bf16.mxu0 %v5180
        %5238 = vmatpush2.bf16.msra.mxu0 %v5179
        %5239 = vmatprep.subr.bf16.mxu0 %v5178
        %5240 = vmatpush2.bf16.msra.mxu0 %v5177
        %5241 = vmatprep.mubr.bf16.mxu0 %v4125
        %5242 = vmatmul.mubr.bf16.gmra.mxu0 %v3981
        %v5243 = vpop.f32.mrf.mxu0
        %v5244 = vadd.f32 0.0, %v5243
        %v5245 = vpop.f32.mrf.mxu0
        %v5246 = vadd.f32 0.0, %v5245
        %v5247 = vpop.f32.mrf.mxu0
        %v5248 = vadd.f32 0.0, %v5247
        %v5249 = vpop.f32.mrf.mxu0
        %v5250 = vadd.f32 0.0, %v5249
        %5251 = vmatprep.mubr.bf16.mxu0 %v4128
        %5252 = vmatmul.mubr.bf16.gmra.mxu0 %v3983
        %v5253 = vpop.f32.mrf.mxu0
        %v5254 = vadd.f32 0.0, %v5253
        %v5255 = vpop.f32.mrf.mxu0
        %v5256 = vadd.f32 0.0, %v5255
        %v5257 = vpop.f32.mrf.mxu0
        %v5258 = vadd.f32 0.0, %v5257
        %v5259 = vpop.f32.mrf.mxu0
        %v5260 = vadd.f32 0.0, %v5259
        %5261 = vmatprep.mubr.bf16.mxu0 %v4131
        %5262 = vmatmul.mubr.bf16.gmra.mxu0 %v3985
        %v5263 = vpop.f32.mrf.mxu0
        %v5264 = vadd.f32 0.0, %v5263
        %v5265 = vpop.f32.mrf.mxu0
        %v5266 = vadd.f32 0.0, %v5265
        %v5267 = vpop.f32.mrf.mxu0
        %v5268 = vadd.f32 0.0, %v5267
        %v5269 = vpop.f32.mrf.mxu0
        %v5270 = vadd.f32 0.0, %v5269
        %5271 = vmatprep.mubr.bf16.mxu0 %v4134
        %5272 = vmatmul.mubr.bf16.gmra.mxu0 %v3987
        %v5273 = vpop.f32.mrf.mxu0
        %v5274 = vadd.f32 0.0, %v5273
        %v5275 = vpop.f32.mrf.mxu0
        %v5276 = vadd.f32 0.0, %v5275
        %v5277 = vpop.f32.mrf.mxu0
        %v5278 = vadd.f32 0.0, %v5277
        %v5279 = vpop.f32.mrf.mxu0
        %v5280 = vadd.f32 0.0, %v5279
        %5281 = vmatprep.mubr.bf16.mxu0 %v4137
        %5282 = vmatmul.mubr.bf16.gmra.mxu0 %v3989
        %v5283 = vpop.f32.mrf.mxu0
        %v5284 = vadd.f32 0.0, %v5283
        %v5285 = vpop.f32.mrf.mxu0
        %v5286 = vadd.f32 0.0, %v5285
        %v5287 = vpop.f32.mrf.mxu0
        %v5288 = vadd.f32 0.0, %v5287
        %v5289 = vpop.f32.mrf.mxu0
        %v5290 = vadd.f32 0.0, %v5289
        %5291 = vmatprep.mubr.bf16.mxu0 %v4140
        %5292 = vmatmul.mubr.bf16.gmra.mxu0 %v3991
        %v5293 = vpop.f32.mrf.mxu0
        %v5294 = vadd.f32 0.0, %v5293
        %v5295 = vpop.f32.mrf.mxu0
        %v5296 = vadd.f32 0.0, %v5295
        %v5297 = vpop.f32.mrf.mxu0
        %v5298 = vadd.f32 0.0, %v5297
        %v5299 = vpop.f32.mrf.mxu0
        %v5300 = vadd.f32 0.0, %v5299
        %5301 = vmatprep.mubr.bf16.mxu0 %v4143
        %5302 = vmatmul.mubr.bf16.gmra.mxu0 %v3993
        %v5303 = vpop.f32.mrf.mxu0
        %v5304 = vadd.f32 0.0, %v5303
        %v5305 = vpop.f32.mrf.mxu0
        %v5306 = vadd.f32 0.0, %v5305
        %v5307 = vpop.f32.mrf.mxu0
        %v5308 = vadd.f32 0.0, %v5307
        %v5309 = vpop.f32.mrf.mxu0
        %v5310 = vadd.f32 0.0, %v5309
        %5311 = vmatprep.mubr.bf16.mxu0 %v4146
        %5312 = vmatmul.mubr.bf16.gmra.mxu0 %v3995
        %v5313 = vpop.f32.mrf.mxu0
        %v5314 = vadd.f32 0.0, %v5313
        %v5315 = vpop.f32.mrf.mxu0
        %v5316 = vadd.f32 0.0, %v5315
        %v5317 = vpop.f32.mrf.mxu0
        %v5318 = vadd.f32 0.0, %v5317
        %v5319 = vpop.f32.mrf.mxu0
        %v5320 = vadd.f32 0.0, %v5319
        %5321 = vdwg.mxu0
        %v5354 = vrot.slane %v5244, 3
        %v5355 = vrot.slane %v5248, 3
        %v5356 = vsel %vm2112, %v5354, %v5355
        %v5357 = vrot.slane %v5246, 3
        %v5358 = vrot.slane %v5250, 3
        %v5359 = vsel %vm2112, %v5357, %v5358
        %v5360 = vrot.slane %v5254, 3
        %v5361 = vsel %vm2112, %v5355, %v5360
        %v5362 = vrot.slane %v5256, 3
        %v5363 = vsel %vm2112, %v5358, %v5362
        %v5364 = vrot.slane %v5258, 3
        %v5365 = vsel %vm2112, %v5360, %v5364
        %v5366 = vrot.slane %v5260, 3
        %v5367 = vsel %vm2112, %v5362, %v5366
        %v5368 = vrot.slane %v5264, 3
        %v5369 = vsel %vm2112, %v5364, %v5368
        %v5370 = vrot.slane %v5266, 3
        %v5371 = vsel %vm2112, %v5366, %v5370
        %v5372 = vrot.slane %v5268, 3
        %v5373 = vsel %vm2112, %v5368, %v5372
        %v5374 = vrot.slane %v5270, 3
        %v5375 = vsel %vm2112, %v5370, %v5374
        %v5376 = vrot.slane %v5274, 3
        %v5377 = vsel %vm2112, %v5372, %v5376
        %v5378 = vrot.slane %v5276, 3
        %v5379 = vsel %vm2112, %v5374, %v5378
        %v5380 = vrot.slane %v5278, 3
        %v5381 = vsel %vm2112, %v5376, %v5380
        %v5382 = vrot.slane %v5280, 3
        %v5383 = vsel %vm2112, %v5378, %v5382
        %v5384 = vrot.slane %v5284, 3
        %v5385 = vsel %vm2112, %v5380, %v5384
        %v5386 = vrot.slane %v5286, 3
        %v5387 = vsel %vm2112, %v5382, %v5386
        %v5388 = vrot.slane %v5288, 3
        %v5389 = vsel %vm2112, %v5384, %v5388
        %v5390 = vrot.slane %v5290, 3
        %v5391 = vsel %vm2112, %v5386, %v5390
        %v5392 = vrot.slane %v5294, 3
        %v5393 = vsel %vm2112, %v5388, %v5392
        %v5394 = vrot.slane %v5296, 3
        %v5395 = vsel %vm2112, %v5390, %v5394
        %v5396 = vrot.slane %v5298, 3
        %v5397 = vsel %vm2112, %v5392, %v5396
        %v5398 = vrot.slane %v5300, 3
        %v5399 = vsel %vm2112, %v5394, %v5398
        %v5400 = vrot.slane %v5304, 3
        %v5401 = vsel %vm2112, %v5396, %v5400
        %v5402 = vrot.slane %v5306, 3
        %v5403 = vsel %vm2112, %v5398, %v5402
        %v5404 = vrot.slane %v5308, 3
        %v5405 = vsel %vm2112, %v5400, %v5404
        %v5406 = vrot.slane %v5310, 3
        %v5407 = vsel %vm2112, %v5402, %v5406
        %v5408 = vrot.slane %v5314, 3
        %v5409 = vsel %vm2112, %v5404, %v5408
        %v5410 = vrot.slane %v5316, 3
        %v5411 = vsel %vm2112, %v5406, %v5410
        %v5412 = vrot.slane %v5318, 3
        %v5413 = vsel %vm2112, %v5408, %v5412
        %v5414 = vrot.slane %v5320, 3
        %v5415 = vsel %vm2112, %v5410, %v5414
        %v5448 = vadd.f32 %v5044, %v5356
        %v5449 = vadd.f32 %v5045, %v5359
        %v5450 = vadd.f32 %v5046, %v5361
        %v5451 = vadd.f32 %v5047, %v5363
        %v5452 = vadd.f32 %v5048, %v5365
        %v5453 = vadd.f32 %v5049, %v5367
        %v5454 = vadd.f32 %v5050, %v5369
        %v5455 = vadd.f32 %v5051, %v5371
        %v5456 = vadd.f32 %v5052, %v5373
        %v5457 = vadd.f32 %v5053, %v5375
        %v5458 = vadd.f32 %v5054, %v5377
        %v5459 = vadd.f32 %v5055, %v5379
        %v5460 = vadd.f32 %v5056, %v5381
        %v5461 = vadd.f32 %v5057, %v5383
        %v5462 = vadd.f32 %v5058, %v5385
        %v5463 = vadd.f32 %v5059, %v5387
        %v5464 = vadd.f32 %v5060, %v5389
        %v5465 = vadd.f32 %v5061, %v5391
        %v5466 = vadd.f32 %v5062, %v5393
        %v5467 = vadd.f32 %v5063, %v5395
        %v5468 = vadd.f32 %v5064, %v5397
        %v5469 = vadd.f32 %v5065, %v5399
        %v5470 = vadd.f32 %v5066, %v5401
        %v5471 = vadd.f32 %v5067, %v5403
        %v5472 = vadd.f32 %v5068, %v5405
        %v5473 = vadd.f32 %v5069, %v5407
        %v5474 = vadd.f32 %v5070, %v5409
        %v5475 = vadd.f32 %v5071, %v5411
        %v5476 = vadd.f32 %v5072, %v5413
        %v5477 = vadd.f32 %v5073, %v5415
        %v5478 = vadd.f32 %v5074, %v5412
        %v5479 = vadd.f32 %v5075, %v5414
        %s5480 = scalar_lea.vmem %s4, 672
        %v5481 = vld [vmem:[%s5480] sm:$0xff]
        %v5482 = vld [vmem:[%s5480 + $0x8] sm:$0xff]
        %v5483 = vld [vmem:[%s5480 + $0x10] sm:$0xff]
        %v5484 = vld [vmem:[%s5480 + $0x18] sm:$0xff]
        %v5485 = vld [vmem:[%s5480 + $0x20] sm:$0xff]
        %v5486 = vld [vmem:[%s5480 + $0x28] sm:$0xff]
        %v5487 = vld [vmem:[%s5480 + $0x30] sm:$0xff]
        %v5488 = vld [vmem:[%s5480 + $0x38] sm:$0xff]
        %v5489 = vld [vmem:[%s5480 + $0x40] sm:$0xff]
        %v5490 = vld [vmem:[%s5480 + $0x48] sm:$0xff]
        %v5491 = vld [vmem:[%s5480 + $0x50] sm:$0xff]
        %v5492 = vld [vmem:[%s5480 + $0x58] sm:$0xff]
        %v5493 = vld [vmem:[%s5480 + $0x60] sm:$0xff]
        %v5494 = vld [vmem:[%s5480 + $0x68] sm:$0xff]
        %v5495 = vld [vmem:[%s5480 + $0x70] sm:$0xff]
        %v5496 = vld [vmem:[%s5480 + $0x78] sm:$0xff]
        %v5497 = vld [vmem:[%s5480 + $0x80] sm:$0xff]
        %v5498 = vld [vmem:[%s5480 + $0x88] sm:$0xff]
        %v5499 = vld [vmem:[%s5480 + $0x90] sm:$0xff]
        %v5500 = vld [vmem:[%s5480 + $0x98] sm:$0xff]
        %v5501 = vld [vmem:[%s5480 + $0xa0] sm:$0x11]
        %v5523 = vunpack.c.l.b16 %v5481
        %v5524 = vunpack.c.h.b16 %v5481
        %v5525 = vunpack.c.l.b16 %v5482
        %v5526 = vunpack.c.h.b16 %v5482
        %v5527 = vunpack.c.l.b16 %v5483
        %v5528 = vunpack.c.h.b16 %v5483
        %v5529 = vunpack.c.l.b16 %v5484
        %v5530 = vunpack.c.h.b16 %v5484
        %v5531 = vunpack.c.l.b16 %v5485
        %v5532 = vunpack.c.h.b16 %v5485
        %v5533 = vunpack.c.l.b16 %v5486
        %v5534 = vunpack.c.h.b16 %v5486
        %v5535 = vunpack.c.l.b16 %v5487
        %v5536 = vunpack.c.h.b16 %v5487
        %v5537 = vunpack.c.l.b16 %v5488
        %v5538 = vunpack.c.h.b16 %v5488
        %v5539 = vunpack.c.l.b16 %v5489
        %v5540 = vunpack.c.h.b16 %v5489
        %v5541 = vunpack.c.l.b16 %v5490
        %v5542 = vunpack.c.h.b16 %v5490
        %v5543 = vunpack.c.l.b16 %v5491
        %v5544 = vunpack.c.h.b16 %v5491
        %v5545 = vunpack.c.l.b16 %v5492
        %v5546 = vunpack.c.h.b16 %v5492
        %v5547 = vunpack.c.l.b16 %v5493
        %v5548 = vunpack.c.h.b16 %v5493
        %v5549 = vunpack.c.l.b16 %v5494
        %v5550 = vunpack.c.h.b16 %v5494
        %v5551 = vunpack.c.l.b16 %v5495
        %v5552 = vunpack.c.h.b16 %v5495
        %v5553 = vunpack.c.l.b16 %v5496
        %v5554 = vunpack.c.h.b16 %v5496
        %v5555 = vunpack.c.l.b16 %v5497
        %v5556 = vunpack.c.h.b16 %v5497
        %v5557 = vunpack.c.l.b16 %v5498
        %v5558 = vunpack.c.h.b16 %v5498
        %v5559 = vunpack.c.l.b16 %v5499
        %v5560 = vunpack.c.h.b16 %v5499
        %v5561 = vunpack.c.l.b16 %v5500
        %v5562 = vunpack.c.h.b16 %v5500
        %v5563 = vunpack.c.l.b16 %v5501
        %v5564 = vunpack.c.h.b16 %v5501
        %v5565 = vpack.c.b16 %v5525, %v5523
        %v5566 = vpack.c.b16 %v5526, %v5524
        %v5567 = vpack.c.b16 %v5529, %v5527
        %v5568 = vpack.c.b16 %v5530, %v5528
        %v5569 = vpack.c.b16 %v5533, %v5531
        %v5570 = vpack.c.b16 %v5534, %v5532
        %v5571 = vpack.c.b16 %v5537, %v5535
        %v5572 = vpack.c.b16 %v5538, %v5536
        %v5573 = vpack.c.b16 %v5541, %v5539
        %v5574 = vpack.c.b16 %v5542, %v5540
        %v5575 = vpack.c.b16 %v5545, %v5543
        %v5576 = vpack.c.b16 %v5546, %v5544
        %v5577 = vpack.c.b16 %v5549, %v5547
        %v5578 = vpack.c.b16 %v5550, %v5548
        %v5579 = vpack.c.b16 %v5553, %v5551
        %v5580 = vpack.c.b16 %v5554, %v5552
        %v5581 = vpack.c.b16 %v5557, %v5555
        %v5582 = vpack.c.b16 %v5558, %v5556
        %v5583 = vpack.c.b16 %v5561, %v5559
        %v5584 = vpack.c.b16 %v5562, %v5560
        %v5585 = vpack.c.b16 %v5563, %v5563
        %v5586 = vpack.c.b16 %v5564, %v5564
        %v5608 = vsel %vm4148, %v5585, 0
        %v5611 = vsel %vm4148, %v5586, 0
        %5613 = vmatprep.subr.bf16.mxu0 %v5580
        %5614 = vmatpush1.bf16.msra.mxu0 %v5579
        %5615 = vmatprep.subr.bf16.mxu0 %v5578
        %5616 = vmatpush1.bf16.msra.mxu0 %v5577
        %5617 = vmatprep.subr.bf16.mxu0 %v5576
        %5618 = vmatpush1.bf16.msra.mxu0 %v5575
        %5619 = vmatprep.subr.bf16.mxu0 %v5574
        %5620 = vmatpush1.bf16.msra.mxu0 %v5573
        %5621 = vmatprep.subr.bf16.mxu0 %v5572
        %5622 = vmatpush1.bf16.msra.mxu0 %v5571
        %5623 = vmatprep.subr.bf16.mxu0 %v5570
        %5624 = vmatpush1.bf16.msra.mxu0 %v5569
        %5625 = vmatprep.subr.bf16.mxu0 %v5568
        %5626 = vmatpush1.bf16.msra.mxu0 %v5567
        %5627 = vmatprep.subr.bf16.mxu0 %v5566
        %5628 = vmatpush1.bf16.msra.mxu0 %v5565
        %5629 = vmatprep.subr.bf16.mxu0 0
        %5630 = vmatpush2.bf16.msra.mxu0 0
        %5631 = vmatprep.subr.bf16.mxu0 0
        %5632 = vmatpush2.bf16.msra.mxu0 0
        %5633 = vmatprep.subr.bf16.mxu0 0
        %5634 = vmatpush2.bf16.msra.mxu0 0
        %5635 = vmatprep.subr.bf16.mxu0 0
        %5636 = vmatpush2.bf16.msra.mxu0 0
        %5637 = vmatprep.subr.bf16.mxu0 0
        %5638 = vmatpush2.bf16.msra.mxu0 0
        %5639 = vmatprep.subr.bf16.mxu0 %v5611
        %5640 = vmatpush2.bf16.msra.mxu0 %v5608
        %5641 = vmatprep.subr.bf16.mxu0 %v5584
        %5642 = vmatpush2.bf16.msra.mxu0 %v5583
        %5643 = vmatprep.subr.bf16.mxu0 %v5582
        %5644 = vmatpush2.bf16.msra.mxu0 %v5581
        %5645 = vmatprep.mubr.bf16.mxu0 %v4125
        %5646 = vmatmul.mubr.bf16.gmra.mxu0 %v3981
        %v5647 = vpop.f32.mrf.mxu0
        %v5648 = vadd.f32 0.0, %v5647
        %v5649 = vpop.f32.mrf.mxu0
        %v5650 = vadd.f32 0.0, %v5649
        %v5651 = vpop.f32.mrf.mxu0
        %v5652 = vadd.f32 0.0, %v5651
        %v5653 = vpop.f32.mrf.mxu0
        %v5654 = vadd.f32 0.0, %v5653
        %5655 = vmatprep.mubr.bf16.mxu0 %v4128
        %5656 = vmatmul.mubr.bf16.gmra.mxu0 %v3983
        %v5657 = vpop.f32.mrf.mxu0
        %v5658 = vadd.f32 0.0, %v5657
        %v5659 = vpop.f32.mrf.mxu0
        %v5660 = vadd.f32 0.0, %v5659
        %v5661 = vpop.f32.mrf.mxu0
        %v5662 = vadd.f32 0.0, %v5661
        %v5663 = vpop.f32.mrf.mxu0
        %v5664 = vadd.f32 0.0, %v5663
        %5665 = vmatprep.mubr.bf16.mxu0 %v4131
        %5666 = vmatmul.mubr.bf16.gmra.mxu0 %v3985
        %v5667 = vpop.f32.mrf.mxu0
        %v5668 = vadd.f32 0.0, %v5667
        %v5669 = vpop.f32.mrf.mxu0
        %v5670 = vadd.f32 0.0, %v5669
        %v5671 = vpop.f32.mrf.mxu0
        %v5672 = vadd.f32 0.0, %v5671
        %v5673 = vpop.f32.mrf.mxu0
        %v5674 = vadd.f32 0.0, %v5673
        %5675 = vmatprep.mubr.bf16.mxu0 %v4134
        %5676 = vmatmul.mubr.bf16.gmra.mxu0 %v3987
        %v5677 = vpop.f32.mrf.mxu0
        %v5678 = vadd.f32 0.0, %v5677
        %v5679 = vpop.f32.mrf.mxu0
        %v5680 = vadd.f32 0.0, %v5679
        %v5681 = vpop.f32.mrf.mxu0
        %v5682 = vadd.f32 0.0, %v5681
        %v5683 = vpop.f32.mrf.mxu0
        %v5684 = vadd.f32 0.0, %v5683
        %5685 = vmatprep.mubr.bf16.mxu0 %v4137
        %5686 = vmatmul.mubr.bf16.gmra.mxu0 %v3989
        %v5687 = vpop.f32.mrf.mxu0
        %v5688 = vadd.f32 0.0, %v5687
        %v5689 = vpop.f32.mrf.mxu0
        %v5690 = vadd.f32 0.0, %v5689
        %v5691 = vpop.f32.mrf.mxu0
        %v5692 = vadd.f32 0.0, %v5691
        %v5693 = vpop.f32.mrf.mxu0
        %v5694 = vadd.f32 0.0, %v5693
        %5695 = vmatprep.mubr.bf16.mxu0 %v4140
        %5696 = vmatmul.mubr.bf16.gmra.mxu0 %v3991
        %v5697 = vpop.f32.mrf.mxu0
        %v5698 = vadd.f32 0.0, %v5697
        %v5699 = vpop.f32.mrf.mxu0
        %v5700 = vadd.f32 0.0, %v5699
        %v5701 = vpop.f32.mrf.mxu0
        %v5702 = vadd.f32 0.0, %v5701
        %v5703 = vpop.f32.mrf.mxu0
        %v5704 = vadd.f32 0.0, %v5703
        %5705 = vmatprep.mubr.bf16.mxu0 %v4143
        %5706 = vmatmul.mubr.bf16.gmra.mxu0 %v3993
        %v5707 = vpop.f32.mrf.mxu0
        %v5708 = vadd.f32 0.0, %v5707
        %v5709 = vpop.f32.mrf.mxu0
        %v5710 = vadd.f32 0.0, %v5709
        %v5711 = vpop.f32.mrf.mxu0
        %v5712 = vadd.f32 0.0, %v5711
        %v5713 = vpop.f32.mrf.mxu0
        %v5714 = vadd.f32 0.0, %v5713
        %5715 = vmatprep.mubr.bf16.mxu0 %v4146
        %5716 = vmatmul.mubr.bf16.gmra.mxu0 %v3995
        %v5717 = vpop.f32.mrf.mxu0
        %v5718 = vadd.f32 0.0, %v5717
        %v5719 = vpop.f32.mrf.mxu0
        %v5720 = vadd.f32 0.0, %v5719
        %v5721 = vpop.f32.mrf.mxu0
        %v5722 = vadd.f32 0.0, %v5721
        %v5723 = vpop.f32.mrf.mxu0
        %v5724 = vadd.f32 0.0, %v5723
        %5725 = vdwg.mxu0
        %v5758 = vrot.slane %v5648, 4
        %v5759 = vrot.slane %v5652, 4
        %v5760 = vsel %vm2649, %v5758, %v5759
        %v5761 = vrot.slane %v5650, 4
        %v5762 = vrot.slane %v5654, 4
        %v5763 = vsel %vm2649, %v5761, %v5762
        %v5764 = vrot.slane %v5658, 4
        %v5765 = vsel %vm2649, %v5759, %v5764
        %v5766 = vrot.slane %v5660, 4
        %v5767 = vsel %vm2649, %v5762, %v5766
        %v5768 = vrot.slane %v5662, 4
        %v5769 = vsel %vm2649, %v5764, %v5768
        %v5770 = vrot.slane %v5664, 4
        %v5771 = vsel %vm2649, %v5766, %v5770
        %v5772 = vrot.slane %v5668, 4
        %v5773 = vsel %vm2649, %v5768, %v5772
        %v5774 = vrot.slane %v5670, 4
        %v5775 = vsel %vm2649, %v5770, %v5774
        %v5776 = vrot.slane %v5672, 4
        %v5777 = vsel %vm2649, %v5772, %v5776
        %v5778 = vrot.slane %v5674, 4
        %v5779 = vsel %vm2649, %v5774, %v5778
        %v5780 = vrot.slane %v5678, 4
        %v5781 = vsel %vm2649, %v5776, %v5780
        %v5782 = vrot.slane %v5680, 4
        %v5783 = vsel %vm2649, %v5778, %v5782
        %v5784 = vrot.slane %v5682, 4
        %v5785 = vsel %vm2649, %v5780, %v5784
        %v5786 = vrot.slane %v5684, 4
        %v5787 = vsel %vm2649, %v5782, %v5786
        %v5788 = vrot.slane %v5688, 4
        %v5789 = vsel %vm2649, %v5784, %v5788
        %v5790 = vrot.slane %v5690, 4
        %v5791 = vsel %vm2649, %v5786, %v5790
        %v5792 = vrot.slane %v5692, 4
        %v5793 = vsel %vm2649, %v5788, %v5792
        %v5794 = vrot.slane %v5694, 4
        %v5795 = vsel %vm2649, %v5790, %v5794
        %v5796 = vrot.slane %v5698, 4
        %v5797 = vsel %vm2649, %v5792, %v5796
        %v5798 = vrot.slane %v5700, 4
        %v5799 = vsel %vm2649, %v5794, %v5798
        %v5800 = vrot.slane %v5702, 4
        %v5801 = vsel %vm2649, %v5796, %v5800
        %v5802 = vrot.slane %v5704, 4
        %v5803 = vsel %vm2649, %v5798, %v5802
        %v5804 = vrot.slane %v5708, 4
        %v5805 = vsel %vm2649, %v5800, %v5804
        %v5806 = vrot.slane %v5710, 4
        %v5807 = vsel %vm2649, %v5802, %v5806
        %v5808 = vrot.slane %v5712, 4
        %v5809 = vsel %vm2649, %v5804, %v5808
        %v5810 = vrot.slane %v5714, 4
        %v5811 = vsel %vm2649, %v5806, %v5810
        %v5812 = vrot.slane %v5718, 4
        %v5813 = vsel %vm2649, %v5808, %v5812
        %v5814 = vrot.slane %v5720, 4
        %v5815 = vsel %vm2649, %v5810, %v5814
        %v5816 = vrot.slane %v5722, 4
        %v5817 = vsel %vm2649, %v5812, %v5816
        %v5818 = vrot.slane %v5724, 4
        %v5819 = vsel %vm2649, %v5814, %v5818
        %v5852 = vadd.f32 %v5448, %v5760
        %v5853 = vadd.f32 %v5449, %v5763
        %v5854 = vadd.f32 %v5450, %v5765
        %v5855 = vadd.f32 %v5451, %v5767
        %v5856 = vadd.f32 %v5452, %v5769
        %v5857 = vadd.f32 %v5453, %v5771
        %v5858 = vadd.f32 %v5454, %v5773
        %v5859 = vadd.f32 %v5455, %v5775
        %v5860 = vadd.f32 %v5456, %v5777
        %v5861 = vadd.f32 %v5457, %v5779
        %v5862 = vadd.f32 %v5458, %v5781
        %v5863 = vadd.f32 %v5459, %v5783
        %v5864 = vadd.f32 %v5460, %v5785
        %v5865 = vadd.f32 %v5461, %v5787
        %v5866 = vadd.f32 %v5462, %v5789
        %v5867 = vadd.f32 %v5463, %v5791
        %v5868 = vadd.f32 %v5464, %v5793
        %v5869 = vadd.f32 %v5465, %v5795
        %v5870 = vadd.f32 %v5466, %v5797
        %v5871 = vadd.f32 %v5467, %v5799
        %v5872 = vadd.f32 %v5468, %v5801
        %v5873 = vadd.f32 %v5469, %v5803
        %v5874 = vadd.f32 %v5470, %v5805
        %v5875 = vadd.f32 %v5471, %v5807
        %v5876 = vadd.f32 %v5472, %v5809
        %v5877 = vadd.f32 %v5473, %v5811
        %v5878 = vadd.f32 %v5474, %v5813
        %v5879 = vadd.f32 %v5475, %v5815
        %v5880 = vadd.f32 %v5476, %v5817
        %v5881 = vadd.f32 %v5477, %v5819
        %v5882 = vadd.f32 %v5478, %v5816
        %v5883 = vadd.f32 %v5479, %v5818
        %v5884 = vld [vmem:[%s5] sm:$0x3]
        %v5886 = vlaneseq
        %v5887 = vshrl.u32 %v5886, 7
        %v5888 = vsub.s32 0, %v5887
        %v5889 = vrot.slane %v5884, %v5888
        %v5890 = vlaneseq
        %v5891 = vshrl.u32 %v5890, 7
        %v5892 = vsub.s32 1, %v5891
        %v5893 = vrot.slane %v5884, %v5892
        %v5896 = vadd.f32 %v5852, %v5889
        %v5897 = vadd.f32 %v5853, %v5893
        %v5898 = vadd.f32 %v5854, %v5889
        %v5899 = vadd.f32 %v5855, %v5893
        %v5900 = vadd.f32 %v5856, %v5889
        %v5901 = vadd.f32 %v5857, %v5893
        %v5902 = vadd.f32 %v5858, %v5889
        %v5903 = vadd.f32 %v5859, %v5893
        %v5904 = vadd.f32 %v5860, %v5889
        %v5905 = vadd.f32 %v5861, %v5893
        %v5906 = vadd.f32 %v5862, %v5889
        %v5907 = vadd.f32 %v5863, %v5893
        %v5908 = vadd.f32 %v5864, %v5889
        %v5909 = vadd.f32 %v5865, %v5893
        %v5910 = vadd.f32 %v5866, %v5889
        %v5911 = vadd.f32 %v5867, %v5893
        %v5912 = vadd.f32 %v5868, %v5889
        %v5913 = vadd.f32 %v5869, %v5893
        %v5914 = vadd.f32 %v5870, %v5889
        %v5915 = vadd.f32 %v5871, %v5893
        %v5916 = vadd.f32 %v5872, %v5889
        %v5917 = vadd.f32 %v5873, %v5893
        %v5918 = vadd.f32 %v5874, %v5889
        %v5919 = vadd.f32 %v5875, %v5893
        %v5920 = vadd.f32 %v5876, %v5889
        %v5921 = vadd.f32 %v5877, %v5893
        %v5922 = vadd.f32 %v5878, %v5889
        %v5923 = vadd.f32 %v5879, %v5893
        %v5924 = vadd.f32 %v5880, %v5889
        %v5925 = vadd.f32 %v5881, %v5893
        %v5926 = vadd.f32 %v5882, %v5889
        %v5927 = vadd.f32 %v5883, %v5893
        %v5928 = vmax.f32 %v5896, 0.0
        %v5929 = vmax.f32 %v5897, 0.0
        %v5930 = vmax.f32 %v5898, 0.0
        %v5931 = vmax.f32 %v5899, 0.0
        %v5932 = vmax.f32 %v5900, 0.0
        %v5933 = vmax.f32 %v5901, 0.0
        %v5934 = vmax.f32 %v5902, 0.0
        %v5935 = vmax.f32 %v5903, 0.0
        %v5936 = vmax.f32 %v5904, 0.0
        %v5937 = vmax.f32 %v5905, 0.0
        %v5938 = vmax.f32 %v5906, 0.0
        %v5939 = vmax.f32 %v5907, 0.0
        %v5940 = vmax.f32 %v5908, 0.0
        %v5941 = vmax.f32 %v5909, 0.0
        %v5942 = vmax.f32 %v5910, 0.0
        %v5943 = vmax.f32 %v5911, 0.0
        %v5944 = vmax.f32 %v5912, 0.0
        %v5945 = vmax.f32 %v5913, 0.0
        %v5946 = vmax.f32 %v5914, 0.0
        %v5947 = vmax.f32 %v5915, 0.0
        %v5948 = vmax.f32 %v5916, 0.0
        %v5949 = vmax.f32 %v5917, 0.0
        %v5950 = vmax.f32 %v5918, 0.0
        %v5951 = vmax.f32 %v5919, 0.0
        %v5952 = vmax.f32 %v5920, 0.0
        %v5953 = vmax.f32 %v5921, 0.0
        %v5954 = vmax.f32 %v5922, 0.0
        %v5955 = vmax.f32 %v5923, 0.0
        %v5956 = vmax.f32 %v5924, 0.0
        %v5957 = vmax.f32 %v5925, 0.0
        %v5958 = vmax.f32 %v5926, 0.0
        %v5959 = vmax.f32 %v5927, 0.0
        %5992 = vrot.lane.b32.xlu0 %v5928, 112
        %v5993 = vpop.permute.xlu0 %5992
        %5994 = vrot.lane.b32.xlu0 %v5929, 112
        %v5995 = vpop.permute.xlu0 %5994
        %5996 = vrot.lane.b32.xlu0 %v5930, 112
        %v5997 = vpop.permute.xlu0 %5996
        %5998 = vrot.lane.b32.xlu0 %v5931, 112
        %v5999 = vpop.permute.xlu0 %5998
        %6000 = vrot.lane.b32.xlu0 %v5932, 112
        %v6001 = vpop.permute.xlu0 %6000
        %6002 = vrot.lane.b32.xlu0 %v5933, 112
        %v6003 = vpop.permute.xlu0 %6002
        %6004 = vrot.lane.b32.xlu0 %v5934, 112
        %v6005 = vpop.permute.xlu0 %6004
        %6006 = vrot.lane.b32.xlu0 %v5935, 112
        %v6007 = vpop.permute.xlu0 %6006
        %6008 = vrot.lane.b32.xlu0 %v5936, 112
        %v6009 = vpop.permute.xlu0 %6008
        %6010 = vrot.lane.b32.xlu0 %v5937, 112
        %v6011 = vpop.permute.xlu0 %6010
        %6012 = vrot.lane.b32.xlu0 %v5938, 112
        %v6013 = vpop.permute.xlu0 %6012
        %6014 = vrot.lane.b32.xlu0 %v5939, 112
        %v6015 = vpop.permute.xlu0 %6014
        %6016 = vrot.lane.b32.xlu0 %v5940, 112
        %v6017 = vpop.permute.xlu0 %6016
        %6018 = vrot.lane.b32.xlu0 %v5941, 112
        %v6019 = vpop.permute.xlu0 %6018
        %6020 = vrot.lane.b32.xlu0 %v5942, 112
        %v6021 = vpop.permute.xlu0 %6020
        %6022 = vrot.lane.b32.xlu0 %v5943, 112
        %v6023 = vpop.permute.xlu0 %6022
        %6024 = vrot.lane.b32.xlu0 %v5944, 112
        %v6025 = vpop.permute.xlu0 %6024
        %6026 = vrot.lane.b32.xlu0 %v5945, 112
        %v6027 = vpop.permute.xlu0 %6026
        %6028 = vrot.lane.b32.xlu0 %v5946, 112
        %v6029 = vpop.permute.xlu0 %6028
        %6030 = vrot.lane.b32.xlu0 %v5947, 112
        %v6031 = vpop.permute.xlu0 %6030
        %6032 = vrot.lane.b32.xlu0 %v5948, 112
        %v6033 = vpop.permute.xlu0 %6032
        %6034 = vrot.lane.b32.xlu0 %v5949, 112
        %v6035 = vpop.permute.xlu0 %6034
        %6036 = vrot.lane.b32.xlu0 %v5950, 112
        %v6037 = vpop.permute.xlu0 %6036
        %6038 = vrot.lane.b32.xlu0 %v5951, 112
        %v6039 = vpop.permute.xlu0 %6038
        %6040 = vrot.lane.b32.xlu0 %v5952, 112
        %v6041 = vpop.permute.xlu0 %6040
        %6042 = vrot.lane.b32.xlu0 %v5953, 112
        %v6043 = vpop.permute.xlu0 %6042
        %6044 = vrot.lane.b32.xlu0 %v5954, 112
        %v6045 = vpop.permute.xlu0 %6044
        %6046 = vrot.lane.b32.xlu0 %v5955, 112
        %v6047 = vpop.permute.xlu0 %6046
        %6048 = vrot.lane.b32.xlu0 %v5956, 112
        %v6049 = vpop.permute.xlu0 %6048
        %6050 = vrot.lane.b32.xlu0 %v5957, 112
        %v6051 = vpop.permute.xlu0 %6050
        %6052 = vrot.lane.b32.xlu0 %v5958, 112
        %v6053 = vpop.permute.xlu0 %6052
        %6054 = vrot.lane.b32.xlu0 %v5959, 112
        %v6055 = vpop.permute.xlu0 %6054
        %vm6056 = vcmask 916480
        %v6057 = vsel %vm6056, %v5993, %v5995
        %v6058 = vsel %vm6056, %v5997, %v5999
        %v6059 = vsel %vm6056, %v6001, %v6003
        %v6060 = vsel %vm6056, %v6005, %v6007
        %v6061 = vsel %vm6056, %v6009, %v6011
        %v6062 = vsel %vm6056, %v6013, %v6015
        %v6063 = vsel %vm6056, %v6017, %v6019
        %v6064 = vsel %vm6056, %v6021, %v6023
        %v6065 = vsel %vm6056, %v6025, %v6027
        %v6066 = vsel %vm6056, %v6029, %v6031
        %v6067 = vsel %vm6056, %v6033, %v6035
        %v6068 = vsel %vm6056, %v6037, %v6039
        %v6069 = vsel %vm6056, %v6041, %v6043
        %v6070 = vsel %vm6056, %v6045, %v6047
        %v6071 = vsel %vm6056, %v6049, %v6051
        %v6072 = vsel %vm6056, %v6053, %v6055
        %v6105 = vmax.f32 %v5928, %v6057
        %v6106 = vmax.f32 %v5929, %v5995
        %v6107 = vmax.f32 %v5930, %v6058
        %v6108 = vmax.f32 %v5931, %v5999
        %v6109 = vmax.f32 %v5932, %v6059
        %v6110 = vmax.f32 %v5933, %v6003
        %v6111 = vmax.f32 %v5934, %v6060
        %v6112 = vmax.f32 %v5935, %v6007
        %v6113 = vmax.f32 %v5936, %v6061
        %v6114 = vmax.f32 %v5937, %v6011
        %v6115 = vmax.f32 %v5938, %v6062
        %v6116 = vmax.f32 %v5939, %v6015
        %v6117 = vmax.f32 %v5940, %v6063
        %v6118 = vmax.f32 %v5941, %v6019
        %v6119 = vmax.f32 %v5942, %v6064
        %v6120 = vmax.f32 %v5943, %v6023
        %v6121 = vmax.f32 %v5944, %v6065
        %v6122 = vmax.f32 %v5945, %v6027
        %v6123 = vmax.f32 %v5946, %v6066
        %v6124 = vmax.f32 %v5947, %v6031
        %v6125 = vmax.f32 %v5948, %v6067
        %v6126 = vmax.f32 %v5949, %v6035
        %v6127 = vmax.f32 %v5950, %v6068
        %v6128 = vmax.f32 %v5951, %v6039
        %v6129 = vmax.f32 %v5952, %v6069
        %v6130 = vmax.f32 %v5953, %v6043
        %v6131 = vmax.f32 %v5954, %v6070
        %v6132 = vmax.f32 %v5955, %v6047
        %v6133 = vmax.f32 %v5956, %v6071
        %v6134 = vmax.f32 %v5957, %v6051
        %v6135 = vmax.f32 %v5958, %v6072
        %v6136 = vmax.f32 %v5959, %v6055
        %v6169 = vrot.slane %v6105, 1
        %v6170 = vrot.slane %v6107, 1
        %v6171 = vsel %vm1038, %v6169, %v6170
        %v6172 = vrot.slane %v6106, 1
        %v6173 = vrot.slane %v6108, 1
        %v6174 = vsel %vm1038, %v6172, %v6173
        %v6175 = vrot.slane %v6109, 1
        %v6176 = vsel %vm1038, %v6170, %v6175
        %v6177 = vrot.slane %v6110, 1
        %v6178 = vsel %vm1038, %v6173, %v6177
        %v6179 = vrot.slane %v6111, 1
        %v6180 = vsel %vm1038, %v6175, %v6179
        %v6181 = vrot.slane %v6112, 1
        %v6182 = vsel %vm1038, %v6177, %v6181
        %v6183 = vrot.slane %v6113, 1
        %v6184 = vsel %vm1038, %v6179, %v6183
        %v6185 = vrot.slane %v6114, 1
        %v6186 = vsel %vm1038, %v6181, %v6185
        %v6187 = vrot.slane %v6115, 1
        %v6188 = vsel %vm1038, %v6183, %v6187
        %v6189 = vrot.slane %v6116, 1
        %v6190 = vsel %vm1038, %v6185, %v6189
        %v6191 = vrot.slane %v6117, 1
        %v6192 = vsel %vm1038, %v6187, %v6191
        %v6193 = vrot.slane %v6118, 1
        %v6194 = vsel %vm1038, %v6189, %v6193
        %v6195 = vrot.slane %v6119, 1
        %v6196 = vsel %vm1038, %v6191, %v6195
        %v6197 = vrot.slane %v6120, 1
        %v6198 = vsel %vm1038, %v6193, %v6197
        %v6199 = vrot.slane %v6121, 1
        %v6200 = vsel %vm1038, %v6195, %v6199
        %v6201 = vrot.slane %v6122, 1
        %v6202 = vsel %vm1038, %v6197, %v6201
        %v6203 = vrot.slane %v6123, 1
        %v6204 = vsel %vm1038, %v6199, %v6203
        %v6205 = vrot.slane %v6124, 1
        %v6206 = vsel %vm1038, %v6201, %v6205
        %v6207 = vrot.slane %v6125, 1
        %v6208 = vsel %vm1038, %v6203, %v6207
        %v6209 = vrot.slane %v6126, 1
        %v6210 = vsel %vm1038, %v6205, %v6209
        %v6211 = vrot.slane %v6127, 1
        %v6212 = vsel %vm1038, %v6207, %v6211
        %v6213 = vrot.slane %v6128, 1
        %v6214 = vsel %vm1038, %v6209, %v6213
        %v6215 = vrot.slane %v6129, 1
        %v6216 = vsel %vm1038, %v6211, %v6215
        %v6217 = vrot.slane %v6130, 1
        %v6218 = vsel %vm1038, %v6213, %v6217
        %v6219 = vrot.slane %v6131, 1
        %v6220 = vsel %vm1038, %v6215, %v6219
        %v6221 = vrot.slane %v6132, 1
        %v6222 = vsel %vm1038, %v6217, %v6221
        %v6223 = vrot.slane %v6133, 1
        %v6224 = vsel %vm1038, %v6219, %v6223
        %v6225 = vrot.slane %v6134, 1
        %v6226 = vsel %vm1038, %v6221, %v6225
        %v6227 = vrot.slane %v6135, 1
        %v6228 = vsel %vm1038, %v6223, %v6227
        %v6229 = vrot.slane %v6136, 1
        %v6230 = vsel %vm1038, %v6225, %v6229
        %v6263 = vmax.f32 %v6105, %v6171
        %v6264 = vmax.f32 %v6106, %v6174
        %v6265 = vmax.f32 %v6107, %v6176
        %v6266 = vmax.f32 %v6108, %v6178
        %v6267 = vmax.f32 %v6109, %v6180
        %v6268 = vmax.f32 %v6110, %v6182
        %v6269 = vmax.f32 %v6111, %v6184
        %v6270 = vmax.f32 %v6112, %v6186
        %v6271 = vmax.f32 %v6113, %v6188
        %v6272 = vmax.f32 %v6114, %v6190
        %v6273 = vmax.f32 %v6115, %v6192
        %v6274 = vmax.f32 %v6116, %v6194
        %v6275 = vmax.f32 %v6117, %v6196
        %v6276 = vmax.f32 %v6118, %v6198
        %v6277 = vmax.f32 %v6119, %v6200
        %v6278 = vmax.f32 %v6120, %v6202
        %v6279 = vmax.f32 %v6121, %v6204
        %v6280 = vmax.f32 %v6122, %v6206
        %v6281 = vmax.f32 %v6123, %v6208
        %v6282 = vmax.f32 %v6124, %v6210
        %v6283 = vmax.f32 %v6125, %v6212
        %v6284 = vmax.f32 %v6126, %v6214
        %v6285 = vmax.f32 %v6127, %v6216
        %v6286 = vmax.f32 %v6128, %v6218
        %v6287 = vmax.f32 %v6129, %v6220
        %v6288 = vmax.f32 %v6130, %v6222
        %v6289 = vmax.f32 %v6131, %v6224
        %v6290 = vmax.f32 %v6132, %v6226
        %v6291 = vmax.f32 %v6133, %v6228
        %v6292 = vmax.f32 %v6134, %v6230
        %v6293 = vmax.f32 %v6135, %v6227
        %v6294 = vmax.f32 %v6136, %v6229
        %v6295 = vpack.c.bf16 %v6265, %v6263
        %v6296 = vpack.c.bf16 %v6266, %v6264
        %v6297 = vpack.c.bf16 %v6269, %v6267
        %v6298 = vpack.c.bf16 %v6270, %v6268
        %v6299 = vpack.c.bf16 %v6273, %v6271
        %v6300 = vpack.c.bf16 %v6274, %v6272
        %v6301 = vpack.c.bf16 %v6277, %v6275
        %v6302 = vpack.c.bf16 %v6278, %v6276
        %v6303 = vpack.c.bf16 %v6281, %v6279
        %v6304 = vpack.c.bf16 %v6282, %v6280
        %v6305 = vpack.c.bf16 %v6285, %v6283
        %v6306 = vpack.c.bf16 %v6286, %v6284
        %v6307 = vpack.c.bf16 %v6289, %v6287
        %v6308 = vpack.c.bf16 %v6290, %v6288
        %v6309 = vpack.c.bf16 %v6293, %v6291
        %v6310 = vpack.c.bf16 %v6294, %v6292
        %v6311 = vld [vmem:[%s6] sm:$0xf]
        %v6312 = vld [vmem:[%s6 + $0x4] sm:$0xf]
        %v6313 = vld [vmem:[%s6 + $0x8] sm:$0xf]
        %v6314 = vld [vmem:[%s6 + $0xc] sm:$0xf]
        %v6315 = vld [vmem:[%s6 + $0x10] sm:$0xf]
        %v6321 = vunpack.c.l.b16 %v6311
        %v6322 = vunpack.c.l.b16 %v6312
        %v6323 = vunpack.c.l.b16 %v6313
        %v6324 = vunpack.c.l.b16 %v6314
        %v6325 = vunpack.c.l.b16 %v6315
        %v6326 = vpack.c.b16 %v6322, %v6321
        %v6327 = vpack.c.b16 %v6324, %v6323
        %v6328 = vpack.c.b16 %v6325, %v6325
        %v6330 = vsel %vm3835, %v6326, 0
        %v6333 = vsel %vm3835, %v6327, 0
        %v6336 = vsel %vm3835, %v6328, 0
        %v6339 = vand.u32 %v6309, %v3861
        %v6342 = vand.u32 %v6310, %v3861
        %6344 = vmatprep.subr.bf16.mxu0 %v6342
        %6345 = vmatpush1.bf16.msra.mxu0 %v6339
        %6346 = vmatprep.subr.bf16.mxu0 %v6308
        %6347 = vmatpush1.bf16.msra.mxu0 %v6307
        %6348 = vmatprep.subr.bf16.mxu0 %v6306
        %6349 = vmatpush1.bf16.msra.mxu0 %v6305
        %6350 = vmatprep.subr.bf16.mxu0 %v6304
        %6351 = vmatpush1.bf16.msra.mxu0 %v6303
        %6352 = vmatprep.subr.bf16.mxu0 %v6302
        %6353 = vmatpush1.bf16.msra.mxu0 %v6301
        %6354 = vmatprep.subr.bf16.mxu0 %v6300
        %6355 = vmatpush1.bf16.msra.mxu0 %v6299
        %6356 = vmatprep.subr.bf16.mxu0 %v6298
        %6357 = vmatpush1.bf16.msra.mxu0 %v6297
        %6358 = vmatprep.subr.bf16.mxu0 %v6296
        %6359 = vmatpush1.bf16.msra.mxu0 %v6295
        %6360 = vmatprep.subr.bf16.mxu0 0
        %6361 = vmatpush2.bf16.msra.mxu0 0
        %6362 = vmatprep.subr.bf16.mxu0 0
        %6363 = vmatpush2.bf16.msra.mxu0 0
        %6364 = vmatprep.subr.bf16.mxu0 0
        %6365 = vmatpush2.bf16.msra.mxu0 0
        %6366 = vmatprep.subr.bf16.mxu0 0
        %6367 = vmatpush2.bf16.msra.mxu0 0
        %6368 = vmatprep.subr.bf16.mxu0 0
        %6369 = vmatpush2.bf16.msra.mxu0 0
        %6370 = vmatprep.subr.bf16.mxu0 0
        %6371 = vmatpush2.bf16.msra.mxu0 0
        %6372 = vmatprep.subr.bf16.mxu0 0
        %6373 = vmatpush2.bf16.msra.mxu0 0
        %6374 = vmatprep.subr.bf16.mxu0 0
        %6375 = vmatpush2.bf16.msra.mxu0 0
        %6376 = vmatprep.mubr.bf16.mxu0 0
        %6377 = vmatmul.mubr.bf16.gmra.mxu0 %v6330
        %v6378 = vpop.f32.mrf.mxu0
        %v6379 = vadd.f32 0.0, %v6378
        %v6380 = vpop.f32.mrf.mxu0
        %v6381 = vadd.f32 0.0, %v6380
        %v6382 = vpop.f32.mrf.mxu0
        %v6383 = vadd.f32 0.0, %v6382
        %v6384 = vpop.f32.mrf.mxu0
        %v6385 = vadd.f32 0.0, %v6384
        %6386 = vmatprep.mubr.bf16.mxu0 0
        %6387 = vmatmul.mubr.bf16.gmra.mxu0 %v6333
        %v6388 = vpop.f32.mrf.mxu0
        %v6389 = vadd.f32 0.0, %v6388
        %v6390 = vpop.f32.mrf.mxu0
        %v6391 = vadd.f32 0.0, %v6390
        %v6392 = vpop.f32.mrf.mxu0
        %v6393 = vadd.f32 0.0, %v6392
        %v6394 = vpop.f32.mrf.mxu0
        %v6395 = vadd.f32 0.0, %v6394
        %6396 = vmatprep.mubr.bf16.mxu0 0
        %6397 = vmatmul.mubr.bf16.gmra.mxu0 %v6336
        %v6398 = vpop.f32.mrf.mxu0
        %v6399 = vadd.f32 0.0, %v6398
        %v6400 = vpop.f32.mrf.mxu0
        %v6401 = vadd.f32 0.0, %v6400
        %v6402 = vpop.f32.mrf.mxu0
        %v6403 = vpop.f32.mrf.mxu0
        %6404 = vdwg.mxu0
        %v6405 = vpack.c.bf16 %v6383, %v6379
        %v6406 = vpack.c.bf16 %v6385, %v6381
        %v6407 = vpack.c.bf16 %v6393, %v6389
        %v6408 = vpack.c.bf16 %v6395, %v6391
        %v6409 = vpack.c.bf16 %v6399, %v6399
        %v6410 = vpack.c.bf16 %v6401, %v6401
        %v6411 = vld [vmem:[%s8] sm:$0x1]
        %v6412 = vld [vmem:[%s7] sm:$0xf]
        %v6413 = vld [vmem:[%s7 + $0x4] sm:$0xf]
        %v6414 = vld [vmem:[%s7 + $0x8] sm:$0xf]
        %v6415 = vld [vmem:[%s7 + $0xc] sm:$0xf]
        %v6416 = vld [vmem:[%s7 + $0x10] sm:$0xf]
        %v6417 = vld [vmem:[%s7 + $0x14] sm:$0xf]
        %v6418 = vld [vmem:[%s7 + $0x18] sm:$0xf]
        %v6419 = vld [vmem:[%s7 + $0x1c] sm:$0xf]
        %v6420 = vld [vmem:[%s7 + $0x20] sm:$0xf]
        %v6421 = vld [vmem:[%s7 + $0x24] sm:$0xf]
        %v6422 = vld [vmem:[%s7 + $0x28] sm:$0xf]
        %v6423 = vld [vmem:[%s7 + $0x2c] sm:$0xf]
        %v6424 = vld [vmem:[%s7 + $0x30] sm:$0xf]
        %v6425 = vld [vmem:[%s7 + $0x34] sm:$0xf]
        %v6426 = vld [vmem:[%s7 + $0x38] sm:$0xf]
        %v6427 = vld [vmem:[%s7 + $0x3c] sm:$0xf]
        %v6428 = vld [vmem:[%s7 + $0x40] sm:$0xf]
        %v6429 = vld [vmem:[%s7 + $0x44] sm:$0xf]
        %v6448 = vunpack.c.l.b16 %v6412
        %v6449 = vunpack.c.l.b16 %v6413
        %v6450 = vunpack.c.l.b16 %v6414
        %v6451 = vunpack.c.l.b16 %v6415
        %v6452 = vunpack.c.l.b16 %v6416
        %v6453 = vunpack.c.l.b16 %v6417
        %v6454 = vunpack.c.l.b16 %v6418
        %v6455 = vunpack.c.l.b16 %v6419
        %v6456 = vunpack.c.l.b16 %v6420
        %v6457 = vunpack.c.l.b16 %v6421
        %v6458 = vunpack.c.l.b16 %v6422
        %v6459 = vunpack.c.l.b16 %v6423
        %v6460 = vunpack.c.l.b16 %v6424
        %v6461 = vunpack.c.l.b16 %v6425
        %v6462 = vunpack.c.l.b16 %v6426
        %v6463 = vunpack.c.l.b16 %v6427
        %v6464 = vunpack.c.l.b16 %v6428
        %v6465 = vunpack.c.l.b16 %v6429
        %v6466 = vpack.c.b16 %v6449, %v6448
        %v6467 = vpack.c.b16 %v6451, %v6450
        %v6468 = vpack.c.b16 %v6453, %v6452
        %v6469 = vpack.c.b16 %v6455, %v6454
        %v6470 = vpack.c.b16 %v6457, %v6456
        %v6471 = vpack.c.b16 %v6459, %v6458
        %v6472 = vpack.c.b16 %v6461, %v6460
        %v6473 = vpack.c.b16 %v6463, %v6462
        %v6474 = vpack.c.b16 %v6465, %v6464
        %vm6484 = vcmask 130048
        %v6486 = vsel %vm6484, %v6406, 0
        %6488 = vmatprep.subr.bf16.mxu0 0
        %6489 = vmatpush1.bf16.msra.mxu0 %v6473
        %6490 = vmatprep.subr.bf16.mxu0 0
        %6491 = vmatpush1.bf16.msra.mxu0 %v6472
        %6492 = vmatprep.subr.bf16.mxu0 0
        %6493 = vmatpush1.bf16.msra.mxu0 %v6471
        %6494 = vmatprep.subr.bf16.mxu0 0
        %6495 = vmatpush1.bf16.msra.mxu0 %v6470
        %6496 = vmatprep.subr.bf16.mxu0 0
        %6497 = vmatpush1.bf16.msra.mxu0 %v6469
        %6498 = vmatprep.subr.bf16.mxu0 0
        %6499 = vmatpush1.bf16.msra.mxu0 %v6468
        %6500 = vmatprep.subr.bf16.mxu0 0
        %6501 = vmatpush1.bf16.msra.mxu0 %v6467
        %6502 = vmatprep.subr.bf16.mxu0 0
        %6503 = vmatpush1.bf16.msra.mxu0 %v6466
        %6504 = vmatprep.subr.bf16.mxu0 0
        %6505 = vmatpush2.bf16.msra.mxu0 0
        %6506 = vmatprep.subr.bf16.mxu0 0
        %6507 = vmatpush2.bf16.msra.mxu0 0
        %6508 = vmatprep.subr.bf16.mxu0 0
        %6509 = vmatpush2.bf16.msra.mxu0 0
        %6510 = vmatprep.subr.bf16.mxu0 0
        %6511 = vmatpush2.bf16.msra.mxu0 0
        %6512 = vmatprep.subr.bf16.mxu0 0
        %6513 = vmatpush2.bf16.msra.mxu0 0
        %6514 = vmatprep.subr.bf16.mxu0 0
        %6515 = vmatpush2.bf16.msra.mxu0 0
        %6516 = vmatprep.subr.bf16.mxu0 0
        %6517 = vmatpush2.bf16.msra.mxu0 0
        %6518 = vmatprep.subr.bf16.mxu0 0
        %6519 = vmatpush2.bf16.msra.mxu0 %v6474
        %6520 = vmatprep.mubr.bf16.mxu0 %v6486
        %6521 = vmatmul.mubr.bf16.gmra.mxu0 %v6405
        %v6522 = vpop.f32.mrf.mxu0
        %v6523 = vadd.f32 0.0, %v6522
        %v6524 = vpop.f32.mrf.mxu0
        %v6525 = vpop.f32.mrf.mxu0
        %v6526 = vpop.f32.mrf.mxu0
        %6527 = vdwg.mxu0
        %v6529 = vlaneseq
        %v6530 = vshrl.u32 %v6529, 7
        %v6531 = vsub.s32 0, %v6530
        %v6532 = vrot.slane %v6411, %v6531
        %v6534 = vadd.f32 %v6532, %v6523
        %s6535 = scalar_lea.vmem %s7, 72
        %v6536 = vld [vmem:[%s6535] sm:$0xf]
        %v6537 = vld [vmem:[%s6535 + $0x4] sm:$0xf]
        %v6538 = vld [vmem:[%s6535 + $0x8] sm:$0xf]
        %v6539 = vld [vmem:[%s6535 + $0xc] sm:$0xf]
        %v6540 = vld [vmem:[%s6535 + $0x10] sm:$0xf]
        %v6541 = vld [vmem:[%s6535 + $0x14] sm:$0xf]
        %v6542 = vld [vmem:[%s6535 + $0x18] sm:$0xf]
        %v6543 = vld [vmem:[%s6535 + $0x1c] sm:$0xf]
        %v6544 = vld [vmem:[%s6535 + $0x20] sm:$0xf]
        %v6545 = vld [vmem:[%s6535 + $0x24] sm:$0xf]
        %v6546 = vld [vmem:[%s6535 + $0x28] sm:$0xf]
        %v6547 = vld [vmem:[%s6535 + $0x2c] sm:$0xf]
        %v6548 = vld [vmem:[%s6535 + $0x30] sm:$0xf]
        %v6549 = vld [vmem:[%s6535 + $0x34] sm:$0xf]
        %v6550 = vld [vmem:[%s6535 + $0x38] sm:$0xf]
        %v6551 = vld [vmem:[%s6535 + $0x3c] sm:$0xf]
        %v6552 = vld [vmem:[%s6535 + $0x40] sm:$0xf]
        %v6553 = vld [vmem:[%s6535 + $0x44] sm:$0xf]
        %v6556 = vrot.slane %v6405, 4
        %v6557 = vrot.slane %v6406, 4
        %v6577 = vunpack.c.l.b16 %v6536
        %v6578 = vunpack.c.l.b16 %v6537
        %v6579 = vunpack.c.l.b16 %v6538
        %v6580 = vunpack.c.l.b16 %v6539
        %v6581 = vunpack.c.l.b16 %v6540
        %v6582 = vunpack.c.l.b16 %v6541
        %v6583 = vunpack.c.l.b16 %v6542
        %v6584 = vunpack.c.l.b16 %v6543
        %v6585 = vunpack.c.l.b16 %v6544
        %v6586 = vunpack.c.l.b16 %v6545
        %v6587 = vunpack.c.l.b16 %v6546
        %v6588 = vunpack.c.l.b16 %v6547
        %v6589 = vunpack.c.l.b16 %v6548
        %v6590 = vunpack.c.l.b16 %v6549
        %v6591 = vunpack.c.l.b16 %v6550
        %v6592 = vunpack.c.l.b16 %v6551
        %v6593 = vunpack.c.l.b16 %v6552
        %v6594 = vunpack.c.l.b16 %v6553
        %v6595 = vpack.c.b16 %v6578, %v6577
        %v6596 = vpack.c.b16 %v6580, %v6579
        %v6597 = vpack.c.b16 %v6582, %v6581
        %v6598 = vpack.c.b16 %v6584, %v6583
        %v6599 = vpack.c.b16 %v6586, %v6585
        %v6600 = vpack.c.b16 %v6588, %v6587
        %v6601 = vpack.c.b16 %v6590, %v6589
        %v6602 = vpack.c.b16 %v6592, %v6591
        %v6603 = vpack.c.b16 %v6594, %v6593
        %v6614 = vsel %vm6484, %v6557, 0
        %6616 = vmatprep.subr.bf16.mxu0 0
        %6617 = vmatpush1.bf16.msra.mxu0 %v6602
        %6618 = vmatprep.subr.bf16.mxu0 0
        %6619 = vmatpush1.bf16.msra.mxu0 %v6601
        %6620 = vmatprep.subr.bf16.mxu0 0
        %6621 = vmatpush1.bf16.msra.mxu0 %v6600
        %6622 = vmatprep.subr.bf16.mxu0 0
        %6623 = vmatpush1.bf16.msra.mxu0 %v6599
        %6624 = vmatprep.subr.bf16.mxu0 0
        %6625 = vmatpush1.bf16.msra.mxu0 %v6598
        %6626 = vmatprep.subr.bf16.mxu0 0
        %6627 = vmatpush1.bf16.msra.mxu0 %v6597
        %6628 = vmatprep.subr.bf16.mxu0 0
        %6629 = vmatpush1.bf16.msra.mxu0 %v6596
        %6630 = vmatprep.subr.bf16.mxu0 0
        %6631 = vmatpush1.bf16.msra.mxu0 %v6595
        %6632 = vmatprep.subr.bf16.mxu0 0
        %6633 = vmatpush2.bf16.msra.mxu0 0
        %6634 = vmatprep.subr.bf16.mxu0 0
        %6635 = vmatpush2.bf16.msra.mxu0 0
        %6636 = vmatprep.subr.bf16.mxu0 0
        %6637 = vmatpush2.bf16.msra.mxu0 0
        %6638 = vmatprep.subr.bf16.mxu0 0
        %6639 = vmatpush2.bf16.msra.mxu0 0
        %6640 = vmatprep.subr.bf16.mxu0 0
        %6641 = vmatpush2.bf16.msra.mxu0 0
        %6642 = vmatprep.subr.bf16.mxu0 0
        %6643 = vmatpush2.bf16.msra.mxu0 0
        %6644 = vmatprep.subr.bf16.mxu0 0
        %6645 = vmatpush2.bf16.msra.mxu0 0
        %6646 = vmatprep.subr.bf16.mxu0 0
        %6647 = vmatpush2.bf16.msra.mxu0 %v6603
        %6648 = vmatprep.mubr.bf16.mxu0 %v6614
        %6649 = vmatmul.mubr.bf16.gmra.mxu0 %v6556
        %v6650 = vpop.f32.mrf.mxu0
        %v6651 = vadd.f32 0.0, %v6650
        %v6652 = vpop.f32.mrf.mxu0
        %v6653 = vpop.f32.mrf.mxu0
        %v6654 = vpop.f32.mrf.mxu0
        %6655 = vdwg.mxu0
        %v6656 = vadd.f32 %v6534, %v6651
        %s6657 = scalar_lea.vmem %s7, 144
        %v6658 = vld [vmem:[%s6657] sm:$0xf]
        %v6659 = vld [vmem:[%s6657 + $0x4] sm:$0xf]
        %v6660 = vld [vmem:[%s6657 + $0x8] sm:$0xf]
        %v6661 = vld [vmem:[%s6657 + $0xc] sm:$0xf]
        %v6662 = vld [vmem:[%s6657 + $0x10] sm:$0xf]
        %v6663 = vld [vmem:[%s6657 + $0x14] sm:$0xf]
        %v6664 = vld [vmem:[%s6657 + $0x18] sm:$0xf]
        %v6665 = vld [vmem:[%s6657 + $0x1c] sm:$0xf]
        %v6666 = vld [vmem:[%s6657 + $0x20] sm:$0xf]
        %v6667 = vld [vmem:[%s6657 + $0x24] sm:$0xf]
        %v6668 = vld [vmem:[%s6657 + $0x28] sm:$0xf]
        %v6669 = vld [vmem:[%s6657 + $0x2c] sm:$0xf]
        %v6670 = vld [vmem:[%s6657 + $0x30] sm:$0xf]
        %v6671 = vld [vmem:[%s6657 + $0x34] sm:$0xf]
        %v6672 = vld [vmem:[%s6657 + $0x38] sm:$0xf]
        %v6673 = vld [vmem:[%s6657 + $0x3c] sm:$0xf]
        %v6674 = vld [vmem:[%s6657 + $0x40] sm:$0xf]
        %v6675 = vld [vmem:[%s6657 + $0x44] sm:$0xf]
        %v6694 = vunpack.c.l.b16 %v6658
        %v6695 = vunpack.c.l.b16 %v6659
        %v6696 = vunpack.c.l.b16 %v6660
        %v6697 = vunpack.c.l.b16 %v6661
        %v6698 = vunpack.c.l.b16 %v6662
        %v6699 = vunpack.c.l.b16 %v6663
        %v6700 = vunpack.c.l.b16 %v6664
        %v6701 = vunpack.c.l.b16 %v6665
        %v6702 = vunpack.c.l.b16 %v6666
        %v6703 = vunpack.c.l.b16 %v6667
        %v6704 = vunpack.c.l.b16 %v6668
        %v6705 = vunpack.c.l.b16 %v6669
        %v6706 = vunpack.c.l.b16 %v6670
        %v6707 = vunpack.c.l.b16 %v6671
        %v6708 = vunpack.c.l.b16 %v6672
        %v6709 = vunpack.c.l.b16 %v6673
        %v6710 = vunpack.c.l.b16 %v6674
        %v6711 = vunpack.c.l.b16 %v6675
        %v6712 = vpack.c.b16 %v6695, %v6694
        %v6713 = vpack.c.b16 %v6697, %v6696
        %v6714 = vpack.c.b16 %v6699, %v6698
        %v6715 = vpack.c.b16 %v6701, %v6700
        %v6716 = vpack.c.b16 %v6703, %v6702
        %v6717 = vpack.c.b16 %v6705, %v6704
        %v6718 = vpack.c.b16 %v6707, %v6706
        %v6719 = vpack.c.b16 %v6709, %v6708
        %v6720 = vpack.c.b16 %v6711, %v6710
        %v6731 = vsel %vm6484, %v6408, 0
        %6733 = vmatprep.subr.bf16.mxu0 0
        %6734 = vmatpush1.bf16.msra.mxu0 %v6719
        %6735 = vmatprep.subr.bf16.mxu0 0
        %6736 = vmatpush1.bf16.msra.mxu0 %v6718
        %6737 = vmatprep.subr.bf16.mxu0 0
        %6738 = vmatpush1.bf16.msra.mxu0 %v6717
        %6739 = vmatprep.subr.bf16.mxu0 0
        %6740 = vmatpush1.bf16.msra.mxu0 %v6716
        %6741 = vmatprep.subr.bf16.mxu0 0
        %6742 = vmatpush1.bf16.msra.mxu0 %v6715
        %6743 = vmatprep.subr.bf16.mxu0 0
        %6744 = vmatpush1.bf16.msra.mxu0 %v6714
        %6745 = vmatprep.subr.bf16.mxu0 0
        %6746 = vmatpush1.bf16.msra.mxu0 %v6713
        %6747 = vmatprep.subr.bf16.mxu0 0
        %6748 = vmatpush1.bf16.msra.mxu0 %v6712
        %6749 = vmatprep.subr.bf16.mxu0 0
        %6750 = vmatpush2.bf16.msra.mxu0 0
        %6751 = vmatprep.subr.bf16.mxu0 0
        %6752 = vmatpush2.bf16.msra.mxu0 0
        %6753 = vmatprep.subr.bf16.mxu0 0
        %6754 = vmatpush2.bf16.msra.mxu0 0
        %6755 = vmatprep.subr.bf16.mxu0 0
        %6756 = vmatpush2.bf16.msra.mxu0 0
        %6757 = vmatprep.subr.bf16.mxu0 0
        %6758 = vmatpush2.bf16.msra.mxu0 0
        %6759 = vmatprep.subr.bf16.mxu0 0
        %6760 = vmatpush2.bf16.msra.mxu0 0
        %6761 = vmatprep.subr.bf16.mxu0 0
        %6762 = vmatpush2.bf16.msra.mxu0 0
        %6763 = vmatprep.subr.bf16.mxu0 0
        %6764 = vmatpush2.bf16.msra.mxu0 %v6720
        %6765 = vmatprep.mubr.bf16.mxu0 %v6731
        %6766 = vmatmul.mubr.bf16.gmra.mxu0 %v6407
        %v6767 = vpop.f32.mrf.mxu0
        %v6768 = vadd.f32 0.0, %v6767
        %v6769 = vpop.f32.mrf.mxu0
        %v6770 = vpop.f32.mrf.mxu0
        %v6771 = vpop.f32.mrf.mxu0
        %6772 = vdwg.mxu0
        %v6773 = vadd.f32 %v6656, %v6768
        %s6774 = scalar_lea.vmem %s7, 216
        %v6775 = vld [vmem:[%s6774] sm:$0xf]
        %v6776 = vld [vmem:[%s6774 + $0x4] sm:$0xf]
        %v6777 = vld [vmem:[%s6774 + $0x8] sm:$0xf]
        %v6778 = vld [vmem:[%s6774 + $0xc] sm:$0xf]
        %v6779 = vld [vmem:[%s6774 + $0x10] sm:$0xf]
        %v6780 = vld [vmem:[%s6774 + $0x14] sm:$0xf]
        %v6781 = vld [vmem:[%s6774 + $0x18] sm:$0xf]
        %v6782 = vld [vmem:[%s6774 + $0x1c] sm:$0xf]
        %v6783 = vld [vmem:[%s6774 + $0x20] sm:$0xf]
        %v6784 = vld [vmem:[%s6774 + $0x24] sm:$0xf]
        %v6785 = vld [vmem:[%s6774 + $0x28] sm:$0xf]
        %v6786 = vld [vmem:[%s6774 + $0x2c] sm:$0xf]
        %v6787 = vld [vmem:[%s6774 + $0x30] sm:$0xf]
        %v6788 = vld [vmem:[%s6774 + $0x34] sm:$0xf]
        %v6789 = vld [vmem:[%s6774 + $0x38] sm:$0xf]
        %v6790 = vld [vmem:[%s6774 + $0x3c] sm:$0xf]
        %v6791 = vld [vmem:[%s6774 + $0x40] sm:$0xf]
        %v6792 = vld [vmem:[%s6774 + $0x44] sm:$0xf]
        %v6795 = vrot.slane %v6407, 4
        %v6796 = vrot.slane %v6408, 4
        %v6816 = vunpack.c.l.b16 %v6775
        %v6817 = vunpack.c.l.b16 %v6776
        %v6818 = vunpack.c.l.b16 %v6777
        %v6819 = vunpack.c.l.b16 %v6778
        %v6820 = vunpack.c.l.b16 %v6779
        %v6821 = vunpack.c.l.b16 %v6780
        %v6822 = vunpack.c.l.b16 %v6781
        %v6823 = vunpack.c.l.b16 %v6782
        %v6824 = vunpack.c.l.b16 %v6783
        %v6825 = vunpack.c.l.b16 %v6784
        %v6826 = vunpack.c.l.b16 %v6785
        %v6827 = vunpack.c.l.b16 %v6786
        %v6828 = vunpack.c.l.b16 %v6787
        %v6829 = vunpack.c.l.b16 %v6788
        %v6830 = vunpack.c.l.b16 %v6789
        %v6831 = vunpack.c.l.b16 %v6790
        %v6832 = vunpack.c.l.b16 %v6791
        %v6833 = vunpack.c.l.b16 %v6792
        %v6834 = vpack.c.b16 %v6817, %v6816
        %v6835 = vpack.c.b16 %v6819, %v6818
        %v6836 = vpack.c.b16 %v6821, %v6820
        %v6837 = vpack.c.b16 %v6823, %v6822
        %v6838 = vpack.c.b16 %v6825, %v6824
        %v6839 = vpack.c.b16 %v6827, %v6826
        %v6840 = vpack.c.b16 %v6829, %v6828
        %v6841 = vpack.c.b16 %v6831, %v6830
        %v6842 = vpack.c.b16 %v6833, %v6832
        %v6853 = vsel %vm6484, %v6796, 0
        %6855 = vmatprep.subr.bf16.mxu0 0
        %6856 = vmatpush1.bf16.msra.mxu0 %v6841
        %6857 = vmatprep.subr.bf16.mxu0 0
        %6858 = vmatpush1.bf16.msra.mxu0 %v6840
        %6859 = vmatprep.subr.bf16.mxu0 0
        %6860 = vmatpush1.bf16.msra.mxu0 %v6839
        %6861 = vmatprep.subr.bf16.mxu0 0
        %6862 = vmatpush1.bf16.msra.mxu0 %v6838
        %6863 = vmatprep.subr.bf16.mxu0 0
        %6864 = vmatpush1.bf16.msra.mxu0 %v6837
        %6865 = vmatprep.subr.bf16.mxu0 0
        %6866 = vmatpush1.bf16.msra.mxu0 %v6836
        %6867 = vmatprep.subr.bf16.mxu0 0
        %6868 = vmatpush1.bf16.msra.mxu0 %v6835
        %6869 = vmatprep.subr.bf16.mxu0 0
        %6870 = vmatpush1.bf16.msra.mxu0 %v6834
        %6871 = vmatprep.subr.bf16.mxu0 0
        %6872 = vmatpush2.bf16.msra.mxu0 0
        %6873 = vmatprep.subr.bf16.mxu0 0
        %6874 = vmatpush2.bf16.msra.mxu0 0
        %6875 = vmatprep.subr.bf16.mxu0 0
        %6876 = vmatpush2.bf16.msra.mxu0 0
        %6877 = vmatprep.subr.bf16.mxu0 0
        %6878 = vmatpush2.bf16.msra.mxu0 0
        %6879 = vmatprep.subr.bf16.mxu0 0
        %6880 = vmatpush2.bf16.msra.mxu0 0
        %6881 = vmatprep.subr.bf16.mxu0 0
        %6882 = vmatpush2.bf16.msra.mxu0 0
        %6883 = vmatprep.subr.bf16.mxu0 0
        %6884 = vmatpush2.bf16.msra.mxu0 0
        %6885 = vmatprep.subr.bf16.mxu0 0
        %6886 = vmatpush2.bf16.msra.mxu0 %v6842
        %6887 = vmatprep.mubr.bf16.mxu0 %v6853
        %6888 = vmatmul.mubr.bf16.gmra.mxu0 %v6795
        %v6889 = vpop.f32.mrf.mxu0
        %v6890 = vadd.f32 0.0, %v6889
        %v6891 = vpop.f32.mrf.mxu0
        %v6892 = vpop.f32.mrf.mxu0
        %v6893 = vpop.f32.mrf.mxu0
        %6894 = vdwg.mxu0
        %v6895 = vadd.f32 %v6773, %v6890
        %s6896 = scalar_lea.vmem %s7, 288
        %v6897 = vld [vmem:[%s6896] sm:$0xf]
        %v6898 = vld [vmem:[%s6896 + $0x4] sm:$0xf]
        %v6899 = vld [vmem:[%s6896 + $0x8] sm:$0xf]
        %v6900 = vld [vmem:[%s6896 + $0xc] sm:$0xf]
        %v6901 = vld [vmem:[%s6896 + $0x10] sm:$0xf]
        %v6902 = vld [vmem:[%s6896 + $0x14] sm:$0xf]
        %v6903 = vld [vmem:[%s6896 + $0x18] sm:$0xf]
        %v6904 = vld [vmem:[%s6896 + $0x1c] sm:$0xf]
        %v6905 = vld [vmem:[%s6896 + $0x20] sm:$0xf]
        %v6906 = vld [vmem:[%s6896 + $0x24] sm:$0xf]
        %v6907 = vld [vmem:[%s6896 + $0x28] sm:$0xf]
        %v6908 = vld [vmem:[%s6896 + $0x2c] sm:$0xf]
        %v6909 = vld [vmem:[%s6896 + $0x30] sm:$0xf]
        %v6910 = vld [vmem:[%s6896 + $0x34] sm:$0xf]
        %v6911 = vld [vmem:[%s6896 + $0x38] sm:$0xf]
        %v6912 = vld [vmem:[%s6896 + $0x3c] sm:$0xf]
        %v6913 = vld [vmem:[%s6896 + $0x40] sm:$0xf]
        %v6914 = vld [vmem:[%s6896 + $0x44] sm:$0xf]
        %v6933 = vunpack.c.l.b16 %v6897
        %v6934 = vunpack.c.l.b16 %v6898
        %v6935 = vunpack.c.l.b16 %v6899
        %v6936 = vunpack.c.l.b16 %v6900
        %v6937 = vunpack.c.l.b16 %v6901
        %v6938 = vunpack.c.l.b16 %v6902
        %v6939 = vunpack.c.l.b16 %v6903
        %v6940 = vunpack.c.l.b16 %v6904
        %v6941 = vunpack.c.l.b16 %v6905
        %v6942 = vunpack.c.l.b16 %v6906
        %v6943 = vunpack.c.l.b16 %v6907
        %v6944 = vunpack.c.l.b16 %v6908
        %v6945 = vunpack.c.l.b16 %v6909
        %v6946 = vunpack.c.l.b16 %v6910
        %v6947 = vunpack.c.l.b16 %v6911
        %v6948 = vunpack.c.l.b16 %v6912
        %v6949 = vunpack.c.l.b16 %v6913
        %v6950 = vunpack.c.l.b16 %v6914
        %v6951 = vpack.c.b16 %v6934, %v6933
        %v6952 = vpack.c.b16 %v6936, %v6935
        %v6953 = vpack.c.b16 %v6938, %v6937
        %v6954 = vpack.c.b16 %v6940, %v6939
        %v6955 = vpack.c.b16 %v6942, %v6941
        %v6956 = vpack.c.b16 %v6944, %v6943
        %v6957 = vpack.c.b16 %v6946, %v6945
        %v6958 = vpack.c.b16 %v6948, %v6947
        %v6959 = vpack.c.b16 %v6950, %v6949
        %v6970 = vsel %vm6484, %v6410, 0
        %6972 = vmatprep.subr.bf16.mxu0 0
        %6973 = vmatpush1.bf16.msra.mxu0 %v6958
        %6974 = vmatprep.subr.bf16.mxu0 0
        %6975 = vmatpush1.bf16.msra.mxu0 %v6957
        %6976 = vmatprep.subr.bf16.mxu0 0
        %6977 = vmatpush1.bf16.msra.mxu0 %v6956
        %6978 = vmatprep.subr.bf16.mxu0 0
        %6979 = vmatpush1.bf16.msra.mxu0 %v6955
        %6980 = vmatprep.subr.bf16.mxu0 0
        %6981 = vmatpush1.bf16.msra.mxu0 %v6954
        %6982 = vmatprep.subr.bf16.mxu0 0
        %6983 = vmatpush1.bf16.msra.mxu0 %v6953
        %6984 = vmatprep.subr.bf16.mxu0 0
        %6985 = vmatpush1.bf16.msra.mxu0 %v6952
        %6986 = vmatprep.subr.bf16.mxu0 0
        %6987 = vmatpush1.bf16.msra.mxu0 %v6951
        %6988 = vmatprep.subr.bf16.mxu0 0
        %6989 = vmatpush2.bf16.msra.mxu0 0
        %6990 = vmatprep.subr.bf16.mxu0 0
        %6991 = vmatpush2.bf16.msra.mxu0 0
        %6992 = vmatprep.subr.bf16.mxu0 0
        %6993 = vmatpush2.bf16.msra.mxu0 0
        %6994 = vmatprep.subr.bf16.mxu0 0
        %6995 = vmatpush2.bf16.msra.mxu0 0
        %6996 = vmatprep.subr.bf16.mxu0 0
        %6997 = vmatpush2.bf16.msra.mxu0 0
        %6998 = vmatprep.subr.bf16.mxu0 0
        %6999 = vmatpush2.bf16.msra.mxu0 0
        %7000 = vmatprep.subr.bf16.mxu0 0
        %7001 = vmatpush2.bf16.msra.mxu0 0
        %7002 = vmatprep.subr.bf16.mxu0 0
        %7003 = vmatpush2.bf16.msra.mxu0 %v6959
        %7004 = vmatprep.mubr.bf16.mxu0 %v6970
        %7005 = vmatmul.mubr.bf16.gmra.mxu0 %v6409
        %v7006 = vpop.f32.mrf.mxu0
        %v7007 = vadd.f32 0.0, %v7006
        %v7008 = vpop.f32.mrf.mxu0
        %v7009 = vpop.f32.mrf.mxu0
        %v7010 = vpop.f32.mrf.mxu0
        %7011 = vdwg.mxu0
        %v7012 = vadd.f32 %v6895, %v7007
        %v7013 = vmax.f32 %v7012, 0.0
        %v7014 = vpack.c.bf16 %v7013, %v7013
        %v7015 = vld [vmem:[%s9] sm:$0xf]
        %v7016 = vld [vmem:[%s9 + $0x4] sm:$0xf]
        %v7017 = vld [vmem:[%s9 + $0x8] sm:$0xf]
        %v7018 = vld [vmem:[%s9 + $0xc] sm:$0xf]
        %v7019 = vld [vmem:[%s9 + $0x10] sm:$0xf]
        %v7020 = vld [vmem:[%s9 + $0x14] sm:$0xf]
        %v7021 = vld [vmem:[%s9 + $0x18] sm:$0xf]
        %v7022 = vld [vmem:[%s9 + $0x1c] sm:$0xf]
        %v7023 = vld [vmem:[%s9 + $0x20] sm:$0xf]
        %v7024 = vld [vmem:[%s9 + $0x24] sm:$0xf]
        %v7025 = vld [vmem:[%s9 + $0x28] sm:$0xf]
        %v7026 = vld [vmem:[%s9 + $0x2c] sm:$0xf]
        %v7027 = vld [vmem:[%s9 + $0x30] sm:$0xf]
        %v7028 = vld [vmem:[%s9 + $0x34] sm:$0xf]
        %v7029 = vld [vmem:[%s9 + $0x38] sm:$0xf]
        %v7030 = vld [vmem:[%s10] sm:$0x1]
        %v7032 = vlaneseq
        %v7033 = vshrl.u32 %v7032, 7
        %v7034 = vsub.s32 0, %v7033
        %v7035 = vrot.slane %v7030, %v7034
        %v7052 = vunpack.c.l.b16 %v7015
        %v7053 = vunpack.c.l.b16 %v7016
        %v7054 = vunpack.c.l.b16 %v7017
        %v7055 = vunpack.c.l.b16 %v7018
        %v7056 = vunpack.c.l.b16 %v7019
        %v7057 = vunpack.c.l.b16 %v7020
        %v7058 = vunpack.c.l.b16 %v7021
        %v7059 = vunpack.c.l.b16 %v7022
        %v7060 = vunpack.c.l.b16 %v7023
        %v7061 = vunpack.c.l.b16 %v7024
        %v7062 = vunpack.c.l.b16 %v7025
        %v7063 = vunpack.c.l.b16 %v7026
        %v7064 = vunpack.c.l.b16 %v7027
        %v7065 = vunpack.c.l.b16 %v7028
        %v7066 = vunpack.c.l.b16 %v7029
        %v7067 = vpack.c.b16 %v7053, %v7052
        %v7068 = vpack.c.b16 %v7055, %v7054
        %v7069 = vpack.c.b16 %v7057, %v7056
        %v7070 = vpack.c.b16 %v7059, %v7058
        %v7071 = vpack.c.b16 %v7061, %v7060
        %v7072 = vpack.c.b16 %v7063, %v7062
        %v7073 = vpack.c.b16 %v7065, %v7064
        %v7074 = vpack.c.b16 %v7066, %v7066
        %vm7082 = vcmask 982016
        %v7084 = vsel %vm7082, %v7014, 0
        %v7087 = vsel %vm2649, %v7074, 0
        %7089 = vmatprep.subr.bf16.mxu0 0
        %7090 = vmatpush1.bf16.msra.mxu0 %v7087
        %7091 = vmatprep.subr.bf16.mxu0 0
        %7092 = vmatpush1.bf16.msra.mxu0 %v7073
        %7093 = vmatprep.subr.bf16.mxu0 0
        %7094 = vmatpush1.bf16.msra.mxu0 %v7072
        %7095 = vmatprep.subr.bf16.mxu0 0
        %7096 = vmatpush1.bf16.msra.mxu0 %v7071
        %7097 = vmatprep.subr.bf16.mxu0 0
        %7098 = vmatpush1.bf16.msra.mxu0 %v7070
        %7099 = vmatprep.subr.bf16.mxu0 0
        %7100 = vmatpush1.bf16.msra.mxu0 %v7069
        %7101 = vmatprep.subr.bf16.mxu0 0
        %7102 = vmatpush1.bf16.msra.mxu0 %v7068
        %7103 = vmatprep.subr.bf16.mxu0 0
        %7104 = vmatpush1.bf16.msra.mxu0 %v7067
        %7105 = vmatprep.subr.bf16.mxu0 0
        %7106 = vmatpush2.bf16.msra.mxu0 0
        %7107 = vmatprep.subr.bf16.mxu0 0
        %7108 = vmatpush2.bf16.msra.mxu0 0
        %7109 = vmatprep.subr.bf16.mxu0 0
        %7110 = vmatpush2.bf16.msra.mxu0 0
        %7111 = vmatprep.subr.bf16.mxu0 0
        %7112 = vmatpush2.bf16.msra.mxu0 0
        %7113 = vmatprep.subr.bf16.mxu0 0
        %7114 = vmatpush2.bf16.msra.mxu0 0
        %7115 = vmatprep.subr.bf16.mxu0 0
        %7116 = vmatpush2.bf16.msra.mxu0 0
        %7117 = vmatprep.subr.bf16.mxu0 0
        %7118 = vmatpush2.bf16.msra.mxu0 0
        %7119 = vmatprep.subr.bf16.mxu0 0
        %7120 = vmatpush2.bf16.msra.mxu0 0
        %7121 = vmatprep.mubr.bf16.mxu0 0
        %7122 = vmatmul.mubr.bf16.gmra.mxu0 %v7084
        %v7123 = vpop.f32.mrf.mxu0
        %v7124 = vadd.f32 %v7035, %v7123
        %v7125 = vpop.f32.mrf.mxu0
        %v7126 = vpop.f32.mrf.mxu0
        %v7127 = vpop.f32.mrf.mxu0
        %7128 = vdwg.mxu0
        %v7129 = vmax.f32 %v7124, 0.0
        %v7130 = vpack.c.bf16 %v7129, %v7129
        %v7131 = vld [vmem:[%s11] sm:$0xf]
        %v7132 = vld [vmem:[%s11 + $0x4] sm:$0xf]
        %v7133 = vld [vmem:[%s11 + $0x8] sm:$0xf]
        %v7134 = vld [vmem:[%s11 + $0xc] sm:$0xf]
        %v7135 = vld [vmem:[%s11 + $0x10] sm:$0xf]
        %v7136 = vld [vmem:[%s11 + $0x14] sm:$0xf]
        %v7137 = vld [vmem:[%s11 + $0x18] sm:$0xf]
        %v7138 = vld [vmem:[%s11 + $0x1c] sm:$0xf]
        %v7139 = vld [vmem:[%s11 + $0x20] sm:$0xf]
        %v7140 = vld [vmem:[%s11 + $0x24] sm:$0xf]
        %v7141 = vld [vmem:[%s11 + $0x28] sm:$0x3]
        %v7142 = vld [vmem:[%s12] sm:$0x1]
        %v7144 = vlaneseq
        %v7145 = vshrl.u32 %v7144, 7
        %v7146 = vsub.s32 0, %v7145
        %v7147 = vrot.slane %v7142, %v7146
        %v7160 = vunpack.c.l.b16 %v7131
        %v7161 = vunpack.c.l.b16 %v7132
        %v7162 = vunpack.c.l.b16 %v7133
        %v7163 = vunpack.c.l.b16 %v7134
        %v7164 = vunpack.c.l.b16 %v7135
        %v7165 = vunpack.c.l.b16 %v7136
        %v7166 = vunpack.c.l.b16 %v7137
        %v7167 = vunpack.c.l.b16 %v7138
        %v7168 = vunpack.c.l.b16 %v7139
        %v7169 = vunpack.c.l.b16 %v7140
        %v7170 = vunpack.c.l.b16 %v7141
        %v7171 = vpack.c.b16 %v7161, %v7160
        %v7172 = vpack.c.b16 %v7163, %v7162
        %v7173 = vpack.c.b16 %v7165, %v7164
        %v7174 = vpack.c.b16 %v7167, %v7166
        %v7175 = vpack.c.b16 %v7169, %v7168
        %v7176 = vpack.c.b16 %v7170, %v7170
        %vm7182 = vcmask 687104
        %v7184 = vsel %vm7182, %v7130, 0
        %vm7186 = vcmask 1041408
        %v7188 = vsel %vm7186, %v7176, 0
        %7190 = vmatprep.subr.bf16.mxu0 0
        %7191 = vmatpush1.bf16.msra.mxu0 0
        %7192 = vmatprep.subr.bf16.mxu0 0
        %7193 = vmatpush1.bf16.msra.mxu0 0
        %7194 = vmatprep.subr.bf16.mxu0 0
        %7195 = vmatpush1.bf16.msra.mxu0 %v7188
        %7196 = vmatprep.subr.bf16.mxu0 0
        %7197 = vmatpush1.bf16.msra.mxu0 %v7175
        %7198 = vmatprep.subr.bf16.mxu0 0
        %7199 = vmatpush1.bf16.msra.mxu0 %v7174
        %7200 = vmatprep.subr.bf16.mxu0 0
        %7201 = vmatpush1.bf16.msra.mxu0 %v7173
        %7202 = vmatprep.subr.bf16.mxu0 0
        %7203 = vmatpush1.bf16.msra.mxu0 %v7172
        %7204 = vmatprep.subr.bf16.mxu0 0
        %7205 = vmatpush1.bf16.msra.mxu0 %v7171
        %7206 = vmatprep.subr.bf16.mxu0 0
        %7207 = vmatpush2.bf16.msra.mxu0 0
        %7208 = vmatprep.subr.bf16.mxu0 0
        %7209 = vmatpush2.bf16.msra.mxu0 0
        %7210 = vmatprep.subr.bf16.mxu0 0
        %7211 = vmatpush2.bf16.msra.mxu0 0
        %7212 = vmatprep.subr.bf16.mxu0 0
        %7213 = vmatpush2.bf16.msra.mxu0 0
        %7214 = vmatprep.subr.bf16.mxu0 0
        %7215 = vmatpush2.bf16.msra.mxu0 0
        %7216 = vmatprep.subr.bf16.mxu0 0
        %7217 = vmatpush2.bf16.msra.mxu0 0
        %7218 = vmatprep.subr.bf16.mxu0 0
        %7219 = vmatpush2.bf16.msra.mxu0 0
        %7220 = vmatprep.subr.bf16.mxu0 0
        %7221 = vmatpush2.bf16.msra.mxu0 0
        %7222 = vmatprep.mubr.bf16.mxu0 0
        %7223 = vmatmul.mubr.bf16.gmra.mxu0 %v7184
        %v7224 = vpop.f32.mrf.mxu0
        %v7225 = vadd.f32 %v7147, %v7224
        %v7226 = vpop.f32.mrf.mxu0
        %v7227 = vpop.f32.mrf.mxu0
        %v7228 = vpop.f32.mrf.mxu0
        %7229 = vdwg.mxu0
        %7230 = vmax.xlane.f32.xlu0 %v7225
        %v7231 = vpop.xlane.xlu0 %7230
        %v7232 = vsub.f32 %v7225, %v7231
        %v7233 = vmul.f32 %v7232, 1.442695
        %v7234 = vpow.pop %v7233
        %7235 = vadd.xlane.f32.xlu0 %v7234
        %v7236 = vpop.xlane.xlu0 %7235
        %v7237 = vrcp.pop %v7236
        %v7238 = vmul.f32 %v7234, %v7237
        %7239 = vst [vmem:[%s434] sm:$0xff] %v7238
        %s7240 = sand.u32 %s313, 1
        %s7241 = scalar_lea.sflag [#allocation3], %s7240
        %s7242 = sand.u32 %s313, 1
        %s7243 = smul.addr %s7242, 8
        %s7244 = scalar_lea.vmem [#allocation2], %s7243
        // Predicated region
        $region73: #{lenet_forward.1} parent=71 // pred_check
          %p7245 = pneg %p323
        $region74: #{lenet_forward.1} parent=71 // pred_check_branch
          %7247 = sbr.rel (%p7245) target = $region76
        $region75: #{lenet_forward.1} parent=71 // pred_region
          %s7249 = ssub.s32 128, 128
          %7250 = vsyncadd %s7241, %s7249
          %s7251 = smul.addr %s27, 128
          %s7252 = scalar_lea.hbm %s13, %s7251
          %s7254 = sshll.u32 %s7244, 4
          %s7255 = int_to_ptr.vmem [resolvable:$true] %s7254
          %7257 = dma.vmem_to_hbm [thread:$0]  %s7255, 128, %s7252, %s7241
        $region76: #{lenet_forward.1} parent=71 // pred_fallthru
          _
      $region72: #{lenet_forward.1} parent=5 // pred_fallthru
        _
      %p7258 = scmp.le.s32.totalorder 2, %s22
      // Predicated region
      $region77: #{lenet_forward.1} parent=5 // pred_check
        %p7259 = pneg %p7258
      $region78: #{lenet_forward.1} parent=5 // pred_check_branch
        %7261 = sbr.rel (%p7259) target = $region80
      $region79: #{lenet_forward.1} parent=5 // pred_region
        %s7262 = ssub.s32 %s22, 2
        // Predicated region
        $region81: #{lenet_forward.1} parent=79 // pred_check
          %p7263 = pneg %p329
        $region82: #{lenet_forward.1} parent=79 // pred_check_branch
          %7265 = sbr.rel (%p7263) target = $region84
        $region83: #{lenet_forward.1} parent=79 // pred_region
          %s7266 = sand.u32 %s314, 1
          %s7267 = scalar_lea.sflag [#allocation3], %s7266
          %s7268 = sand.u32 %s314, 1
          %s7269 = smul.addr %s7268, 8
          %s7270 = scalar_lea.vmem [#allocation2], %s7269
          %7271 = dma.done %s7267, 128
        $region84: #{lenet_forward.1} parent=79 // pred_fallthru
          _
      $region80: #{lenet_forward.1} parent=5 // pred_fallthru
        _
    $region6: #{lenet_forward.1} parent=1 // loop_footer
      %s26 = sadd.s32 1, %s22
    $region7: #{lenet_forward.1} parent=1 // loop_footer_branch
      %21 = sbr.rel target = $region3
    $region8: #{lenet_forward.1} parent=1 // loop_exit
      _
    %7272 = vsyncpa [#allocation3], 1
    %s7273 = scalar_lea.sflag [#allocation3], 1
    %7274 = vsyncpa %s7273, 1

</llo_original>
